<compile_context>
chip_gen: v7x
topology: tpu7x:2x2x1
jax: 0.10.0
libtpu: 0.0.40
codegen_flags: <defaults>
</compile_context>

<pallas_src>
import functools

import jax
import jax.numpy as jnp
from jax import lax
from jax.experimental import pallas as pl
from jax.experimental.pallas import tpu as pltpu

LANE = 128          # each gate (r, z, n) starts at a 128-lane boundary
BATCH_BLOCK = 8     # f32 sublane tile; rows of the batch handled per grid step


def _round_up(x, m):
    return (x + m - 1) // m * m


def _pack_gate_cols(w, H, Hp):
    """(rows, 3H) -> (rows, 3*Hp): gate g's H columns placed at offset g*Hp, rest zero."""
    rows = w.shape[0]
    out = jnp.zeros((rows, 3 * Hp), w.dtype)
    for g in range(3):
        out = out.at[:, g * Hp:g * Hp + H].set(w[:, g * H:(g + 1) * H])
    return out


def _pad_rows(w, rows_p):
    r = w.shape[0]
    if r == rows_p:
        return w
    return jnp.concatenate([w, jnp.zeros((rows_p - r,) + w.shape[1:], w.dtype)], axis=0)


def make_gru_kernel(num_layers: int, T: int, Bblk: int, Hp: int, matmul_dtype):
    """Pallas kernel: `num_layers` GRU layers + Linear head for one batch block."""

    def kernel(*refs):
        # refs = [x_ref,
        #         (w_ih, w_hh, b_ih_comb, b_hh_n) * num_layers,
        #         w_lin, b_lin,
        #         out_ref,
        #         gi_scratch, seq_scratch]
        x_ref = refs[0]
        layers = [refs[1 + 4 * l: 1 + 4 * (l + 1)] for l in range(num_layers)]
        wlin_ref, blin_ref, out_ref, gi_ref, seq_ref = refs[1 + 4 * num_layers:]

        h = None
        for li, (wih_ref, whh_ref, bihc_ref, bhhn_ref) in enumerate(layers):
            x_in = x_ref[0] if li == 0 else seq_ref[...]          # (T*Bblk, Din)

            # Hoisted input projection over ALL time steps: one big MXU matmul per layer.
            gi_ref[...] = (
                jnp.dot(x_in.astype(matmul_dtype), wih_ref[...],
                        preferred_element_type=jnp.float32)
                + bihc_ref[...]
            )

            # b_hh for the n gate can't be folded into gi (it sits inside r * (...)),
            # so pre-broadcast it once per layer, outside the time loop.
            bhhn = jnp.broadcast_to(bhhn_ref[...], (Bblk, Hp))

            def step(t, h, whh_ref=whh_ref, bhhn=bhhn):
                row = pl.multiple_of(t * Bblk, Bblk)
                gi = gi_ref[pl.ds(row, Bblk), :]                  # (Bblk, 3Hp)
                gh = jnp.dot(h.astype(matmul_dtype), whh_ref[...],
                             preferred_element_type=jnp.float32)  # (Bblk, 3Hp)
                # 128-aligned per-gate slices — whole-vreg, no lane extraction.
                r = jax.nn.sigmoid(gi[:, 0:Hp] + gh[:, 0:Hp])
                z = jax.nn.sigmoid(gi[:, Hp:2 * Hp] + gh[:, Hp:2 * Hp])
                n = jnp.tanh(gi[:, 2 * Hp:] + r * (gh[:, 2 * Hp:] + bhhn))
                h_new = n + z * (h - n)
                seq_ref[pl.ds(row, Bblk), :] = h_new              # layer output sequence
                return h_new

            h = lax.fori_loop(0, T, step, jnp.zeros((Bblk, Hp), jnp.float32),
                              unroll=True)

        # Linear head on the last time step of the top layer.
        # TODO(synk): output_size=4 -> masked 4-lane store; pad O to 128 if it ever grows.
        out_ref[0] = (
            jnp.dot(h.astype(matmul_dtype), wlin_ref[...],
                    preferred_element_type=jnp.float32)
            + blin_ref[...]
        )

    return kernel


def gru_model_forward(x, params, *, hidden_size, num_layers, matmul_dtype=jnp.float32):
    """x: (B, T, D) float32, batch_first like the PyTorch module. Returns (B, output_size)."""
    B, T, D = x.shape
    H = hidden_size
    O = params["w_lin"].shape[0]
    Hp = _round_up(H, LANE)                 # per-gate lane stride (gate g at offset g*Hp)
    Bblk = BATCH_BLOCK
    Bp = _round_up(B, Bblk)
    nb = Bp // Bblk

    # Pad batch to the sublane tile and lay out each batch block time-major:
    # (B,T,D) -> (nb, T*Bblk, D); row index within a block is t*Bblk + b.
    x_p = jnp.zeros((Bp, T, D), jnp.float32).at[:B].set(x.astype(jnp.float32))
    x_blk = (x_p.reshape(nb, Bblk, T, D)
                .transpose(0, 2, 1, 3)
                .reshape(nb, T * Bblk, D))

    args = [x_blk]
    for l in range(num_layers):
        wih = params[f"w_ih_{l}"].T.astype(jnp.float32)       # (Din, 3H)
        whh = params[f"w_hh_{l}"].T.astype(jnp.float32)       # (H,   3H)
        bih = params[f"b_ih_{l}"].astype(jnp.float32)         # (3H,)
        bhh = params[f"b_hh_{l}"].astype(jnp.float32)         # (3H,)

        wih_p = _pack_gate_cols(wih, H, Hp)                   # (Din, 3Hp)
        if l > 0:
            wih_p = _pad_rows(wih_p, Hp)                      # layer>0 input has Hp lanes
        whh_p = _pad_rows(_pack_gate_cols(whh, H, Hp), Hp)    # (Hp, 3Hp)

        # Fold b_hh into the hoisted input projection for the r and z gates.
        bihc = jnp.concatenate(
            [bih[:H] + bhh[:H], bih[H:2 * H] + bhh[H:2 * H], bih[2 * H:]])
        bihc_p = _pack_gate_cols(bihc[None, :], H, Hp)        # (1, 3Hp)
        bhhn_p = jnp.zeros((1, Hp), jnp.float32).at[0, :H].set(bhh[2 * H:])  # (1, Hp)

        args += [wih_p.astype(matmul_dtype), whh_p.astype(matmul_dtype), bihc_p, bhhn_p]

    wlin_p = _pad_rows(params["w_lin"].T.astype(jnp.float32), Hp)    # (Hp, O)
    blin_p = params["b_lin"].astype(jnp.float32)[None, :]            # (1, O)
    args += [wlin_p.astype(matmul_dtype), blin_p]

    kernel = make_gru_kernel(num_layers, T, Bblk, Hp, matmul_dtype)

    # Explicit full-array blocks (constant index maps) for weights/biases.
    weight_specs = [
        pl.BlockSpec(a.shape, lambda i, n=a.ndim: (0,) * n) for a in args[1:]
    ]
    grid_spec = pltpu.PrefetchScalarGridSpec(
        num_scalar_prefetch=0,
        grid=(nb,),
        in_specs=[pl.BlockSpec((1, T * Bblk, D), lambda i: (i, 0, 0))] + weight_specs,
        out_specs=pl.BlockSpec((1, Bblk, O), lambda i: (i, 0, 0)),
        scratch_shapes=[
            pltpu.VMEM((T * Bblk, 3 * Hp), jnp.float32),   # hoisted gi for all time steps
            pltpu.VMEM((T * Bblk, Hp), jnp.float32),       # layer output sequence
        ],
    )

    out = pl.pallas_call(
        kernel,
        out_shape=jax.ShapeDtypeStruct((nb, Bblk, O), jnp.float32),
        grid_spec=grid_spec,
        compiler_params=pltpu.CompilerParams(
            dimension_semantics=("parallel",)),   # batch blocks split across TCs on v7x
    )(*args)

    return out.reshape(nb * Bblk, O)[:B]


def ref_forward(x, params, *, hidden_size, num_layers):
    """Pure-JAX reference matching torch.nn.GRU (batch_first) + Linear on last step."""
    B, T, D = x.shape
    H = hidden_size
    h_seq = x
    for l in range(num_layers):
        wih = params[f"w_ih_{l}"]
        whh = params[f"w_hh_{l}"]
        bih = params[f"b_ih_{l}"]
        bhh = params[f"b_hh_{l}"]

        def step(h, x_t, wih=wih, whh=whh, bih=bih, bhh=bhh):
            gi = x_t @ wih.T + bih
            gh = h @ whh.T + bhh
            r = jax.nn.sigmoid(gi[:, :H] + gh[:, :H])
            z = jax.nn.sigmoid(gi[:, H:2 * H] + gh[:, H:2 * H])
            n = jnp.tanh(gi[:, 2 * H:] + r * gh[:, 2 * H:])
            h_new = (1.0 - z) * n + z * h
            return h_new, h_new

        h0 = jnp.zeros((B, H), jnp.float32)
        _, ys = lax.scan(step, h0, jnp.transpose(h_seq, (1, 0, 2)))
        h_seq = jnp.transpose(ys, (1, 0, 2))
    last = h_seq[:, -1, :]
    return last @ params["w_lin"].T + params["b_lin"]


def init_params(key, *, input_size, hidden_size, num_layers, output_size):
    """Deterministic init mimicking PyTorch's U(-1/sqrt(H), 1/sqrt(H))."""
    H = hidden_size
    k = 1.0 / jnp.sqrt(jnp.float32(H))
    params = {}
    for l in range(num_layers):
        d_in = input_size if l == 0 else hidden_size
        key, k1, k2, k3, k4 = jax.random.split(key, 5)
        params[f"w_ih_{l}"] = jax.random.uniform(k1, (3 * H, d_in), jnp.float32, -k, k)
        params[f"w_hh_{l}"] = jax.random.uniform(k2, (3 * H, H), jnp.float32, -k, k)
        params[f"b_ih_{l}"] = jax.random.uniform(k3, (3 * H,), jnp.float32, -k, k)
        params[f"b_hh_{l}"] = jax.random.uniform(k4, (3 * H,), jnp.float32, -k, k)
    key, k5, k6 = jax.random.split(key, 3)
    params["w_lin"] = jax.random.uniform(k5, (output_size, H), jnp.float32, -k, k)
    params["b_lin"] = jax.random.uniform(k6, (output_size,), jnp.float32, -k, k)
    return params


if __name__ == "__main__":
    config = dict(input_size=16, hidden_size=32, num_layers=2, dropout=0.0, output_size=4)
    B, T = 2, 8

    key = jax.random.PRNGKey(0)
    key, pkey, xkey = jax.random.split(key, 3)
    params = init_params(
        pkey,
        input_size=config["input_size"],
        hidden_size=config["hidden_size"],
        num_layers=config["num_layers"],
        output_size=config["output_size"],
    )
    x = jax.random.normal(xkey, (B, T, config["input_size"]), jnp.float32)

    run = jax.jit(
        functools.partial(
            gru_model_forward,
            hidden_size=config["hidden_size"],
            num_layers=config["num_layers"],
            matmul_dtype=jnp.float32,   # set to jnp.bfloat16 on v5e/v6e for 2x MXU throughput
        )
    )
    y = run(x, params)
    y = jax.block_until_ready(y)

    y_ref = ref_forward(
        x, params, hidden_size=config["hidden_size"], num_layers=config["num_layers"]
    )
    assert y.shape == (B, config["output_size"])
    assert jnp.allclose(y, y_ref, atol=1e-4, rtol=1e-4), (y, y_ref)

    print("KERNEL_OK")
</pallas_src>

<mosaic_0001>
module attributes {stable_mosaic.version = 11 : i64} {
  func.func @kernel(%arg0: i32, %arg1: memref<1x64x16xf32, #tpu.memory_space<vmem>>, %arg2: memref<16x384xf32, #tpu.memory_space<vmem>>, %arg3: memref<128x384xf32, #tpu.memory_space<vmem>>, %arg4: memref<1x384xf32, #tpu.memory_space<vmem>>, %arg5: memref<1x128xf32, #tpu.memory_space<vmem>>, %arg6: memref<128x384xf32, #tpu.memory_space<vmem>>, %arg7: memref<128x384xf32, #tpu.memory_space<vmem>>, %arg8: memref<1x384xf32, #tpu.memory_space<vmem>>, %arg9: memref<1x128xf32, #tpu.memory_space<vmem>>, %arg10: memref<128x4xf32, #tpu.memory_space<vmem>>, %arg11: memref<1x4xf32, #tpu.memory_space<vmem>>, %arg12: memref<1x8x4xf32, #tpu.memory_space<vmem>>, %arg13: memref<64x384xf32, #tpu.memory_space<vmem>>, %arg14: memref<64x128xf32, #tpu.memory_space<vmem>>) attributes {dimension_semantics = [#tpu.dimension_semantics<parallel>], iteration_bounds = array<i64: 1>, scalar_prefetch = 0 : i64, scratch_operands = 2 : i64, tpu.core_type = #tpu.core_type<tc>, window_params = [{transform_indices = @transform_0, window_bounds = array<i64: 1, 64, 16>}, {pipeline_mode = #tpu.pipeline_mode<synchronous>, transform_indices = @transform_1, window_bounds = array<i64: 16, 384>}, {pipeline_mode = #tpu.pipeline_mode<synchronous>, transform_indices = @transform_2, window_bounds = array<i64: 128, 384>}, {pipeline_mode = #tpu.pipeline_mode<synchronous>, transform_indices = @transform_3, window_bounds = array<i64: 1, 384>}, {pipeline_mode = #tpu.pipeline_mode<synchronous>, transform_indices = @transform_4, window_bounds = array<i64: 1, 128>}, {pipeline_mode = #tpu.pipeline_mode<synchronous>, transform_indices = @transform_5, window_bounds = array<i64: 128, 384>}, {pipeline_mode = #tpu.pipeline_mode<synchronous>, transform_indices = @transform_6, window_bounds = array<i64: 128, 384>}, {pipeline_mode = #tpu.pipeline_mode<synchronous>, transform_indices = @transform_7, window_bounds = array<i64: 1, 384>}, {pipeline_mode = #tpu.pipeline_mode<synchronous>, transform_indices = @transform_8, window_bounds = array<i64: 1, 128>}, {pipeline_mode = #tpu.pipeline_mode<synchronous>, transform_indices = @transform_9, window_bounds = array<i64: 128, 4>}, {pipeline_mode = #tpu.pipeline_mode<synchronous>, transform_indices = @transform_10, window_bounds = array<i64: 1, 4>}, {transform_indices = @transform_11, window_bounds = array<i64: 1, 8, 4>}]} {
    %c0 = arith.constant 0 : index
    %c0_0 = arith.constant 0 : index
    %c0_1 = arith.constant 0 : index
    %0 = vector.load %arg1[%c0, %c0_0, %c0_1] : memref<1x64x16xf32, #tpu.memory_space<vmem>>, vector<1x64x16xf32>
    %1 = vector.shape_cast %0 : vector<1x64x16xf32> to vector<64x16xf32>
    %c0_2 = arith.constant 0 : index
    %c0_3 = arith.constant 0 : index
    %2 = vector.load %arg2[%c0_2, %c0_3] : memref<16x384xf32, #tpu.memory_space<vmem>>, vector<16x384xf32>
    %cst = arith.constant dense<0.000000e+00> : vector<64x384xf32>
    %3 = tpu.matmul %1, %2, %cst {dimension_numbers = #tpu.dot_dimension_numbers<[1], [0], [0], [1], [0, 0, 1, 1], [], []>} : vector<64x16xf32>, vector<16x384xf32>, vector<64x384xf32> -> vector<64x384xf32>
    %c0_4 = arith.constant 0 : index
    %c0_5 = arith.constant 0 : index
    %4 = vector.load %arg4[%c0_4, %c0_5] : memref<1x384xf32, #tpu.memory_space<vmem>>, vector<1x384xf32>
    %5 = vector.broadcast %4 : vector<1x384xf32> to vector<64x384xf32>
    %6 = arith.addf %3, %5 : vector<64x384xf32>
    %c0_6 = arith.constant 0 : index
    %c0_7 = arith.constant 0 : index
    %7 = vector.load %arg13[%c0_6, %c0_7] : memref<64x384xf32, #tpu.memory_space<vmem>>, vector<64x384xf32>
    tpu.vector_store %arg13[%c0_6, %c0_7], %6 {strides = array<i32>} : memref<64x384xf32, #tpu.memory_space<vmem>>, vector<64x384xf32>,
    %c0_8 = arith.constant 0 : index
    %c0_9 = arith.constant 0 : index
    %8 = vector.load %arg5[%c0_8, %c0_9] : memref<1x128xf32, #tpu.memory_space<vmem>>, vector<1x128xf32>
    %9 = vector.shape_cast %8 : vector<1x128xf32> to vector<1x128xf32>
    %10 = vector.broadcast %9 : vector<1x128xf32> to vector<8x128xf32>
    %cst_10 = arith.constant 0.000000e+00 : f32
    %11 = vector.broadcast %cst_10 : f32 to vector<8x128xf32>
    %c0_i32 = arith.constant 0 : i32
    %c8_i32 = arith.constant 8 : i32
    %12 = arith.muli %c0_i32, %c8_i32 : i32
    %13 = tpu.assume_multiple %12, 8 : i32
    %14 = arith.index_cast %13 : i32 to index
    %c0_11 = arith.constant 0 : index
    %15 = vector.load %arg13[%14, %c0_11] : memref<64x384xf32, #tpu.memory_space<vmem>>, vector<8x384xf32>
    %c0_12 = arith.constant 0 : index
    %c0_13 = arith.constant 0 : index
    %16 = vector.load %arg3[%c0_12, %c0_13] : memref<128x384xf32, #tpu.memory_space<vmem>>, vector<128x384xf32>
    %cst_14 = arith.constant dense<0.000000e+00> : vector<8x384xf32>
    %17 = tpu.matmul %11, %16, %cst_14 {dimension_numbers = #tpu.dot_dimension_numbers<[1], [0], [0], [1], [0, 0, 1, 1], [], []>} : vector<8x128xf32>, vector<128x384xf32>, vector<8x384xf32> -> vector<8x384xf32>
    %18 = vector.extract_strided_slice %15 {offsets = [0, 0], sizes = [8, 128], strides = [1, 1]} : vector<8x384xf32> to vector<8x128xf32>
    %19 = vector.extract_strided_slice %17 {offsets = [0, 0], sizes = [8, 128], strides = [1, 1]} : vector<8x384xf32> to vector<8x128xf32>
    %20 = arith.addf %18, %19 : vector<8x128xf32>
    %21 = arith.negf %20 : vector<8x128xf32>
    %22 = math.exp %21 : vector<8x128xf32>
    %cst_15 = arith.constant 1.000000e+00 : f32
    %23 = vector.broadcast %cst_15 : f32 to vector<8x128xf32>
    %24 = arith.addf %23, %22 : vector<8x128xf32>
    %25 = arith.divf %23, %24 : vector<8x128xf32>
    %26 = vector.extract_strided_slice %15 {offsets = [0, 128], sizes = [8, 128], strides = [1, 1]} : vector<8x384xf32> to vector<8x128xf32>
    %27 = vector.extract_strided_slice %17 {offsets = [0, 128], sizes = [8, 128], strides = [1, 1]} : vector<8x384xf32> to vector<8x128xf32>
    %28 = arith.addf %26, %27 : vector<8x128xf32>
    %29 = arith.negf %28 : vector<8x128xf32>
    %30 = math.exp %29 : vector<8x128xf32>
    %cst_16 = arith.constant 1.000000e+00 : f32
    %31 = vector.broadcast %cst_16 : f32 to vector<8x128xf32>
    %32 = arith.addf %31, %30 : vector<8x128xf32>
    %33 = arith.divf %31, %32 : vector<8x128xf32>
    %34 = vector.extract_strided_slice %15 {offsets = [0, 256], sizes = [8, 128], strides = [1, 1]} : vector<8x384xf32> to vector<8x128xf32>
    %35 = vector.extract_strided_slice %17 {offsets = [0, 256], sizes = [8, 128], strides = [1, 1]} : vector<8x384xf32> to vector<8x128xf32>
    %36 = arith.addf %35, %10 : vector<8x128xf32>
    %37 = arith.mulf %25, %36 : vector<8x128xf32>
    %38 = arith.addf %34, %37 : vector<8x128xf32>
    %39 = math.tanh %38 : vector<8x128xf32>
    %40 = arith.subf %11, %39 : vector<8x128xf32>
    %41 = arith.mulf %33, %40 : vector<8x128xf32>
    %42 = arith.addf %39, %41 : vector<8x128xf32>
    %43 = arith.index_cast %13 : i32 to index
    %c0_17 = arith.constant 0 : index
    %44 = vector.load %arg14[%43, %c0_17] : memref<64x128xf32, #tpu.memory_space<vmem>>, vector<8x128xf32>
    tpu.vector_store %arg14[%43, %c0_17], %42 {strides = array<i32>} : memref<64x128xf32, #tpu.memory_space<vmem>>, vector<8x128xf32>,
    %c1_i32 = arith.constant 1 : i32
    %c8_i32_18 = arith.constant 8 : i32
    %45 = arith.muli %c1_i32, %c8_i32_18 : i32
    %46 = tpu.assume_multiple %45, 8 : i32
    %47 = arith.index_cast %46 : i32 to index
    %c0_19 = arith.constant 0 : index
    %48 = vector.load %arg13[%47, %c0_19] : memref<64x384xf32, #tpu.memory_space<vmem>>, vector<8x384xf32>
    %c0_20 = arith.constant 0 : index
    %c0_21 = arith.constant 0 : index
    %49 = vector.load %arg3[%c0_20, %c0_21] : memref<128x384xf32, #tpu.memory_space<vmem>>, vector<128x384xf32>
    %cst_22 = arith.constant dense<0.000000e+00> : vector<8x384xf32>
    %50 = tpu.matmul %42, %49, %cst_22 {dimension_numbers = #tpu.dot_dimension_numbers<[1], [0], [0], [1], [0, 0, 1, 1], [], []>} : vector<8x128xf32>, vector<128x384xf32>, vector<8x384xf32> -> vector<8x384xf32>
    %51 = vector.extract_strided_slice %48 {offsets = [0, 0], sizes = [8, 128], strides = [1, 1]} : vector<8x384xf32> to vector<8x128xf32>
    %52 = vector.extract_strided_slice %50 {offsets = [0, 0], sizes = [8, 128], strides = [1, 1]} : vector<8x384xf32> to vector<8x128xf32>
    %53 = arith.addf %51, %52 : vector<8x128xf32>
    %54 = arith.negf %53 : vector<8x128xf32>
    %55 = math.exp %54 : vector<8x128xf32>
    %cst_23 = arith.constant 1.000000e+00 : f32
    %56 = vector.broadcast %cst_23 : f32 to vector<8x128xf32>
    %57 = arith.addf %56, %55 : vector<8x128xf32>
    %58 = arith.divf %56, %57 : vector<8x128xf32>
    %59 = vector.extract_strided_slice %48 {offsets = [0, 128], sizes = [8, 128], strides = [1, 1]} : vector<8x384xf32> to vector<8x128xf32>
    %60 = vector.extract_strided_slice %50 {offsets = [0, 128], sizes = [8, 128], strides = [1, 1]} : vector<8x384xf32> to vector<8x128xf32>
    %61 = arith.addf %59, %60 : vector<8x128xf32>
    %62 = arith.negf %61 : vector<8x128xf32>
    %63 = math.exp %62 : vector<8x128xf32>
    %cst_24 = arith.constant 1.000000e+00 : f32
    %64 = vector.broadcast %cst_24 : f32 to vector<8x128xf32>
    %65 = arith.addf %64, %63 : vector<8x128xf32>
    %66 = arith.divf %64, %65 : vector<8x128xf32>
    %67 = vector.extract_strided_slice %48 {offsets = [0, 256], sizes = [8, 128], strides = [1, 1]} : vector<8x384xf32> to vector<8x128xf32>
    %68 = vector.extract_strided_slice %50 {offsets = [0, 256], sizes = [8, 128], strides = [1, 1]} : vector<8x384xf32> to vector<8x128xf32>
    %69 = arith.addf %68, %10 : vector<8x128xf32>
    %70 = arith.mulf %58, %69 : vector<8x128xf32>
    %71 = arith.addf %67, %70 : vector<8x128xf32>
    %72 = math.tanh %71 : vector<8x128xf32>
    %73 = arith.subf %42, %72 : vector<8x128xf32>
    %74 = arith.mulf %66, %73 : vector<8x128xf32>
    %75 = arith.addf %72, %74 : vector<8x128xf32>
    %76 = arith.index_cast %46 : i32 to index
    %c0_25 = arith.constant 0 : index
    %77 = vector.load %arg14[%76, %c0_25] : memref<64x128xf32, #tpu.memory_space<vmem>>, vector<8x128xf32>
    tpu.vector_store %arg14[%76, %c0_25], %75 {strides = array<i32>} : memref<64x128xf32, #tpu.memory_space<vmem>>, vector<8x128xf32>,
    %c2_i32 = arith.constant 2 : i32
    %c8_i32_26 = arith.constant 8 : i32
    %78 = arith.muli %c2_i32, %c8_i32_26 : i32
    %79 = tpu.assume_multiple %78, 8 : i32
    %80 = arith.index_cast %79 : i32 to index
    %c0_27 = arith.constant 0 : index
    %81 = vector.load %arg13[%80, %c0_27] : memref<64x384xf32, #tpu.memory_space<vmem>>, vector<8x384xf32>
    %c0_28 = arith.constant 0 : index
    %c0_29 = arith.constant 0 : index
    %82 = vector.load %arg3[%c0_28, %c0_29] : memref<128x384xf32, #tpu.memory_space<vmem>>, vector<128x384xf32>
    %cst_30 = arith.constant dense<0.000000e+00> : vector<8x384xf32>
    %83 = tpu.matmul %75, %82, %cst_30 {dimension_numbers = #tpu.dot_dimension_numbers<[1], [0], [0], [1], [0, 0, 1, 1], [], []>} : vector<8x128xf32>, vector<128x384xf32>, vector<8x384xf32> -> vector<8x384xf32>
    %84 = vector.extract_strided_slice %81 {offsets = [0, 0], sizes = [8, 128], strides = [1, 1]} : vector<8x384xf32> to vector<8x128xf32>
    %85 = vector.extract_strided_slice %83 {offsets = [0, 0], sizes = [8, 128], strides = [1, 1]} : vector<8x384xf32> to vector<8x128xf32>
    %86 = arith.addf %84, %85 : vector<8x128xf32>
    %87 = arith.negf %86 : vector<8x128xf32>
    %88 = math.exp %87 : vector<8x128xf32>
    %cst_31 = arith.constant 1.000000e+00 : f32
    %89 = vector.broadcast %cst_31 : f32 to vector<8x128xf32>
    %90 = arith.addf %89, %88 : vector<8x128xf32>
    %91 = arith.divf %89, %90 : vector<8x128xf32>
    %92 = vector.extract_strided_slice %81 {offsets = [0, 128], sizes = [8, 128], strides = [1, 1]} : vector<8x384xf32> to vector<8x128xf32>
    %93 = vector.extract_strided_slice %83 {offsets = [0, 128], sizes = [8, 128], strides = [1, 1]} : vector<8x384xf32> to vector<8x128xf32>
    %94 = arith.addf %92, %93 : vector<8x128xf32>
    %95 = arith.negf %94 : vector<8x128xf32>
    %96 = math.exp %95 : vector<8x128xf32>
    %cst_32 = arith.constant 1.000000e+00 : f32
    %97 = vector.broadcast %cst_32 : f32 to vector<8x128xf32>
    %98 = arith.addf %97, %96 : vector<8x128xf32>
    %99 = arith.divf %97, %98 : vector<8x128xf32>
    %100 = vector.extract_strided_slice %81 {offsets = [0, 256], sizes = [8, 128], strides = [1, 1]} : vector<8x384xf32> to vector<8x128xf32>
    %101 = vector.extract_strided_slice %83 {offsets = [0, 256], sizes = [8, 128], strides = [1, 1]} : vector<8x384xf32> to vector<8x128xf32>
    %102 = arith.addf %101, %10 : vector<8x128xf32>
    %103 = arith.mulf %91, %102 : vector<8x128xf32>
    %104 = arith.addf %100, %103 : vector<8x128xf32>
    %105 = math.tanh %104 : vector<8x128xf32>
    %106 = arith.subf %75, %105 : vector<8x128xf32>
    %107 = arith.mulf %99, %106 : vector<8x128xf32>
    %108 = arith.addf %105, %107 : vector<8x128xf32>
    %109 = arith.index_cast %79 : i32 to index
    %c0_33 = arith.constant 0 : index
    %110 = vector.load %arg14[%109, %c0_33] : memref<64x128xf32, #tpu.memory_space<vmem>>, vector<8x128xf32>
    tpu.vector_store %arg14[%109, %c0_33], %108 {strides = array<i32>} : memref<64x128xf32, #tpu.memory_space<vmem>>, vector<8x128xf32>,
    %c3_i32 = arith.constant 3 : i32
    %c8_i32_34 = arith.constant 8 : i32
    %111 = arith.muli %c3_i32, %c8_i32_34 : i32
    %112 = tpu.assume_multiple %111, 8 : i32
    %113 = arith.index_cast %112 : i32 to index
    %c0_35 = arith.constant 0 : index
    %114 = vector.load %arg13[%113, %c0_35] : memref<64x384xf32, #tpu.memory_space<vmem>>, vector<8x384xf32>
    %c0_36 = arith.constant 0 : index
    %c0_37 = arith.constant 0 : index
    %115 = vector.load %arg3[%c0_36, %c0_37] : memref<128x384xf32, #tpu.memory_space<vmem>>, vector<128x384xf32>
    %cst_38 = arith.constant dense<0.000000e+00> : vector<8x384xf32>
    %116 = tpu.matmul %108, %115, %cst_38 {dimension_numbers = #tpu.dot_dimension_numbers<[1], [0], [0], [1], [0, 0, 1, 1], [], []>} : vector<8x128xf32>, vector<128x384xf32>, vector<8x384xf32> -> vector<8x384xf32>
    %117 = vector.extract_strided_slice %114 {offsets = [0, 0], sizes = [8, 128], strides = [1, 1]} : vector<8x384xf32> to vector<8x128xf32>
    %118 = vector.extract_strided_slice %116 {offsets = [0, 0], sizes = [8, 128], strides = [1, 1]} : vector<8x384xf32> to vector<8x128xf32>
    %119 = arith.addf %117, %118 : vector<8x128xf32>
    %120 = arith.negf %119 : vector<8x128xf32>
    %121 = math.exp %120 : vector<8x128xf32>
    %cst_39 = arith.constant 1.000000e+00 : f32
    %122 = vector.broadcast %cst_39 : f32 to vector<8x128xf32>
    %123 = arith.addf %122, %121 : vector<8x128xf32>
    %124 = arith.divf %122, %123 : vector<8x128xf32>
    %125 = vector.extract_strided_slice %114 {offsets = [0, 128], sizes = [8, 128], strides = [1, 1]} : vector<8x384xf32> to vector<8x128xf32>
    %126 = vector.extract_strided_slice %116 {offsets = [0, 128], sizes = [8, 128], strides = [1, 1]} : vector<8x384xf32> to vector<8x128xf32>
    %127 = arith.addf %125, %126 : vector<8x128xf32>
    %128 = arith.negf %127 : vector<8x128xf32>
    %129 = math.exp %128 : vector<8x128xf32>
    %cst_40 = arith.constant 1.000000e+00 : f32
    %130 = vector.broadcast %cst_40 : f32 to vector<8x128xf32>
    %131 = arith.addf %130, %129 : vector<8x128xf32>
    %132 = arith.divf %130, %131 : vector<8x128xf32>
    %133 = vector.extract_strided_slice %114 {offsets = [0, 256], sizes = [8, 128], strides = [1, 1]} : vector<8x384xf32> to vector<8x128xf32>
    %134 = vector.extract_strided_slice %116 {offsets = [0, 256], sizes = [8, 128], strides = [1, 1]} : vector<8x384xf32> to vector<8x128xf32>
    %135 = arith.addf %134, %10 : vector<8x128xf32>
    %136 = arith.mulf %124, %135 : vector<8x128xf32>
    %137 = arith.addf %133, %136 : vector<8x128xf32>
    %138 = math.tanh %137 : vector<8x128xf32>
    %139 = arith.subf %108, %138 : vector<8x128xf32>
    %140 = arith.mulf %132, %139 : vector<8x128xf32>
    %141 = arith.addf %138, %140 : vector<8x128xf32>
    %142 = arith.index_cast %112 : i32 to index
    %c0_41 = arith.constant 0 : index
    %143 = vector.load %arg14[%142, %c0_41] : memref<64x128xf32, #tpu.memory_space<vmem>>, vector<8x128xf32>
    tpu.vector_store %arg14[%142, %c0_41], %141 {strides = array<i32>} : memref<64x128xf32, #tpu.memory_space<vmem>>, vector<8x128xf32>,
    %c4_i32 = arith.constant 4 : i32
    %c8_i32_42 = arith.constant 8 : i32
    %144 = arith.muli %c4_i32, %c8_i32_42 : i32
    %145 = tpu.assume_multiple %144, 8 : i32
    %146 = arith.index_cast %145 : i32 to index
    %c0_43 = arith.constant 0 : index
    %147 = vector.load %arg13[%146, %c0_43] : memref<64x384xf32, #tpu.memory_space<vmem>>, vector<8x384xf32>
    %c0_44 = arith.constant 0 : index
    %c0_45 = arith.constant 0 : index
    %148 = vector.load %arg3[%c0_44, %c0_45] : memref<128x384xf32, #tpu.memory_space<vmem>>, vector<128x384xf32>
    %cst_46 = arith.constant dense<0.000000e+00> : vector<8x384xf32>
    %149 = tpu.matmul %141, %148, %cst_46 {dimension_numbers = #tpu.dot_dimension_numbers<[1], [0], [0], [1], [0, 0, 1, 1], [], []>} : vector<8x128xf32>, vector<128x384xf32>, vector<8x384xf32> -> vector<8x384xf32>
    %150 = vector.extract_strided_slice %147 {offsets = [0, 0], sizes = [8, 128], strides = [1, 1]} : vector<8x384xf32> to vector<8x128xf32>
    %151 = vector.extract_strided_slice %149 {offsets = [0, 0], sizes = [8, 128], strides = [1, 1]} : vector<8x384xf32> to vector<8x128xf32>
    %152 = arith.addf %150, %151 : vector<8x128xf32>
    %153 = arith.negf %152 : vector<8x128xf32>
    %154 = math.exp %153 : vector<8x128xf32>
    %cst_47 = arith.constant 1.000000e+00 : f32
    %155 = vector.broadcast %cst_47 : f32 to vector<8x128xf32>
    %156 = arith.addf %155, %154 : vector<8x128xf32>
    %157 = arith.divf %155, %156 : vector<8x128xf32>
    %158 = vector.extract_strided_slice %147 {offsets = [0, 128], sizes = [8, 128], strides = [1, 1]} : vector<8x384xf32> to vector<8x128xf32>
    %159 = vector.extract_strided_slice %149 {offsets = [0, 128], sizes = [8, 128], strides = [1, 1]} : vector<8x384xf32> to vector<8x128xf32>
    %160 = arith.addf %158, %159 : vector<8x128xf32>
    %161 = arith.negf %160 : vector<8x128xf32>
    %162 = math.exp %161 : vector<8x128xf32>
    %cst_48 = arith.constant 1.000000e+00 : f32
    %163 = vector.broadcast %cst_48 : f32 to vector<8x128xf32>
    %164 = arith.addf %163, %162 : vector<8x128xf32>
    %165 = arith.divf %163, %164 : vector<8x128xf32>
    %166 = vector.extract_strided_slice %147 {offsets = [0, 256], sizes = [8, 128], strides = [1, 1]} : vector<8x384xf32> to vector<8x128xf32>
    %167 = vector.extract_strided_slice %149 {offsets = [0, 256], sizes = [8, 128], strides = [1, 1]} : vector<8x384xf32> to vector<8x128xf32>
    %168 = arith.addf %167, %10 : vector<8x128xf32>
    %169 = arith.mulf %157, %168 : vector<8x128xf32>
    %170 = arith.addf %166, %169 : vector<8x128xf32>
    %171 = math.tanh %170 : vector<8x128xf32>
    %172 = arith.subf %141, %171 : vector<8x128xf32>
    %173 = arith.mulf %165, %172 : vector<8x128xf32>
    %174 = arith.addf %171, %173 : vector<8x128xf32>
    %175 = arith.index_cast %145 : i32 to index
    %c0_49 = arith.constant 0 : index
    %176 = vector.load %arg14[%175, %c0_49] : memref<64x128xf32, #tpu.memory_space<vmem>>, vector<8x128xf32>
    tpu.vector_store %arg14[%175, %c0_49], %174 {strides = array<i32>} : memref<64x128xf32, #tpu.memory_space<vmem>>, vector<8x128xf32>,
    %c5_i32 = arith.constant 5 : i32
    %c8_i32_50 = arith.constant 8 : i32
    %177 = arith.muli %c5_i32, %c8_i32_50 : i32
    %178 = tpu.assume_multiple %177, 8 : i32
    %179 = arith.index_cast %178 : i32 to index
    %c0_51 = arith.constant 0 : index
    %180 = vector.load %arg13[%179, %c0_51] : memref<64x384xf32, #tpu.memory_space<vmem>>, vector<8x384xf32>
    %c0_52 = arith.constant 0 : index
    %c0_53 = arith.constant 0 : index
    %181 = vector.load %arg3[%c0_52, %c0_53] : memref<128x384xf32, #tpu.memory_space<vmem>>, vector<128x384xf32>
    %cst_54 = arith.constant dense<0.000000e+00> : vector<8x384xf32>
    %182 = tpu.matmul %174, %181, %cst_54 {dimension_numbers = #tpu.dot_dimension_numbers<[1], [0], [0], [1], [0, 0, 1, 1], [], []>} : vector<8x128xf32>, vector<128x384xf32>, vector<8x384xf32> -> vector<8x384xf32>
    %183 = vector.extract_strided_slice %180 {offsets = [0, 0], sizes = [8, 128], strides = [1, 1]} : vector<8x384xf32> to vector<8x128xf32>
    %184 = vector.extract_strided_slice %182 {offsets = [0, 0], sizes = [8, 128], strides = [1, 1]} : vector<8x384xf32> to vector<8x128xf32>
    %185 = arith.addf %183, %184 : vector<8x128xf32>
    %186 = arith.negf %185 : vector<8x128xf32>
    %187 = math.exp %186 : vector<8x128xf32>
    %cst_55 = arith.constant 1.000000e+00 : f32
    %188 = vector.broadcast %cst_55 : f32 to vector<8x128xf32>
    %189 = arith.addf %188, %187 : vector<8x128xf32>
    %190 = arith.divf %188, %189 : vector<8x128xf32>
    %191 = vector.extract_strided_slice %180 {offsets = [0, 128], sizes = [8, 128], strides = [1, 1]} : vector<8x384xf32> to vector<8x128xf32>
    %192 = vector.extract_strided_slice %182 {offsets = [0, 128], sizes = [8, 128], strides = [1, 1]} : vector<8x384xf32> to vector<8x128xf32>
    %193 = arith.addf %191, %192 : vector<8x128xf32>
    %194 = arith.negf %193 : vector<8x128xf32>
    %195 = math.exp %194 : vector<8x128xf32>
    %cst_56 = arith.constant 1.000000e+00 : f32
    %196 = vector.broadcast %cst_56 : f32 to vector<8x128xf32>
    %197 = arith.addf %196, %195 : vector<8x128xf32>
    %198 = arith.divf %196, %197 : vector<8x128xf32>
    %199 = vector.extract_strided_slice %180 {offsets = [0, 256], sizes = [8, 128], strides = [1, 1]} : vector<8x384xf32> to vector<8x128xf32>
    %200 = vector.extract_strided_slice %182 {offsets = [0, 256], sizes = [8, 128], strides = [1, 1]} : vector<8x384xf32> to vector<8x128xf32>
    %201 = arith.addf %200, %10 : vector<8x128xf32>
    %202 = arith.mulf %190, %201 : vector<8x128xf32>
    %203 = arith.addf %199, %202 : vector<8x128xf32>
    %204 = math.tanh %203 : vector<8x128xf32>
    %205 = arith.subf %174, %204 : vector<8x128xf32>
    %206 = arith.mulf %198, %205 : vector<8x128xf32>
    %207 = arith.addf %204, %206 : vector<8x128xf32>
    %208 = arith.index_cast %178 : i32 to index
    %c0_57 = arith.constant 0 : index
    %209 = vector.load %arg14[%208, %c0_57] : memref<64x128xf32, #tpu.memory_space<vmem>>, vector<8x128xf32>
    tpu.vector_store %arg14[%208, %c0_57], %207 {strides = array<i32>} : memref<64x128xf32, #tpu.memory_space<vmem>>, vector<8x128xf32>,
    %c6_i32 = arith.constant 6 : i32
    %c8_i32_58 = arith.constant 8 : i32
    %210 = arith.muli %c6_i32, %c8_i32_58 : i32
    %211 = tpu.assume_multiple %210, 8 : i32
    %212 = arith.index_cast %211 : i32 to index
    %c0_59 = arith.constant 0 : index
    %213 = vector.load %arg13[%212, %c0_59] : memref<64x384xf32, #tpu.memory_space<vmem>>, vector<8x384xf32>
    %c0_60 = arith.constant 0 : index
    %c0_61 = arith.constant 0 : index
    %214 = vector.load %arg3[%c0_60, %c0_61] : memref<128x384xf32, #tpu.memory_space<vmem>>, vector<128x384xf32>
    %cst_62 = arith.constant dense<0.000000e+00> : vector<8x384xf32>
    %215 = tpu.matmul %207, %214, %cst_62 {dimension_numbers = #tpu.dot_dimension_numbers<[1], [0], [0], [1], [0, 0, 1, 1], [], []>} : vector<8x128xf32>, vector<128x384xf32>, vector<8x384xf32> -> vector<8x384xf32>
    %216 = vector.extract_strided_slice %213 {offsets = [0, 0], sizes = [8, 128], strides = [1, 1]} : vector<8x384xf32> to vector<8x128xf32>
    %217 = vector.extract_strided_slice %215 {offsets = [0, 0], sizes = [8, 128], strides = [1, 1]} : vector<8x384xf32> to vector<8x128xf32>
    %218 = arith.addf %216, %217 : vector<8x128xf32>
    %219 = arith.negf %218 : vector<8x128xf32>
    %220 = math.exp %219 : vector<8x128xf32>
    %cst_63 = arith.constant 1.000000e+00 : f32
    %221 = vector.broadcast %cst_63 : f32 to vector<8x128xf32>
    %222 = arith.addf %221, %220 : vector<8x128xf32>
    %223 = arith.divf %221, %222 : vector<8x128xf32>
    %224 = vector.extract_strided_slice %213 {offsets = [0, 128], sizes = [8, 128], strides = [1, 1]} : vector<8x384xf32> to vector<8x128xf32>
    %225 = vector.extract_strided_slice %215 {offsets = [0, 128], sizes = [8, 128], strides = [1, 1]} : vector<8x384xf32> to vector<8x128xf32>
    %226 = arith.addf %224, %225 : vector<8x128xf32>
    %227 = arith.negf %226 : vector<8x128xf32>
    %228 = math.exp %227 : vector<8x128xf32>
    %cst_64 = arith.constant 1.000000e+00 : f32
    %229 = vector.broadcast %cst_64 : f32 to vector<8x128xf32>
    %230 = arith.addf %229, %228 : vector<8x128xf32>
    %231 = arith.divf %229, %230 : vector<8x128xf32>
    %232 = vector.extract_strided_slice %213 {offsets = [0, 256], sizes = [8, 128], strides = [1, 1]} : vector<8x384xf32> to vector<8x128xf32>
    %233 = vector.extract_strided_slice %215 {offsets = [0, 256], sizes = [8, 128], strides = [1, 1]} : vector<8x384xf32> to vector<8x128xf32>
    %234 = arith.addf %233, %10 : vector<8x128xf32>
    %235 = arith.mulf %223, %234 : vector<8x128xf32>
    %236 = arith.addf %232, %235 : vector<8x128xf32>
    %237 = math.tanh %236 : vector<8x128xf32>
    %238 = arith.subf %207, %237 : vector<8x128xf32>
    %239 = arith.mulf %231, %238 : vector<8x128xf32>
    %240 = arith.addf %237, %239 : vector<8x128xf32>
    %241 = arith.index_cast %211 : i32 to index
    %c0_65 = arith.constant 0 : index
    %242 = vector.load %arg14[%241, %c0_65] : memref<64x128xf32, #tpu.memory_space<vmem>>, vector<8x128xf32>
    tpu.vector_store %arg14[%241, %c0_65], %240 {strides = array<i32>} : memref<64x128xf32, #tpu.memory_space<vmem>>, vector<8x128xf32>,
    %c7_i32 = arith.constant 7 : i32
    %c8_i32_66 = arith.constant 8 : i32
    %243 = arith.muli %c7_i32, %c8_i32_66 : i32
    %244 = tpu.assume_multiple %243, 8 : i32
    %245 = arith.index_cast %244 : i32 to index
    %c0_67 = arith.constant 0 : index
    %246 = vector.load %arg13[%245, %c0_67] : memref<64x384xf32, #tpu.memory_space<vmem>>, vector<8x384xf32>
    %c0_68 = arith.constant 0 : index
    %c0_69 = arith.constant 0 : index
    %247 = vector.load %arg3[%c0_68, %c0_69] : memref<128x384xf32, #tpu.memory_space<vmem>>, vector<128x384xf32>
    %cst_70 = arith.constant dense<0.000000e+00> : vector<8x384xf32>
    %248 = tpu.matmul %240, %247, %cst_70 {dimension_numbers = #tpu.dot_dimension_numbers<[1], [0], [0], [1], [0, 0, 1, 1], [], []>} : vector<8x128xf32>, vector<128x384xf32>, vector<8x384xf32> -> vector<8x384xf32>
    %249 = vector.extract_strided_slice %246 {offsets = [0, 0], sizes = [8, 128], strides = [1, 1]} : vector<8x384xf32> to vector<8x128xf32>
    %250 = vector.extract_strided_slice %248 {offsets = [0, 0], sizes = [8, 128], strides = [1, 1]} : vector<8x384xf32> to vector<8x128xf32>
    %251 = arith.addf %249, %250 : vector<8x128xf32>
    %252 = arith.negf %251 : vector<8x128xf32>
    %253 = math.exp %252 : vector<8x128xf32>
    %cst_71 = arith.constant 1.000000e+00 : f32
    %254 = vector.broadcast %cst_71 : f32 to vector<8x128xf32>
    %255 = arith.addf %254, %253 : vector<8x128xf32>
    %256 = arith.divf %254, %255 : vector<8x128xf32>
    %257 = vector.extract_strided_slice %246 {offsets = [0, 128], sizes = [8, 128], strides = [1, 1]} : vector<8x384xf32> to vector<8x128xf32>
    %258 = vector.extract_strided_slice %248 {offsets = [0, 128], sizes = [8, 128], strides = [1, 1]} : vector<8x384xf32> to vector<8x128xf32>
    %259 = arith.addf %257, %258 : vector<8x128xf32>
    %260 = arith.negf %259 : vector<8x128xf32>
    %261 = math.exp %260 : vector<8x128xf32>
    %cst_72 = arith.constant 1.000000e+00 : f32
    %262 = vector.broadcast %cst_72 : f32 to vector<8x128xf32>
    %263 = arith.addf %262, %261 : vector<8x128xf32>
    %264 = arith.divf %262, %263 : vector<8x128xf32>
    %265 = vector.extract_strided_slice %246 {offsets = [0, 256], sizes = [8, 128], strides = [1, 1]} : vector<8x384xf32> to vector<8x128xf32>
    %266 = vector.extract_strided_slice %248 {offsets = [0, 256], sizes = [8, 128], strides = [1, 1]} : vector<8x384xf32> to vector<8x128xf32>
    %267 = arith.addf %266, %10 : vector<8x128xf32>
    %268 = arith.mulf %256, %267 : vector<8x128xf32>
    %269 = arith.addf %265, %268 : vector<8x128xf32>
    %270 = math.tanh %269 : vector<8x128xf32>
    %271 = arith.subf %240, %270 : vector<8x128xf32>
    %272 = arith.mulf %264, %271 : vector<8x128xf32>
    %273 = arith.addf %270, %272 : vector<8x128xf32>
    %274 = arith.index_cast %244 : i32 to index
    %c0_73 = arith.constant 0 : index
    %275 = vector.load %arg14[%274, %c0_73] : memref<64x128xf32, #tpu.memory_space<vmem>>, vector<8x128xf32>
    tpu.vector_store %arg14[%274, %c0_73], %273 {strides = array<i32>} : memref<64x128xf32, #tpu.memory_space<vmem>>, vector<8x128xf32>,
    %c8_i32_74 = arith.constant 8 : i32
    %c0_75 = arith.constant 0 : index
    %c0_76 = arith.constant 0 : index
    %276 = vector.load %arg14[%c0_75, %c0_76] : memref<64x128xf32, #tpu.memory_space<vmem>>, vector<64x128xf32>
    %c0_77 = arith.constant 0 : index
    %c0_78 = arith.constant 0 : index
    %277 = vector.load %arg6[%c0_77, %c0_78] : memref<128x384xf32, #tpu.memory_space<vmem>>, vector<128x384xf32>
    %cst_79 = arith.constant dense<0.000000e+00> : vector<64x384xf32>
    %278 = tpu.matmul %276, %277, %cst_79 {dimension_numbers = #tpu.dot_dimension_numbers<[1], [0], [0], [1], [0, 0, 1, 1], [], []>} : vector<64x128xf32>, vector<128x384xf32>, vector<64x384xf32> -> vector<64x384xf32>
    %c0_80 = arith.constant 0 : index
    %c0_81 = arith.constant 0 : index
    %279 = vector.load %arg8[%c0_80, %c0_81] : memref<1x384xf32, #tpu.memory_space<vmem>>, vector<1x384xf32>
    %280 = vector.broadcast %279 : vector<1x384xf32> to vector<64x384xf32>
    %281 = arith.addf %278, %280 : vector<64x384xf32>
    %c0_82 = arith.constant 0 : index
    %c0_83 = arith.constant 0 : index
    %282 = vector.load %arg13[%c0_82, %c0_83] : memref<64x384xf32, #tpu.memory_space<vmem>>, vector<64x384xf32>
    tpu.vector_store %arg13[%c0_82, %c0_83], %281 {strides = array<i32>} : memref<64x384xf32, #tpu.memory_space<vmem>>, vector<64x384xf32>,
    %c0_84 = arith.constant 0 : index
    %c0_85 = arith.constant 0 : index
    %283 = vector.load %arg9[%c0_84, %c0_85] : memref<1x128xf32, #tpu.memory_space<vmem>>, vector<1x128xf32>
    %284 = vector.shape_cast %283 : vector<1x128xf32> to vector<1x128xf32>
    %285 = vector.broadcast %284 : vector<1x128xf32> to vector<8x128xf32>
    %cst_86 = arith.constant 0.000000e+00 : f32
    %286 = vector.broadcast %cst_86 : f32 to vector<8x128xf32>
    %c0_i32_87 = arith.constant 0 : i32
    %c8_i32_88 = arith.constant 8 : i32
    %287 = arith.muli %c0_i32_87, %c8_i32_88 : i32
    %288 = tpu.assume_multiple %287, 8 : i32
    %289 = arith.index_cast %288 : i32 to index
    %c0_89 = arith.constant 0 : index
    %290 = vector.load %arg13[%289, %c0_89] : memref<64x384xf32, #tpu.memory_space<vmem>>, vector<8x384xf32>
    %c0_90 = arith.constant 0 : index
    %c0_91 = arith.constant 0 : index
    %291 = vector.load %arg7[%c0_90, %c0_91] : memref<128x384xf32, #tpu.memory_space<vmem>>, vector<128x384xf32>
    %cst_92 = arith.constant dense<0.000000e+00> : vector<8x384xf32>
    %292 = tpu.matmul %286, %291, %cst_92 {dimension_numbers = #tpu.dot_dimension_numbers<[1], [0], [0], [1], [0, 0, 1, 1], [], []>} : vector<8x128xf32>, vector<128x384xf32>, vector<8x384xf32> -> vector<8x384xf32>
    %293 = vector.extract_strided_slice %290 {offsets = [0, 0], sizes = [8, 128], strides = [1, 1]} : vector<8x384xf32> to vector<8x128xf32>
    %294 = vector.extract_strided_slice %292 {offsets = [0, 0], sizes = [8, 128], strides = [1, 1]} : vector<8x384xf32> to vector<8x128xf32>
    %295 = arith.addf %293, %294 : vector<8x128xf32>
    %296 = arith.negf %295 : vector<8x128xf32>
    %297 = math.exp %296 : vector<8x128xf32>
    %cst_93 = arith.constant 1.000000e+00 : f32
    %298 = vector.broadcast %cst_93 : f32 to vector<8x128xf32>
    %299 = arith.addf %298, %297 : vector<8x128xf32>
    %300 = arith.divf %298, %299 : vector<8x128xf32>
    %301 = vector.extract_strided_slice %290 {offsets = [0, 128], sizes = [8, 128], strides = [1, 1]} : vector<8x384xf32> to vector<8x128xf32>
    %302 = vector.extract_strided_slice %292 {offsets = [0, 128], sizes = [8, 128], strides = [1, 1]} : vector<8x384xf32> to vector<8x128xf32>
    %303 = arith.addf %301, %302 : vector<8x128xf32>
    %304 = arith.negf %303 : vector<8x128xf32>
    %305 = math.exp %304 : vector<8x128xf32>
    %cst_94 = arith.constant 1.000000e+00 : f32
    %306 = vector.broadcast %cst_94 : f32 to vector<8x128xf32>
    %307 = arith.addf %306, %305 : vector<8x128xf32>
    %308 = arith.divf %306, %307 : vector<8x128xf32>
    %309 = vector.extract_strided_slice %290 {offsets = [0, 256], sizes = [8, 128], strides = [1, 1]} : vector<8x384xf32> to vector<8x128xf32>
    %310 = vector.extract_strided_slice %292 {offsets = [0, 256], sizes = [8, 128], strides = [1, 1]} : vector<8x384xf32> to vector<8x128xf32>
    %311 = arith.addf %310, %285 : vector<8x128xf32>
    %312 = arith.mulf %300, %311 : vector<8x128xf32>
    %313 = arith.addf %309, %312 : vector<8x128xf32>
    %314 = math.tanh %313 : vector<8x128xf32>
    %315 = arith.subf %286, %314 : vector<8x128xf32>
    %316 = arith.mulf %308, %315 : vector<8x128xf32>
    %317 = arith.addf %314, %316 : vector<8x128xf32>
    %318 = arith.index_cast %288 : i32 to index
    %c0_95 = arith.constant 0 : index
    %319 = vector.load %arg14[%318, %c0_95] : memref<64x128xf32, #tpu.memory_space<vmem>>, vector<8x128xf32>
    tpu.vector_store %arg14[%318, %c0_95], %317 {strides = array<i32>} : memref<64x128xf32, #tpu.memory_space<vmem>>, vector<8x128xf32>,
    %c1_i32_96 = arith.constant 1 : i32
    %c8_i32_97 = arith.constant 8 : i32
    %320 = arith.muli %c1_i32_96, %c8_i32_97 : i32
    %321 = tpu.assume_multiple %320, 8 : i32
    %322 = arith.index_cast %321 : i32 to index
    %c0_98 = arith.constant 0 : index
    %323 = vector.load %arg13[%322, %c0_98] : memref<64x384xf32, #tpu.memory_space<vmem>>, vector<8x384xf32>
    %c0_99 = arith.constant 0 : index
    %c0_100 = arith.constant 0 : index
    %324 = vector.load %arg7[%c0_99, %c0_100] : memref<128x384xf32, #tpu.memory_space<vmem>>, vector<128x384xf32>
    %cst_101 = arith.constant dense<0.000000e+00> : vector<8x384xf32>
    %325 = tpu.matmul %317, %324, %cst_101 {dimension_numbers = #tpu.dot_dimension_numbers<[1], [0], [0], [1], [0, 0, 1, 1], [], []>} : vector<8x128xf32>, vector<128x384xf32>, vector<8x384xf32> -> vector<8x384xf32>
    %326 = vector.extract_strided_slice %323 {offsets = [0, 0], sizes = [8, 128], strides = [1, 1]} : vector<8x384xf32> to vector<8x128xf32>
    %327 = vector.extract_strided_slice %325 {offsets = [0, 0], sizes = [8, 128], strides = [1, 1]} : vector<8x384xf32> to vector<8x128xf32>
    %328 = arith.addf %326, %327 : vector<8x128xf32>
    %329 = arith.negf %328 : vector<8x128xf32>
    %330 = math.exp %329 : vector<8x128xf32>
    %cst_102 = arith.constant 1.000000e+00 : f32
    %331 = vector.broadcast %cst_102 : f32 to vector<8x128xf32>
    %332 = arith.addf %331, %330 : vector<8x128xf32>
    %333 = arith.divf %331, %332 : vector<8x128xf32>
    %334 = vector.extract_strided_slice %323 {offsets = [0, 128], sizes = [8, 128], strides = [1, 1]} : vector<8x384xf32> to vector<8x128xf32>
    %335 = vector.extract_strided_slice %325 {offsets = [0, 128], sizes = [8, 128], strides = [1, 1]} : vector<8x384xf32> to vector<8x128xf32>
    %336 = arith.addf %334, %335 : vector<8x128xf32>
    %337 = arith.negf %336 : vector<8x128xf32>
    %338 = math.exp %337 : vector<8x128xf32>
    %cst_103 = arith.constant 1.000000e+00 : f32
    %339 = vector.broadcast %cst_103 : f32 to vector<8x128xf32>
    %340 = arith.addf %339, %338 : vector<8x128xf32>
    %341 = arith.divf %339, %340 : vector<8x128xf32>
    %342 = vector.extract_strided_slice %323 {offsets = [0, 256], sizes = [8, 128], strides = [1, 1]} : vector<8x384xf32> to vector<8x128xf32>
    %343 = vector.extract_strided_slice %325 {offsets = [0, 256], sizes = [8, 128], strides = [1, 1]} : vector<8x384xf32> to vector<8x128xf32>
    %344 = arith.addf %343, %285 : vector<8x128xf32>
    %345 = arith.mulf %333, %344 : vector<8x128xf32>
    %346 = arith.addf %342, %345 : vector<8x128xf32>
    %347 = math.tanh %346 : vector<8x128xf32>
    %348 = arith.subf %317, %347 : vector<8x128xf32>
    %349 = arith.mulf %341, %348 : vector<8x128xf32>
    %350 = arith.addf %347, %349 : vector<8x128xf32>
    %351 = arith.index_cast %321 : i32 to index
    %c0_104 = arith.constant 0 : index
    %352 = vector.load %arg14[%351, %c0_104] : memref<64x128xf32, #tpu.memory_space<vmem>>, vector<8x128xf32>
    tpu.vector_store %arg14[%351, %c0_104], %350 {strides = array<i32>} : memref<64x128xf32, #tpu.memory_space<vmem>>, vector<8x128xf32>,
    %c2_i32_105 = arith.constant 2 : i32
    %c8_i32_106 = arith.constant 8 : i32
    %353 = arith.muli %c2_i32_105, %c8_i32_106 : i32
    %354 = tpu.assume_multiple %353, 8 : i32
    %355 = arith.index_cast %354 : i32 to index
    %c0_107 = arith.constant 0 : index
    %356 = vector.load %arg13[%355, %c0_107] : memref<64x384xf32, #tpu.memory_space<vmem>>, vector<8x384xf32>
    %c0_108 = arith.constant 0 : index
    %c0_109 = arith.constant 0 : index
    %357 = vector.load %arg7[%c0_108, %c0_109] : memref<128x384xf32, #tpu.memory_space<vmem>>, vector<128x384xf32>
    %cst_110 = arith.constant dense<0.000000e+00> : vector<8x384xf32>
    %358 = tpu.matmul %350, %357, %cst_110 {dimension_numbers = #tpu.dot_dimension_numbers<[1], [0], [0], [1], [0, 0, 1, 1], [], []>} : vector<8x128xf32>, vector<128x384xf32>, vector<8x384xf32> -> vector<8x384xf32>
    %359 = vector.extract_strided_slice %356 {offsets = [0, 0], sizes = [8, 128], strides = [1, 1]} : vector<8x384xf32> to vector<8x128xf32>
    %360 = vector.extract_strided_slice %358 {offsets = [0, 0], sizes = [8, 128], strides = [1, 1]} : vector<8x384xf32> to vector<8x128xf32>
    %361 = arith.addf %359, %360 : vector<8x128xf32>
    %362 = arith.negf %361 : vector<8x128xf32>
    %363 = math.exp %362 : vector<8x128xf32>
    %cst_111 = arith.constant 1.000000e+00 : f32
    %364 = vector.broadcast %cst_111 : f32 to vector<8x128xf32>
    %365 = arith.addf %364, %363 : vector<8x128xf32>
    %366 = arith.divf %364, %365 : vector<8x128xf32>
    %367 = vector.extract_strided_slice %356 {offsets = [0, 128], sizes = [8, 128], strides = [1, 1]} : vector<8x384xf32> to vector<8x128xf32>
    %368 = vector.extract_strided_slice %358 {offsets = [0, 128], sizes = [8, 128], strides = [1, 1]} : vector<8x384xf32> to vector<8x128xf32>
    %369 = arith.addf %367, %368 : vector<8x128xf32>
    %370 = arith.negf %369 : vector<8x128xf32>
    %371 = math.exp %370 : vector<8x128xf32>
    %cst_112 = arith.constant 1.000000e+00 : f32
    %372 = vector.broadcast %cst_112 : f32 to vector<8x128xf32>
    %373 = arith.addf %372, %371 : vector<8x128xf32>
    %374 = arith.divf %372, %373 : vector<8x128xf32>
    %375 = vector.extract_strided_slice %356 {offsets = [0, 256], sizes = [8, 128], strides = [1, 1]} : vector<8x384xf32> to vector<8x128xf32>
    %376 = vector.extract_strided_slice %358 {offsets = [0, 256], sizes = [8, 128], strides = [1, 1]} : vector<8x384xf32> to vector<8x128xf32>
    %377 = arith.addf %376, %285 : vector<8x128xf32>
    %378 = arith.mulf %366, %377 : vector<8x128xf32>
    %379 = arith.addf %375, %378 : vector<8x128xf32>
    %380 = math.tanh %379 : vector<8x128xf32>
    %381 = arith.subf %350, %380 : vector<8x128xf32>
    %382 = arith.mulf %374, %381 : vector<8x128xf32>
    %383 = arith.addf %380, %382 : vector<8x128xf32>
    %384 = arith.index_cast %354 : i32 to index
    %c0_113 = arith.constant 0 : index
    %385 = vector.load %arg14[%384, %c0_113] : memref<64x128xf32, #tpu.memory_space<vmem>>, vector<8x128xf32>
    tpu.vector_store %arg14[%384, %c0_113], %383 {strides = array<i32>} : memref<64x128xf32, #tpu.memory_space<vmem>>, vector<8x128xf32>,
    %c3_i32_114 = arith.constant 3 : i32
    %c8_i32_115 = arith.constant 8 : i32
    %386 = arith.muli %c3_i32_114, %c8_i32_115 : i32
    %387 = tpu.assume_multiple %386, 8 : i32
    %388 = arith.index_cast %387 : i32 to index
    %c0_116 = arith.constant 0 : index
    %389 = vector.load %arg13[%388, %c0_116] : memref<64x384xf32, #tpu.memory_space<vmem>>, vector<8x384xf32>
    %c0_117 = arith.constant 0 : index
    %c0_118 = arith.constant 0 : index
    %390 = vector.load %arg7[%c0_117, %c0_118] : memref<128x384xf32, #tpu.memory_space<vmem>>, vector<128x384xf32>
    %cst_119 = arith.constant dense<0.000000e+00> : vector<8x384xf32>
    %391 = tpu.matmul %383, %390, %cst_119 {dimension_numbers = #tpu.dot_dimension_numbers<[1], [0], [0], [1], [0, 0, 1, 1], [], []>} : vector<8x128xf32>, vector<128x384xf32>, vector<8x384xf32> -> vector<8x384xf32>
    %392 = vector.extract_strided_slice %389 {offsets = [0, 0], sizes = [8, 128], strides = [1, 1]} : vector<8x384xf32> to vector<8x128xf32>
    %393 = vector.extract_strided_slice %391 {offsets = [0, 0], sizes = [8, 128], strides = [1, 1]} : vector<8x384xf32> to vector<8x128xf32>
    %394 = arith.addf %392, %393 : vector<8x128xf32>
    %395 = arith.negf %394 : vector<8x128xf32>
    %396 = math.exp %395 : vector<8x128xf32>
    %cst_120 = arith.constant 1.000000e+00 : f32
    %397 = vector.broadcast %cst_120 : f32 to vector<8x128xf32>
    %398 = arith.addf %397, %396 : vector<8x128xf32>
    %399 = arith.divf %397, %398 : vector<8x128xf32>
    %400 = vector.extract_strided_slice %389 {offsets = [0, 128], sizes = [8, 128], strides = [1, 1]} : vector<8x384xf32> to vector<8x128xf32>
    %401 = vector.extract_strided_slice %391 {offsets = [0, 128], sizes = [8, 128], strides = [1, 1]} : vector<8x384xf32> to vector<8x128xf32>
    %402 = arith.addf %400, %401 : vector<8x128xf32>
    %403 = arith.negf %402 : vector<8x128xf32>
    %404 = math.exp %403 : vector<8x128xf32>
    %cst_121 = arith.constant 1.000000e+00 : f32
    %405 = vector.broadcast %cst_121 : f32 to vector<8x128xf32>
    %406 = arith.addf %405, %404 : vector<8x128xf32>
    %407 = arith.divf %405, %406 : vector<8x128xf32>
    %408 = vector.extract_strided_slice %389 {offsets = [0, 256], sizes = [8, 128], strides = [1, 1]} : vector<8x384xf32> to vector<8x128xf32>
    %409 = vector.extract_strided_slice %391 {offsets = [0, 256], sizes = [8, 128], strides = [1, 1]} : vector<8x384xf32> to vector<8x128xf32>
    %410 = arith.addf %409, %285 : vector<8x128xf32>
    %411 = arith.mulf %399, %410 : vector<8x128xf32>
    %412 = arith.addf %408, %411 : vector<8x128xf32>
    %413 = math.tanh %412 : vector<8x128xf32>
    %414 = arith.subf %383, %413 : vector<8x128xf32>
    %415 = arith.mulf %407, %414 : vector<8x128xf32>
    %416 = arith.addf %413, %415 : vector<8x128xf32>
    %417 = arith.index_cast %387 : i32 to index
    %c0_122 = arith.constant 0 : index
    %418 = vector.load %arg14[%417, %c0_122] : memref<64x128xf32, #tpu.memory_space<vmem>>, vector<8x128xf32>
    tpu.vector_store %arg14[%417, %c0_122], %416 {strides = array<i32>} : memref<64x128xf32, #tpu.memory_space<vmem>>, vector<8x128xf32>,
    %c4_i32_123 = arith.constant 4 : i32
    %c8_i32_124 = arith.constant 8 : i32
    %419 = arith.muli %c4_i32_123, %c8_i32_124 : i32
    %420 = tpu.assume_multiple %419, 8 : i32
    %421 = arith.index_cast %420 : i32 to index
    %c0_125 = arith.constant 0 : index
    %422 = vector.load %arg13[%421, %c0_125] : memref<64x384xf32, #tpu.memory_space<vmem>>, vector<8x384xf32>
    %c0_126 = arith.constant 0 : index
    %c0_127 = arith.constant 0 : index
    %423 = vector.load %arg7[%c0_126, %c0_127] : memref<128x384xf32, #tpu.memory_space<vmem>>, vector<128x384xf32>
    %cst_128 = arith.constant dense<0.000000e+00> : vector<8x384xf32>
    %424 = tpu.matmul %416, %423, %cst_128 {dimension_numbers = #tpu.dot_dimension_numbers<[1], [0], [0], [1], [0, 0, 1, 1], [], []>} : vector<8x128xf32>, vector<128x384xf32>, vector<8x384xf32> -> vector<8x384xf32>
    %425 = vector.extract_strided_slice %422 {offsets = [0, 0], sizes = [8, 128], strides = [1, 1]} : vector<8x384xf32> to vector<8x128xf32>
    %426 = vector.extract_strided_slice %424 {offsets = [0, 0], sizes = [8, 128], strides = [1, 1]} : vector<8x384xf32> to vector<8x128xf32>
    %427 = arith.addf %425, %426 : vector<8x128xf32>
    %428 = arith.negf %427 : vector<8x128xf32>
    %429 = math.exp %428 : vector<8x128xf32>
    %cst_129 = arith.constant 1.000000e+00 : f32
    %430 = vector.broadcast %cst_129 : f32 to vector<8x128xf32>
    %431 = arith.addf %430, %429 : vector<8x128xf32>
    %432 = arith.divf %430, %431 : vector<8x128xf32>
    %433 = vector.extract_strided_slice %422 {offsets = [0, 128], sizes = [8, 128], strides = [1, 1]} : vector<8x384xf32> to vector<8x128xf32>
    %434 = vector.extract_strided_slice %424 {offsets = [0, 128], sizes = [8, 128], strides = [1, 1]} : vector<8x384xf32> to vector<8x128xf32>
    %435 = arith.addf %433, %434 : vector<8x128xf32>
    %436 = arith.negf %435 : vector<8x128xf32>
    %437 = math.exp %436 : vector<8x128xf32>
    %cst_130 = arith.constant 1.000000e+00 : f32
    %438 = vector.broadcast %cst_130 : f32 to vector<8x128xf32>
    %439 = arith.addf %438, %437 : vector<8x128xf32>
    %440 = arith.divf %438, %439 : vector<8x128xf32>
    %441 = vector.extract_strided_slice %422 {offsets = [0, 256], sizes = [8, 128], strides = [1, 1]} : vector<8x384xf32> to vector<8x128xf32>
    %442 = vector.extract_strided_slice %424 {offsets = [0, 256], sizes = [8, 128], strides = [1, 1]} : vector<8x384xf32> to vector<8x128xf32>
    %443 = arith.addf %442, %285 : vector<8x128xf32>
    %444 = arith.mulf %432, %443 : vector<8x128xf32>
    %445 = arith.addf %441, %444 : vector<8x128xf32>
    %446 = math.tanh %445 : vector<8x128xf32>
    %447 = arith.subf %416, %446 : vector<8x128xf32>
    %448 = arith.mulf %440, %447 : vector<8x128xf32>
    %449 = arith.addf %446, %448 : vector<8x128xf32>
    %450 = arith.index_cast %420 : i32 to index
    %c0_131 = arith.constant 0 : index
    %451 = vector.load %arg14[%450, %c0_131] : memref<64x128xf32, #tpu.memory_space<vmem>>, vector<8x128xf32>
    tpu.vector_store %arg14[%450, %c0_131], %449 {strides = array<i32>} : memref<64x128xf32, #tpu.memory_space<vmem>>, vector<8x128xf32>,
    %c5_i32_132 = arith.constant 5 : i32
    %c8_i32_133 = arith.constant 8 : i32
    %452 = arith.muli %c5_i32_132, %c8_i32_133 : i32
    %453 = tpu.assume_multiple %452, 8 : i32
    %454 = arith.index_cast %453 : i32 to index
    %c0_134 = arith.constant 0 : index
    %455 = vector.load %arg13[%454, %c0_134] : memref<64x384xf32, #tpu.memory_space<vmem>>, vector<8x384xf32>
    %c0_135 = arith.constant 0 : index
    %c0_136 = arith.constant 0 : index
    %456 = vector.load %arg7[%c0_135, %c0_136] : memref<128x384xf32, #tpu.memory_space<vmem>>, vector<128x384xf32>
    %cst_137 = arith.constant dense<0.000000e+00> : vector<8x384xf32>
    %457 = tpu.matmul %449, %456, %cst_137 {dimension_numbers = #tpu.dot_dimension_numbers<[1], [0], [0], [1], [0, 0, 1, 1], [], []>} : vector<8x128xf32>, vector<128x384xf32>, vector<8x384xf32> -> vector<8x384xf32>
    %458 = vector.extract_strided_slice %455 {offsets = [0, 0], sizes = [8, 128], strides = [1, 1]} : vector<8x384xf32> to vector<8x128xf32>
    %459 = vector.extract_strided_slice %457 {offsets = [0, 0], sizes = [8, 128], strides = [1, 1]} : vector<8x384xf32> to vector<8x128xf32>
    %460 = arith.addf %458, %459 : vector<8x128xf32>
    %461 = arith.negf %460 : vector<8x128xf32>
    %462 = math.exp %461 : vector<8x128xf32>
    %cst_138 = arith.constant 1.000000e+00 : f32
    %463 = vector.broadcast %cst_138 : f32 to vector<8x128xf32>
    %464 = arith.addf %463, %462 : vector<8x128xf32>
    %465 = arith.divf %463, %464 : vector<8x128xf32>
    %466 = vector.extract_strided_slice %455 {offsets = [0, 128], sizes = [8, 128], strides = [1, 1]} : vector<8x384xf32> to vector<8x128xf32>
    %467 = vector.extract_strided_slice %457 {offsets = [0, 128], sizes = [8, 128], strides = [1, 1]} : vector<8x384xf32> to vector<8x128xf32>
    %468 = arith.addf %466, %467 : vector<8x128xf32>
    %469 = arith.negf %468 : vector<8x128xf32>
    %470 = math.exp %469 : vector<8x128xf32>
    %cst_139 = arith.constant 1.000000e+00 : f32
    %471 = vector.broadcast %cst_139 : f32 to vector<8x128xf32>
    %472 = arith.addf %471, %470 : vector<8x128xf32>
    %473 = arith.divf %471, %472 : vector<8x128xf32>
    %474 = vector.extract_strided_slice %455 {offsets = [0, 256], sizes = [8, 128], strides = [1, 1]} : vector<8x384xf32> to vector<8x128xf32>
    %475 = vector.extract_strided_slice %457 {offsets = [0, 256], sizes = [8, 128], strides = [1, 1]} : vector<8x384xf32> to vector<8x128xf32>
    %476 = arith.addf %475, %285 : vector<8x128xf32>
    %477 = arith.mulf %465, %476 : vector<8x128xf32>
    %478 = arith.addf %474, %477 : vector<8x128xf32>
    %479 = math.tanh %478 : vector<8x128xf32>
    %480 = arith.subf %449, %479 : vector<8x128xf32>
    %481 = arith.mulf %473, %480 : vector<8x128xf32>
    %482 = arith.addf %479, %481 : vector<8x128xf32>
    %483 = arith.index_cast %453 : i32 to index
    %c0_140 = arith.constant 0 : index
    %484 = vector.load %arg14[%483, %c0_140] : memref<64x128xf32, #tpu.memory_space<vmem>>, vector<8x128xf32>
    tpu.vector_store %arg14[%483, %c0_140], %482 {strides = array<i32>} : memref<64x128xf32, #tpu.memory_space<vmem>>, vector<8x128xf32>,
    %c6_i32_141 = arith.constant 6 : i32
    %c8_i32_142 = arith.constant 8 : i32
    %485 = arith.muli %c6_i32_141, %c8_i32_142 : i32
    %486 = tpu.assume_multiple %485, 8 : i32
    %487 = arith.index_cast %486 : i32 to index
    %c0_143 = arith.constant 0 : index
    %488 = vector.load %arg13[%487, %c0_143] : memref<64x384xf32, #tpu.memory_space<vmem>>, vector<8x384xf32>
    %c0_144 = arith.constant 0 : index
    %c0_145 = arith.constant 0 : index
    %489 = vector.load %arg7[%c0_144, %c0_145] : memref<128x384xf32, #tpu.memory_space<vmem>>, vector<128x384xf32>
    %cst_146 = arith.constant dense<0.000000e+00> : vector<8x384xf32>
    %490 = tpu.matmul %482, %489, %cst_146 {dimension_numbers = #tpu.dot_dimension_numbers<[1], [0], [0], [1], [0, 0, 1, 1], [], []>} : vector<8x128xf32>, vector<128x384xf32>, vector<8x384xf32> -> vector<8x384xf32>
    %491 = vector.extract_strided_slice %488 {offsets = [0, 0], sizes = [8, 128], strides = [1, 1]} : vector<8x384xf32> to vector<8x128xf32>
    %492 = vector.extract_strided_slice %490 {offsets = [0, 0], sizes = [8, 128], strides = [1, 1]} : vector<8x384xf32> to vector<8x128xf32>
    %493 = arith.addf %491, %492 : vector<8x128xf32>
    %494 = arith.negf %493 : vector<8x128xf32>
    %495 = math.exp %494 : vector<8x128xf32>
    %cst_147 = arith.constant 1.000000e+00 : f32
    %496 = vector.broadcast %cst_147 : f32 to vector<8x128xf32>
    %497 = arith.addf %496, %495 : vector<8x128xf32>
    %498 = arith.divf %496, %497 : vector<8x128xf32>
    %499 = vector.extract_strided_slice %488 {offsets = [0, 128], sizes = [8, 128], strides = [1, 1]} : vector<8x384xf32> to vector<8x128xf32>
    %500 = vector.extract_strided_slice %490 {offsets = [0, 128], sizes = [8, 128], strides = [1, 1]} : vector<8x384xf32> to vector<8x128xf32>
    %501 = arith.addf %499, %500 : vector<8x128xf32>
    %502 = arith.negf %501 : vector<8x128xf32>
    %503 = math.exp %502 : vector<8x128xf32>
    %cst_148 = arith.constant 1.000000e+00 : f32
    %504 = vector.broadcast %cst_148 : f32 to vector<8x128xf32>
    %505 = arith.addf %504, %503 : vector<8x128xf32>
    %506 = arith.divf %504, %505 : vector<8x128xf32>
    %507 = vector.extract_strided_slice %488 {offsets = [0, 256], sizes = [8, 128], strides = [1, 1]} : vector<8x384xf32> to vector<8x128xf32>
    %508 = vector.extract_strided_slice %490 {offsets = [0, 256], sizes = [8, 128], strides = [1, 1]} : vector<8x384xf32> to vector<8x128xf32>
    %509 = arith.addf %508, %285 : vector<8x128xf32>
    %510 = arith.mulf %498, %509 : vector<8x128xf32>
    %511 = arith.addf %507, %510 : vector<8x128xf32>
    %512 = math.tanh %511 : vector<8x128xf32>
    %513 = arith.subf %482, %512 : vector<8x128xf32>
    %514 = arith.mulf %506, %513 : vector<8x128xf32>
    %515 = arith.addf %512, %514 : vector<8x128xf32>
    %516 = arith.index_cast %486 : i32 to index
    %c0_149 = arith.constant 0 : index
    %517 = vector.load %arg14[%516, %c0_149] : memref<64x128xf32, #tpu.memory_space<vmem>>, vector<8x128xf32>
    tpu.vector_store %arg14[%516, %c0_149], %515 {strides = array<i32>} : memref<64x128xf32, #tpu.memory_space<vmem>>, vector<8x128xf32>,
    %c7_i32_150 = arith.constant 7 : i32
    %c8_i32_151 = arith.constant 8 : i32
    %518 = arith.muli %c7_i32_150, %c8_i32_151 : i32
    %519 = tpu.assume_multiple %518, 8 : i32
    %520 = arith.index_cast %519 : i32 to index
    %c0_152 = arith.constant 0 : index
    %521 = vector.load %arg13[%520, %c0_152] : memref<64x384xf32, #tpu.memory_space<vmem>>, vector<8x384xf32>
    %c0_153 = arith.constant 0 : index
    %c0_154 = arith.constant 0 : index
    %522 = vector.load %arg7[%c0_153, %c0_154] : memref<128x384xf32, #tpu.memory_space<vmem>>, vector<128x384xf32>
    %cst_155 = arith.constant dense<0.000000e+00> : vector<8x384xf32>
    %523 = tpu.matmul %515, %522, %cst_155 {dimension_numbers = #tpu.dot_dimension_numbers<[1], [0], [0], [1], [0, 0, 1, 1], [], []>} : vector<8x128xf32>, vector<128x384xf32>, vector<8x384xf32> -> vector<8x384xf32>
    %524 = vector.extract_strided_slice %521 {offsets = [0, 0], sizes = [8, 128], strides = [1, 1]} : vector<8x384xf32> to vector<8x128xf32>
    %525 = vector.extract_strided_slice %523 {offsets = [0, 0], sizes = [8, 128], strides = [1, 1]} : vector<8x384xf32> to vector<8x128xf32>
    %526 = arith.addf %524, %525 : vector<8x128xf32>
    %527 = arith.negf %526 : vector<8x128xf32>
    %528 = math.exp %527 : vector<8x128xf32>
    %cst_156 = arith.constant 1.000000e+00 : f32
    %529 = vector.broadcast %cst_156 : f32 to vector<8x128xf32>
    %530 = arith.addf %529, %528 : vector<8x128xf32>
    %531 = arith.divf %529, %530 : vector<8x128xf32>
    %532 = vector.extract_strided_slice %521 {offsets = [0, 128], sizes = [8, 128], strides = [1, 1]} : vector<8x384xf32> to vector<8x128xf32>
    %533 = vector.extract_strided_slice %523 {offsets = [0, 128], sizes = [8, 128], strides = [1, 1]} : vector<8x384xf32> to vector<8x128xf32>
    %534 = arith.addf %532, %533 : vector<8x128xf32>
    %535 = arith.negf %534 : vector<8x128xf32>
    %536 = math.exp %535 : vector<8x128xf32>
    %cst_157 = arith.constant 1.000000e+00 : f32
    %537 = vector.broadcast %cst_157 : f32 to vector<8x128xf32>
    %538 = arith.addf %537, %536 : vector<8x128xf32>
    %539 = arith.divf %537, %538 : vector<8x128xf32>
    %540 = vector.extract_strided_slice %521 {offsets = [0, 256], sizes = [8, 128], strides = [1, 1]} : vector<8x384xf32> to vector<8x128xf32>
    %541 = vector.extract_strided_slice %523 {offsets = [0, 256], sizes = [8, 128], strides = [1, 1]} : vector<8x384xf32> to vector<8x128xf32>
    %542 = arith.addf %541, %285 : vector<8x128xf32>
    %543 = arith.mulf %531, %542 : vector<8x128xf32>
    %544 = arith.addf %540, %543 : vector<8x128xf32>
    %545 = math.tanh %544 : vector<8x128xf32>
    %546 = arith.subf %515, %545 : vector<8x128xf32>
    %547 = arith.mulf %539, %546 : vector<8x128xf32>
    %548 = arith.addf %545, %547 : vector<8x128xf32>
    %549 = arith.index_cast %519 : i32 to index
    %c0_158 = arith.constant 0 : index
    %550 = vector.load %arg14[%549, %c0_158] : memref<64x128xf32, #tpu.memory_space<vmem>>, vector<8x128xf32>
    tpu.vector_store %arg14[%549, %c0_158], %548 {strides = array<i32>} : memref<64x128xf32, #tpu.memory_space<vmem>>, vector<8x128xf32>,
    %c8_i32_159 = arith.constant 8 : i32
    %c0_160 = arith.constant 0 : index
    %c0_161 = arith.constant 0 : index
    %551 = vector.load %arg10[%c0_160, %c0_161] : memref<128x4xf32, #tpu.memory_space<vmem>>, vector<128x4xf32>
    %cst_162 = arith.constant dense<0.000000e+00> : vector<8x4xf32>
    %552 = tpu.matmul %548, %551, %cst_162 {dimension_numbers = #tpu.dot_dimension_numbers<[1], [0], [0], [1], [0, 0, 1, 1], [], []>} : vector<8x128xf32>, vector<128x4xf32>, vector<8x4xf32> -> vector<8x4xf32>
    %c0_163 = arith.constant 0 : index
    %c0_164 = arith.constant 0 : index
    %553 = vector.load %arg11[%c0_163, %c0_164] : memref<1x4xf32, #tpu.memory_space<vmem>>, vector<1x4xf32>
    %554 = vector.broadcast %553 : vector<1x4xf32> to vector<8x4xf32>
    %555 = arith.addf %552, %554 : vector<8x4xf32>
    %c0_165 = arith.constant 0 : index
    %c0_166 = arith.constant 0 : index
    %c0_167 = arith.constant 0 : index
    %556 = vector.load %arg12[%c0_165, %c0_166, %c0_167] : memref<1x8x4xf32, #tpu.memory_space<vmem>>, vector<1x8x4xf32>
    %557 = vector.shape_cast %556 : vector<1x8x4xf32> to vector<8x4xf32>
    %558 = vector.shape_cast %555 : vector<8x4xf32> to vector<1x8x4xf32>
    tpu.vector_store %arg12[%c0_165, %c0_166, %c0_167], %558 {strides = array<i32>} : memref<1x8x4xf32, #tpu.memory_space<vmem>>, vector<1x8x4xf32>,
    return
  }
  func.func @transform_0(%arg0: i32) -> (i32, i32, i32) {
    %c0_i32 = arith.constant 0 : i32
    %c0_i32_0 = arith.constant 0 : i32
    %c0_i32_1 = arith.constant 0 : i32
    return %arg0, %c0_i32, %c0_i32_0 : i32, i32, i32
  }
  func.func @transform_1(%arg0: i32) -> (i32, i32) {
    %c0_i32 = arith.constant 0 : i32
    %c0_i32_0 = arith.constant 0 : i32
    %c0_i32_1 = arith.constant 0 : i32
    return %c0_i32, %c0_i32_0 : i32, i32
  }
  func.func @transform_2(%arg0: i32) -> (i32, i32) {
    %c0_i32 = arith.constant 0 : i32
    %c0_i32_0 = arith.constant 0 : i32
    %c0_i32_1 = arith.constant 0 : i32
    return %c0_i32, %c0_i32_0 : i32, i32
  }
  func.func @transform_3(%arg0: i32) -> (i32, i32) {
    %c0_i32 = arith.constant 0 : i32
    %c0_i32_0 = arith.constant 0 : i32
    %c0_i32_1 = arith.constant 0 : i32
    return %c0_i32, %c0_i32_0 : i32, i32
  }
  func.func @transform_4(%arg0: i32) -> (i32, i32) {
    %c0_i32 = arith.constant 0 : i32
    %c0_i32_0 = arith.constant 0 : i32
    %c0_i32_1 = arith.constant 0 : i32
    return %c0_i32, %c0_i32_0 : i32, i32
  }
  func.func @transform_5(%arg0: i32) -> (i32, i32) {
    %c0_i32 = arith.constant 0 : i32
    %c0_i32_0 = arith.constant 0 : i32
    %c0_i32_1 = arith.constant 0 : i32
    return %c0_i32, %c0_i32_0 : i32, i32
  }
  func.func @transform_6(%arg0: i32) -> (i32, i32) {
    %c0_i32 = arith.constant 0 : i32
    %c0_i32_0 = arith.constant 0 : i32
    %c0_i32_1 = arith.constant 0 : i32
    return %c0_i32, %c0_i32_0 : i32, i32
  }
  func.func @transform_7(%arg0: i32) -> (i32, i32) {
    %c0_i32 = arith.constant 0 : i32
    %c0_i32_0 = arith.constant 0 : i32
    %c0_i32_1 = arith.constant 0 : i32
    return %c0_i32, %c0_i32_0 : i32, i32
  }
  func.func @transform_8(%arg0: i32) -> (i32, i32) {
    %c0_i32 = arith.constant 0 : i32
    %c0_i32_0 = arith.constant 0 : i32
    %c0_i32_1 = arith.constant 0 : i32
    return %c0_i32, %c0_i32_0 : i32, i32
  }
  func.func @transform_9(%arg0: i32) -> (i32, i32) {
    %c0_i32 = arith.constant 0 : i32
    %c0_i32_0 = arith.constant 0 : i32
    %c0_i32_1 = arith.constant 0 : i32
    return %c0_i32, %c0_i32_0 : i32, i32
  }
  func.func @transform_10(%arg0: i32) -> (i32, i32) {
    %c0_i32 = arith.constant 0 : i32
    %c0_i32_0 = arith.constant 0 : i32
    %c0_i32_1 = arith.constant 0 : i32
    return %c0_i32, %c0_i32_0 : i32, i32
  }
  func.func @transform_11(%arg0: i32) -> (i32, i32, i32) {
    %c0_i32 = arith.constant 0 : i32
    %c0_i32_0 = arith.constant 0 : i32
    %c0_i32_1 = arith.constant 0 : i32
    return %arg0, %c0_i32, %c0_i32_0 : i32, i32, i32
  }
}

</mosaic_0001>

<llo_original>
// kernel: gru_model_forward.1
$region0: #{gru_model_forward.1}
  #allocation0 [shape = 'u32[]', space=smem, size = 0x4, offset = 0x4, fixed_abs, tag = 'smem constant byte address 0x4 - core index']
  #allocation1 [shape = 'u32[144,128]{1,0:T(1,128)}', space=vmem, size = 0x12000, scoped, tag = 'internal scratch']
  #allocation2 [shape = 'f32[64,384]{1,0:T(8,128)}', space=vmem, size = 0x18000, scoped, tag = 'scratch operand']
  #allocation3 [shape = 'f32[64,128]{1,0:T(8,128)}', space=vmem, size = 0x8000, scoped, tag = 'scratch operand']
  %s0 = inlined_call_operand.vmem [shape: f32[1,64,16], index: 0, kind: input, shape index: {}]
  %s1 = inlined_call_operand.vmem [shape: f32[16,384], index: 1, kind: input, shape index: {}]
  %s2 = inlined_call_operand.vmem [shape: f32[128,384], index: 2, kind: input, shape index: {}]
  %s3 = inlined_call_operand.vmem [shape: f32[1,384], index: 3, kind: input, shape index: {}]
  %s4 = inlined_call_operand.vmem [shape: f32[1,128], index: 4, kind: input, shape index: {}]
  %s5 = inlined_call_operand.vmem [shape: f32[128,384], index: 5, kind: input, shape index: {}]
  %s6 = inlined_call_operand.vmem [shape: f32[128,384], index: 6, kind: input, shape index: {}]
  %s7 = inlined_call_operand.vmem [shape: f32[1,384], index: 7, kind: input, shape index: {}]
  %s8 = inlined_call_operand.vmem [shape: f32[1,128], index: 8, kind: input, shape index: {}]
  %s9 = inlined_call_operand.vmem [shape: f32[128,4], index: 9, kind: input, shape index: {}]
  %s10 = inlined_call_operand.vmem [shape: f32[1,4], index: 10, kind: input, shape index: {}]
  %s11 = inlined_call_operand.vmem [shape: f32[1,8,4], index: 11, kind: output, shape index: {}]
  %s12 = sld [smem:[#allocation0]]
  $region54: #{gru_model_forward.1} parent=0
    _
  %s14 = ssub.s32 1, %s12
  %s15 = scalar_select 0, %s14, %s12
  // Predicated region
  $region2: #{gru_model_forward.1} parent=0 // pred_check
    _
  $region3: #{gru_model_forward.1} parent=0 // pred_check_branch
    %17 = sbr.rel (0) target = $region5
  $region4: #{gru_model_forward.1} parent=0 // pred_region
    _
  $region5: #{gru_model_forward.1} parent=0 // pred_fallthru
    _
  // Predicated region
  $region6: #{gru_model_forward.1} parent=0 // pred_check
    _
  $region7: #{gru_model_forward.1} parent=0 // pred_check_branch
    %19 = sbr.rel (0) target = $region9
  $region8: #{gru_model_forward.1} parent=0 // pred_region
    _
  $region9: #{gru_model_forward.1} parent=0 // pred_fallthru
    _
  // Predicated region
  $region10: #{gru_model_forward.1} parent=0 // pred_check
    _
  $region11: #{gru_model_forward.1} parent=0 // pred_check_branch
    %21 = sbr.rel (0) target = $region13
  $region12: #{gru_model_forward.1} parent=0 // pred_region
    _
  $region13: #{gru_model_forward.1} parent=0 // pred_fallthru
    _
  // Predicated region
  $region14: #{gru_model_forward.1} parent=0 // pred_check
    _
  $region15: #{gru_model_forward.1} parent=0 // pred_check_branch
    %23 = sbr.rel (0) target = $region17
  $region16: #{gru_model_forward.1} parent=0 // pred_region
    _
  $region17: #{gru_model_forward.1} parent=0 // pred_fallthru
    _
  // Predicated region
  $region18: #{gru_model_forward.1} parent=0 // pred_check
    _
  $region19: #{gru_model_forward.1} parent=0 // pred_check_branch
    %25 = sbr.rel (0) target = $region21
  $region20: #{gru_model_forward.1} parent=0 // pred_region
    _
  $region21: #{gru_model_forward.1} parent=0 // pred_fallthru
    _
  // Predicated region
  $region22: #{gru_model_forward.1} parent=0 // pred_check
    _
  $region23: #{gru_model_forward.1} parent=0 // pred_check_branch
    %27 = sbr.rel (0) target = $region25
  $region24: #{gru_model_forward.1} parent=0 // pred_region
    _
  $region25: #{gru_model_forward.1} parent=0 // pred_fallthru
    _
  // Predicated region
  $region26: #{gru_model_forward.1} parent=0 // pred_check
    _
  $region27: #{gru_model_forward.1} parent=0 // pred_check_branch
    %29 = sbr.rel (0) target = $region29
  $region28: #{gru_model_forward.1} parent=0 // pred_region
    _
  $region29: #{gru_model_forward.1} parent=0 // pred_fallthru
    _
  // Predicated region
  $region30: #{gru_model_forward.1} parent=0 // pred_check
    _
  $region31: #{gru_model_forward.1} parent=0 // pred_check_branch
    %31 = sbr.rel (0) target = $region33
  $region32: #{gru_model_forward.1} parent=0 // pred_region
    _
  $region33: #{gru_model_forward.1} parent=0 // pred_fallthru
    _
  // Predicated region
  $region34: #{gru_model_forward.1} parent=0 // pred_check
    _
  $region35: #{gru_model_forward.1} parent=0 // pred_check_branch
    %33 = sbr.rel (0) target = $region37
  $region36: #{gru_model_forward.1} parent=0 // pred_region
    _
  $region37: #{gru_model_forward.1} parent=0 // pred_fallthru
    _
  // Predicated region
  $region38: #{gru_model_forward.1} parent=0 // pred_check
    _
  $region39: #{gru_model_forward.1} parent=0 // pred_check_branch
    %35 = sbr.rel (0) target = $region41
  $region40: #{gru_model_forward.1} parent=0 // pred_region
    _
  $region41: #{gru_model_forward.1} parent=0 // pred_fallthru
    _
  // Predicated region
  $region42: #{gru_model_forward.1} parent=0 // pred_check
    _
  $region43: #{gru_model_forward.1} parent=0 // pred_check_branch
    %37 = sbr.rel (0) target = $region45
  $region44: #{gru_model_forward.1} parent=0 // pred_region
    _
  $region45: #{gru_model_forward.1} parent=0 // pred_fallthru
    _
  %v38 = vld [vmem:[%s0] sm:$0xff]
  %v39 = vld [vmem:[%s0 + $0x8] sm:$0xff]
  %v40 = vld [vmem:[%s0 + $0x10] sm:$0xff]
  %v41 = vld [vmem:[%s0 + $0x18] sm:$0xff]
  %v42 = vld [vmem:[%s0 + $0x20] sm:$0xff]
  %v43 = vld [vmem:[%s0 + $0x28] sm:$0xff]
  %v44 = vld [vmem:[%s0 + $0x30] sm:$0xff]
  %v45 = vld [vmem:[%s0 + $0x38] sm:$0xff]
  %v46 = vld [vmem:[%s1] sm:$0xff]
  %v47 = vld [vmem:[%s1 + $0x8] sm:$0xff]
  %v48 = vld [vmem:[%s1 + $0x10] sm:$0xff]
  %v49 = vld [vmem:[%s1 + $0x18] sm:$0xff]
  %v50 = vld [vmem:[%s1 + $0x20] sm:$0xff]
  %v51 = vld [vmem:[%s1 + $0x28] sm:$0xff]
  %v52 = vld [vmem:[%s3] sm:$0x7]
  %v54 = vlaneseq
  %v55 = vshrl.u32 %v54, 7
  %v56 = vsub.s32 0, %v55
  %v57 = vrot.slane %v52, %v56
  %v58 = vlaneseq
  %v59 = vshrl.u32 %v58, 7
  %v60 = vsub.s32 1, %v59
  %v61 = vrot.slane %v52, %v60
  %v62 = vlaneseq
  %v63 = vshrl.u32 %v62, 7
  %v64 = vsub.s32 2, %v63
  %v65 = vrot.slane %v52, %v64
  %vm69 = vcmask 130048
  %v71 = vsel %vm69, %v38, 0
  %v74 = vsel %vm69, %v39, 0
  %v77 = vsel %vm69, %v40, 0
  %v80 = vsel %vm69, %v41, 0
  %v83 = vsel %vm69, %v42, 0
  %v86 = vsel %vm69, %v43, 0
  %v89 = vsel %vm69, %v44, 0
  %v92 = vsel %vm69, %v45, 0
  %94 = vmatprep.subr.mxu0 %v47
  %95 = vmatpush1.msra.mxu0 %v46
  %96 = vmatprep.subr.mxu0 %v50
  %97 = vmatpush1.msra.mxu0 %v49
  %98 = vmatprep.subr.mxu0 0.0
  %99 = vmatpush1.msra.mxu0 0.0
  %100 = vmatprep.subr.mxu0 0.0
  %101 = vmatpush1.msra.mxu0 0.0
  %102 = vmatprep.subr.mxu0 0.0
  %103 = vmatpush1.msra.mxu0 0.0
  %104 = vmatprep.subr.mxu0 0.0
  %105 = vmatpush1.msra.mxu0 0.0
  %106 = vmatprep.subr.mxu0 0.0
  %107 = vmatpush1.msra.mxu0 0.0
  %108 = vmatprep.subr.mxu0 0.0
  %109 = vmatpush1.msra.mxu0 0.0
  %110 = vmatprep.subr.mxu0 0.0
  %111 = vmatpush1.msra.mxu0 0.0
  %112 = vmatprep.subr.mxu0 0.0
  %113 = vmatpush1.msra.mxu0 0.0
  %114 = vmatprep.subr.mxu0 0.0
  %115 = vmatpush1.msra.mxu0 0.0
  %116 = vmatprep.subr.mxu0 0.0
  %117 = vmatpush1.msra.mxu0 0.0
  %118 = vmatprep.subr.mxu0 0.0
  %119 = vmatpush1.msra.mxu0 0.0
  %120 = vmatprep.subr.mxu0 0.0
  %121 = vmatpush1.msra.mxu0 0.0
  %122 = vmatprep.subr.mxu0 0.0
  %123 = vmatpush1.msra.mxu0 0.0
  %124 = vmatprep.subr.mxu0 0.0
  %125 = vmatpush1.msra.mxu0 0.0
  %126 = vmatprep.subr.mxu0 0.0
  %127 = vmatpush1.msra.mxu0 0.0
  %128 = vmatprep.subr.mxu0 0.0
  %129 = vmatpush1.msra.mxu0 0.0
  %130 = vmatprep.subr.mxu0 0.0
  %131 = vmatpush1.msra.mxu0 0.0
  %132 = vmatprep.subr.mxu0 0.0
  %133 = vmatpush1.msra.mxu0 0.0
  %134 = vmatprep.subr.mxu0 0.0
  %135 = vmatpush1.msra.mxu0 0.0
  %136 = vmatprep.subr.mxu0 0.0
  %137 = vmatpush1.msra.mxu0 0.0
  %138 = vmatprep.subr.mxu0 0.0
  %139 = vmatpush1.msra.mxu0 0.0
  %140 = vmatprep.subr.mxu0 0.0
  %141 = vmatpush1.msra.mxu0 0.0
  %142 = vmatprep.subr.mxu0 0.0
  %143 = vmatpush1.msra.mxu0 0.0
  %144 = vmatprep.subr.mxu0 0.0
  %145 = vmatpush1.msra.mxu0 0.0
  %146 = vmatprep.subr.mxu0 0.0
  %147 = vmatpush1.msra.mxu0 0.0
  %148 = vmatprep.subr.mxu0 0.0
  %149 = vmatpush1.msra.mxu0 0.0
  %150 = vmatprep.subr.mxu0 0.0
  %151 = vmatpush1.msra.mxu0 0.0
  %152 = vmatprep.subr.mxu0 0.0
  %153 = vmatpush1.msra.mxu0 0.0
  %154 = vmatprep.subr.mxu0 0.0
  %155 = vmatpush1.msra.mxu0 0.0
  %156 = vmatprep.subr.mxu0 0.0
  %157 = vmatpush1.msra.mxu0 0.0
  %158 = vmatprep.mubr.f32.mxu0 0.0
  %159 = vmatmul.mubr.f32.gmra.mrb[0].mxu0 %v71
  %v160 = vpop.f32.mrb[0].mxu0
  %v161 = vadd.f32 %v57, %v160
  %v162 = vpop.f32.mrb[0].mxu0
  %v163 = vadd.f32 %v61, %v162
  %164 = vmatprep.mubr.f32.mxu0 0.0
  %165 = vmatmul.mubr.f32.gmra.mrb[0].mxu0 %v74
  %v166 = vpop.f32.mrb[0].mxu0
  %v167 = vadd.f32 %v57, %v166
  %v168 = vpop.f32.mrb[0].mxu0
  %v169 = vadd.f32 %v61, %v168
  %170 = vmatprep.mubr.f32.mxu0 0.0
  %171 = vmatmul.mubr.f32.gmra.mrb[0].mxu0 %v77
  %v172 = vpop.f32.mrb[0].mxu0
  %v173 = vadd.f32 %v57, %v172
  %v174 = vpop.f32.mrb[0].mxu0
  %v175 = vadd.f32 %v61, %v174
  %176 = vmatprep.mubr.f32.mxu0 0.0
  %177 = vmatmul.mubr.f32.gmra.mrb[0].mxu0 %v80
  %v178 = vpop.f32.mrb[0].mxu0
  %v179 = vadd.f32 %v57, %v178
  %v180 = vpop.f32.mrb[0].mxu0
  %v181 = vadd.f32 %v61, %v180
  %182 = vmatprep.mubr.f32.mxu0 0.0
  %183 = vmatmul.mubr.f32.gmra.mrb[0].mxu0 %v83
  %v184 = vpop.f32.mrb[0].mxu0
  %v185 = vadd.f32 %v57, %v184
  %v186 = vpop.f32.mrb[0].mxu0
  %v187 = vadd.f32 %v61, %v186
  %188 = vmatprep.mubr.f32.mxu0 0.0
  %189 = vmatmul.mubr.f32.gmra.mrb[0].mxu0 %v86
  %v190 = vpop.f32.mrb[0].mxu0
  %v191 = vadd.f32 %v57, %v190
  %v192 = vpop.f32.mrb[0].mxu0
  %v193 = vadd.f32 %v61, %v192
  %194 = vmatprep.mubr.f32.mxu0 0.0
  %195 = vmatmul.mubr.f32.gmra.mrb[0].mxu0 %v89
  %v196 = vpop.f32.mrb[0].mxu0
  %v197 = vadd.f32 %v57, %v196
  %v198 = vpop.f32.mrb[0].mxu0
  %v199 = vadd.f32 %v61, %v198
  %200 = vmatprep.mubr.f32.mxu0 0.0
  %201 = vmatmul.mubr.f32.gmra.mrb[0].mxu0 %v92
  %v202 = vpop.f32.mrb[0].mxu0
  %v203 = vadd.f32 %v57, %v202
  %v204 = vpop.f32.mrb[0].mxu0
  %v205 = vadd.f32 %v61, %v204
  %206 = vdwg.mxu0
  %207 = vmatprep.subr.mxu0 0.0
  %208 = vmatpush1.msra.mxu0 %v48
  %209 = vmatprep.subr.mxu0 0.0
  %210 = vmatpush1.msra.mxu0 %v51
  %211 = vmatprep.subr.mxu0 0.0
  %212 = vmatpush1.msra.mxu0 0.0
  %213 = vmatprep.subr.mxu0 0.0
  %214 = vmatpush1.msra.mxu0 0.0
  %215 = vmatprep.subr.mxu0 0.0
  %216 = vmatpush1.msra.mxu0 0.0
  %217 = vmatprep.subr.mxu0 0.0
  %218 = vmatpush1.msra.mxu0 0.0
  %219 = vmatprep.subr.mxu0 0.0
  %220 = vmatpush1.msra.mxu0 0.0
  %221 = vmatprep.subr.mxu0 0.0
  %222 = vmatpush1.msra.mxu0 0.0
  %223 = vmatprep.subr.mxu0 0.0
  %224 = vmatpush1.msra.mxu0 0.0
  %225 = vmatprep.subr.mxu0 0.0
  %226 = vmatpush1.msra.mxu0 0.0
  %227 = vmatprep.subr.mxu0 0.0
  %228 = vmatpush1.msra.mxu0 0.0
  %229 = vmatprep.subr.mxu0 0.0
  %230 = vmatpush1.msra.mxu0 0.0
  %231 = vmatprep.subr.mxu0 0.0
  %232 = vmatpush1.msra.mxu0 0.0
  %233 = vmatprep.subr.mxu0 0.0
  %234 = vmatpush1.msra.mxu0 0.0
  %235 = vmatprep.subr.mxu0 0.0
  %236 = vmatpush1.msra.mxu0 0.0
  %237 = vmatprep.subr.mxu0 0.0
  %238 = vmatpush1.msra.mxu0 0.0
  %239 = vmatprep.subr.mxu0 0.0
  %240 = vmatpush1.msra.mxu0 0.0
  %241 = vmatprep.subr.mxu0 0.0
  %242 = vmatpush1.msra.mxu0 0.0
  %243 = vmatprep.subr.mxu0 0.0
  %244 = vmatpush1.msra.mxu0 0.0
  %245 = vmatprep.subr.mxu0 0.0
  %246 = vmatpush1.msra.mxu0 0.0
  %247 = vmatprep.subr.mxu0 0.0
  %248 = vmatpush1.msra.mxu0 0.0
  %249 = vmatprep.subr.mxu0 0.0
  %250 = vmatpush1.msra.mxu0 0.0
  %251 = vmatprep.subr.mxu0 0.0
  %252 = vmatpush1.msra.mxu0 0.0
  %253 = vmatprep.subr.mxu0 0.0
  %254 = vmatpush1.msra.mxu0 0.0
  %255 = vmatprep.subr.mxu0 0.0
  %256 = vmatpush1.msra.mxu0 0.0
  %257 = vmatprep.subr.mxu0 0.0
  %258 = vmatpush1.msra.mxu0 0.0
  %259 = vmatprep.subr.mxu0 0.0
  %260 = vmatpush1.msra.mxu0 0.0
  %261 = vmatprep.subr.mxu0 0.0
  %262 = vmatpush1.msra.mxu0 0.0
  %263 = vmatprep.subr.mxu0 0.0
  %264 = vmatpush1.msra.mxu0 0.0
  %265 = vmatprep.subr.mxu0 0.0
  %266 = vmatpush1.msra.mxu0 0.0
  %267 = vmatprep.subr.mxu0 0.0
  %268 = vmatpush1.msra.mxu0 0.0
  %269 = vmatprep.subr.mxu0 0.0
  %270 = vmatpush1.msra.mxu0 0.0
  %271 = vmatprep.mubr.f32.mxu0 0.0
  %272 = vmatmul.mubr.f32.gmra.mrb[0].mxu0 %v71
  %v273 = vpop.f32.mrb[0].mxu0
  %v274 = vadd.f32 %v65, %v273
  %v275 = vpop.f32.mrb[0].mxu0
  %276 = vmatprep.mubr.f32.mxu0 0.0
  %277 = vmatmul.mubr.f32.gmra.mrb[0].mxu0 %v74
  %v278 = vpop.f32.mrb[0].mxu0
  %v279 = vadd.f32 %v65, %v278
  %v280 = vpop.f32.mrb[0].mxu0
  %281 = vmatprep.mubr.f32.mxu0 0.0
  %282 = vmatmul.mubr.f32.gmra.mrb[0].mxu0 %v77
  %v283 = vpop.f32.mrb[0].mxu0
  %v284 = vadd.f32 %v65, %v283
  %v285 = vpop.f32.mrb[0].mxu0
  %286 = vmatprep.mubr.f32.mxu0 0.0
  %287 = vmatmul.mubr.f32.gmra.mrb[0].mxu0 %v80
  %v288 = vpop.f32.mrb[0].mxu0
  %v289 = vadd.f32 %v65, %v288
  %v290 = vpop.f32.mrb[0].mxu0
  %291 = vmatprep.mubr.f32.mxu0 0.0
  %292 = vmatmul.mubr.f32.gmra.mrb[0].mxu0 %v83
  %v293 = vpop.f32.mrb[0].mxu0
  %v294 = vadd.f32 %v65, %v293
  %v295 = vpop.f32.mrb[0].mxu0
  %296 = vmatprep.mubr.f32.mxu0 0.0
  %297 = vmatmul.mubr.f32.gmra.mrb[0].mxu0 %v86
  %v298 = vpop.f32.mrb[0].mxu0
  %v299 = vadd.f32 %v65, %v298
  %v300 = vpop.f32.mrb[0].mxu0
  %301 = vmatprep.mubr.f32.mxu0 0.0
  %302 = vmatmul.mubr.f32.gmra.mrb[0].mxu0 %v89
  %v303 = vpop.f32.mrb[0].mxu0
  %v304 = vadd.f32 %v65, %v303
  %v305 = vpop.f32.mrb[0].mxu0
  %306 = vmatprep.mubr.f32.mxu0 0.0
  %307 = vmatmul.mubr.f32.gmra.mrb[0].mxu0 %v92
  %v308 = vpop.f32.mrb[0].mxu0
  %v309 = vadd.f32 %v65, %v308
  %v310 = vpop.f32.mrb[0].mxu0
  %311 = vdwg.mxu0
  %312 = vst [vmem:[#allocation2] sm:$0xff] %v161
  %313 = vst [vmem:[#allocation2 + $0x8] sm:$0xff] %v163
  %314 = vst [vmem:[#allocation2 + $0x10] sm:$0xff] %v274
  %315 = vst [vmem:[#allocation2 + $0x18] sm:$0xff] %v167
  %316 = vst [vmem:[#allocation2 + $0x20] sm:$0xff] %v169
  %317 = vst [vmem:[#allocation2 + $0x28] sm:$0xff] %v279
  %318 = vst [vmem:[#allocation2 + $0x30] sm:$0xff] %v173
  %319 = vst [vmem:[#allocation2 + $0x38] sm:$0xff] %v175
  %320 = vst [vmem:[#allocation2 + $0x40] sm:$0xff] %v284
  %321 = vst [vmem:[#allocation2 + $0x48] sm:$0xff] %v179
  %322 = vst [vmem:[#allocation2 + $0x50] sm:$0xff] %v181
  %323 = vst [vmem:[#allocation2 + $0x58] sm:$0xff] %v289
  %324 = vst [vmem:[#allocation2 + $0x60] sm:$0xff] %v185
  %325 = vst [vmem:[#allocation2 + $0x68] sm:$0xff] %v187
  %326 = vst [vmem:[#allocation2 + $0x70] sm:$0xff] %v294
  %327 = vst [vmem:[#allocation2 + $0x78] sm:$0xff] %v191
  %328 = vst [vmem:[#allocation2 + $0x80] sm:$0xff] %v193
  %329 = vst [vmem:[#allocation2 + $0x88] sm:$0xff] %v299
  %330 = vst [vmem:[#allocation2 + $0x90] sm:$0xff] %v197
  %331 = vst [vmem:[#allocation2 + $0x98] sm:$0xff] %v199
  %332 = vst [vmem:[#allocation2 + $0xa0] sm:$0xff] %v304
  %333 = vst [vmem:[#allocation2 + $0xa8] sm:$0xff] %v203
  %334 = vst [vmem:[#allocation2 + $0xb0] sm:$0xff] %v205
  %335 = vst [vmem:[#allocation2 + $0xb8] sm:$0xff] %v309
  %v336 = vld [vmem:[%s4] sm:$0x1]
  %v338 = vlaneseq
  %v339 = vshrl.u32 %v338, 7
  %v340 = vsub.s32 0, %v339
  %v341 = vrot.slane %v336, %v340
  %s343 = smul.u32 0, 3
  %s344 = smul.addr %s343, 8
  %s345 = scalar_lea.vmem [#allocation2], %s344
  %v346 = vld [vmem:[%s345] sm:$0xff]
  %v347 = vld [vmem:[%s345 + $0x8] sm:$0xff]
  %v348 = vld [vmem:[%s345 + $0x10] sm:$0xff]
  %v349 = vld [vmem:[%s2] sm:$0xff]
  %v350 = vld [vmem:[%s2 + $0x8] sm:$0xff]
  %v351 = vld [vmem:[%s2 + $0x10] sm:$0xff]
  %v352 = vld [vmem:[%s2 + $0x18] sm:$0xff]
  %v353 = vld [vmem:[%s2 + $0x20] sm:$0xff]
  %v354 = vld [vmem:[%s2 + $0x28] sm:$0xff]
  %v355 = vld [vmem:[%s2 + $0x30] sm:$0xff]
  %v356 = vld [vmem:[%s2 + $0x38] sm:$0xff]
  %v357 = vld [vmem:[%s2 + $0x40] sm:$0xff]
  %v358 = vld [vmem:[%s2 + $0x48] sm:$0xff]
  %v359 = vld [vmem:[%s2 + $0x50] sm:$0xff]
  %v360 = vld [vmem:[%s2 + $0x58] sm:$0xff]
  %v361 = vld [vmem:[%s2 + $0x60] sm:$0xff]
  %v362 = vld [vmem:[%s2 + $0x68] sm:$0xff]
  %v363 = vld [vmem:[%s2 + $0x70] sm:$0xff]
  %v364 = vld [vmem:[%s2 + $0x78] sm:$0xff]
  %v365 = vld [vmem:[%s2 + $0x80] sm:$0xff]
  %v366 = vld [vmem:[%s2 + $0x88] sm:$0xff]
  %v367 = vld [vmem:[%s2 + $0x90] sm:$0xff]
  %v368 = vld [vmem:[%s2 + $0x98] sm:$0xff]
  %v369 = vld [vmem:[%s2 + $0xa0] sm:$0xff]
  %v370 = vld [vmem:[%s2 + $0xa8] sm:$0xff]
  %v371 = vld [vmem:[%s2 + $0xb0] sm:$0xff]
  %v372 = vld [vmem:[%s2 + $0xb8] sm:$0xff]
  %v373 = vld [vmem:[%s2 + $0xc0] sm:$0xff]
  %v374 = vld [vmem:[%s2 + $0xc8] sm:$0xff]
  %v375 = vld [vmem:[%s2 + $0xd0] sm:$0xff]
  %v376 = vld [vmem:[%s2 + $0xd8] sm:$0xff]
  %v377 = vld [vmem:[%s2 + $0xe0] sm:$0xff]
  %v378 = vld [vmem:[%s2 + $0xe8] sm:$0xff]
  %v379 = vld [vmem:[%s2 + $0xf0] sm:$0xff]
  %v380 = vld [vmem:[%s2 + $0xf8] sm:$0xff]
  %v381 = vld [vmem:[%s2 + $0x100] sm:$0xff]
  %v382 = vld [vmem:[%s2 + $0x108] sm:$0xff]
  %v383 = vld [vmem:[%s2 + $0x110] sm:$0xff]
  %v384 = vld [vmem:[%s2 + $0x118] sm:$0xff]
  %v385 = vld [vmem:[%s2 + $0x120] sm:$0xff]
  %v386 = vld [vmem:[%s2 + $0x128] sm:$0xff]
  %v387 = vld [vmem:[%s2 + $0x130] sm:$0xff]
  %v388 = vld [vmem:[%s2 + $0x138] sm:$0xff]
  %v389 = vld [vmem:[%s2 + $0x140] sm:$0xff]
  %v390 = vld [vmem:[%s2 + $0x148] sm:$0xff]
  %v391 = vld [vmem:[%s2 + $0x150] sm:$0xff]
  %v392 = vld [vmem:[%s2 + $0x158] sm:$0xff]
  %v393 = vld [vmem:[%s2 + $0x160] sm:$0xff]
  %v394 = vld [vmem:[%s2 + $0x168] sm:$0xff]
  %v395 = vld [vmem:[%s2 + $0x170] sm:$0xff]
  %v396 = vld [vmem:[%s2 + $0x178] sm:$0xff]
  %397 = vmatprep.subr.mxu0 %v350
  %398 = vmatpush1.msra.mxu0 %v349
  %399 = vmatprep.subr.mxu0 %v353
  %400 = vmatpush1.msra.mxu0 %v352
  %401 = vmatprep.subr.mxu0 %v356
  %402 = vmatpush1.msra.mxu0 %v355
  %403 = vmatprep.subr.mxu0 %v359
  %404 = vmatpush1.msra.mxu0 %v358
  %405 = vmatprep.subr.mxu0 %v362
  %406 = vmatpush1.msra.mxu0 %v361
  %407 = vmatprep.subr.mxu0 %v365
  %408 = vmatpush1.msra.mxu0 %v364
  %409 = vmatprep.subr.mxu0 %v368
  %410 = vmatpush1.msra.mxu0 %v367
  %411 = vmatprep.subr.mxu0 %v371
  %412 = vmatpush1.msra.mxu0 %v370
  %413 = vmatprep.subr.mxu0 %v374
  %414 = vmatpush1.msra.mxu0 %v373
  %415 = vmatprep.subr.mxu0 %v377
  %416 = vmatpush1.msra.mxu0 %v376
  %417 = vmatprep.subr.mxu0 %v380
  %418 = vmatpush1.msra.mxu0 %v379
  %419 = vmatprep.subr.mxu0 %v383
  %420 = vmatpush1.msra.mxu0 %v382
  %421 = vmatprep.subr.mxu0 %v386
  %422 = vmatpush1.msra.mxu0 %v385
  %423 = vmatprep.subr.mxu0 %v389
  %424 = vmatpush1.msra.mxu0 %v388
  %425 = vmatprep.subr.mxu0 %v392
  %426 = vmatpush1.msra.mxu0 %v391
  %427 = vmatprep.subr.mxu0 %v395
  %428 = vmatpush1.msra.mxu0 %v394
  %429 = vmatprep.subr.mxu0 0.0
  %430 = vmatpush1.msra.mxu0 0.0
  %431 = vmatprep.subr.mxu0 0.0
  %432 = vmatpush1.msra.mxu0 0.0
  %433 = vmatprep.subr.mxu0 0.0
  %434 = vmatpush1.msra.mxu0 0.0
  %435 = vmatprep.subr.mxu0 0.0
  %436 = vmatpush1.msra.mxu0 0.0
  %437 = vmatprep.subr.mxu0 0.0
  %438 = vmatpush1.msra.mxu0 0.0
  %439 = vmatprep.subr.mxu0 0.0
  %440 = vmatpush1.msra.mxu0 0.0
  %441 = vmatprep.subr.mxu0 0.0
  %442 = vmatpush1.msra.mxu0 0.0
  %443 = vmatprep.subr.mxu0 0.0
  %444 = vmatpush1.msra.mxu0 0.0
  %445 = vmatprep.subr.mxu0 0.0
  %446 = vmatpush1.msra.mxu0 0.0
  %447 = vmatprep.subr.mxu0 0.0
  %448 = vmatpush1.msra.mxu0 0.0
  %449 = vmatprep.subr.mxu0 0.0
  %450 = vmatpush1.msra.mxu0 0.0
  %451 = vmatprep.subr.mxu0 0.0
  %452 = vmatpush1.msra.mxu0 0.0
  %453 = vmatprep.subr.mxu0 0.0
  %454 = vmatpush1.msra.mxu0 0.0
  %455 = vmatprep.subr.mxu0 0.0
  %456 = vmatpush1.msra.mxu0 0.0
  %457 = vmatprep.subr.mxu0 0.0
  %458 = vmatpush1.msra.mxu0 0.0
  %459 = vmatprep.subr.mxu0 0.0
  %460 = vmatpush1.msra.mxu0 0.0
  %461 = vmatprep.mubr.f32.mxu0 0.0
  %462 = vmatmul.mubr.f32.gmra.mrb[0].mxu0 0.0
  %v463 = vpop.f32.mrb[0].mxu0
  %v464 = vadd.f32 0.0, %v463
  %v465 = vpop.f32.mrb[0].mxu0
  %v466 = vadd.f32 0.0, %v465
  %467 = vdwg.mxu0
  %468 = vmatprep.subr.mxu0 0.0
  %469 = vmatpush1.msra.mxu0 %v351
  %470 = vmatprep.subr.mxu0 0.0
  %471 = vmatpush1.msra.mxu0 %v354
  %472 = vmatprep.subr.mxu0 0.0
  %473 = vmatpush1.msra.mxu0 %v357
  %474 = vmatprep.subr.mxu0 0.0
  %475 = vmatpush1.msra.mxu0 %v360
  %476 = vmatprep.subr.mxu0 0.0
  %477 = vmatpush1.msra.mxu0 %v363
  %478 = vmatprep.subr.mxu0 0.0
  %479 = vmatpush1.msra.mxu0 %v366
  %480 = vmatprep.subr.mxu0 0.0
  %481 = vmatpush1.msra.mxu0 %v369
  %482 = vmatprep.subr.mxu0 0.0
  %483 = vmatpush1.msra.mxu0 %v372
  %484 = vmatprep.subr.mxu0 0.0
  %485 = vmatpush1.msra.mxu0 %v375
  %486 = vmatprep.subr.mxu0 0.0
  %487 = vmatpush1.msra.mxu0 %v378
  %488 = vmatprep.subr.mxu0 0.0
  %489 = vmatpush1.msra.mxu0 %v381
  %490 = vmatprep.subr.mxu0 0.0
  %491 = vmatpush1.msra.mxu0 %v384
  %492 = vmatprep.subr.mxu0 0.0
  %493 = vmatpush1.msra.mxu0 %v387
  %494 = vmatprep.subr.mxu0 0.0
  %495 = vmatpush1.msra.mxu0 %v390
  %496 = vmatprep.subr.mxu0 0.0
  %497 = vmatpush1.msra.mxu0 %v393
  %498 = vmatprep.subr.mxu0 0.0
  %499 = vmatpush1.msra.mxu0 %v396
  %500 = vmatprep.subr.mxu0 0.0
  %501 = vmatpush1.msra.mxu0 0.0
  %502 = vmatprep.subr.mxu0 0.0
  %503 = vmatpush1.msra.mxu0 0.0
  %504 = vmatprep.subr.mxu0 0.0
  %505 = vmatpush1.msra.mxu0 0.0
  %506 = vmatprep.subr.mxu0 0.0
  %507 = vmatpush1.msra.mxu0 0.0
  %508 = vmatprep.subr.mxu0 0.0
  %509 = vmatpush1.msra.mxu0 0.0
  %510 = vmatprep.subr.mxu0 0.0
  %511 = vmatpush1.msra.mxu0 0.0
  %512 = vmatprep.subr.mxu0 0.0
  %513 = vmatpush1.msra.mxu0 0.0
  %514 = vmatprep.subr.mxu0 0.0
  %515 = vmatpush1.msra.mxu0 0.0
  %516 = vmatprep.subr.mxu0 0.0
  %517 = vmatpush1.msra.mxu0 0.0
  %518 = vmatprep.subr.mxu0 0.0
  %519 = vmatpush1.msra.mxu0 0.0
  %520 = vmatprep.subr.mxu0 0.0
  %521 = vmatpush1.msra.mxu0 0.0
  %522 = vmatprep.subr.mxu0 0.0
  %523 = vmatpush1.msra.mxu0 0.0
  %524 = vmatprep.subr.mxu0 0.0
  %525 = vmatpush1.msra.mxu0 0.0
  %526 = vmatprep.subr.mxu0 0.0
  %527 = vmatpush1.msra.mxu0 0.0
  %528 = vmatprep.subr.mxu0 0.0
  %529 = vmatpush1.msra.mxu0 0.0
  %530 = vmatprep.subr.mxu0 0.0
  %531 = vmatpush1.msra.mxu0 0.0
  %532 = vmatprep.mubr.f32.mxu0 0.0
  %533 = vmatmul.mubr.f32.gmra.mrb[0].mxu0 0.0
  %v534 = vpop.f32.mrb[0].mxu0
  %v535 = vadd.f32 0.0, %v534
  %v536 = vpop.f32.mrb[0].mxu0
  %537 = vdwg.mxu0
  %v538 = vadd.f32 %v346, %v464
  %v539 = vxor.u32 %v538, 2147483648
  %v540 = vmul.f32 %v539, 1.442695
  %v541 = vpow.pop %v540
  %v542 = vadd.f32 %v541, 1.0
  %v543 = vrcp.pop %v542
  %v544 = vmul.f32 1.0, %v543
  %v545 = vadd.f32 %v347, %v466
  %v546 = vxor.u32 %v545, 2147483648
  %v547 = vmul.f32 %v546, 1.442695
  %v548 = vpow.pop %v547
  %v549 = vadd.f32 %v548, 1.0
  %v550 = vrcp.pop %v549
  %v551 = vmul.f32 1.0, %v550
  %v552 = vadd.f32 %v535, %v341
  %v553 = vmul.f32 %v544, %v552
  %v554 = vadd.f32 %v348, %v553
  %v555 = vtanh.pop %v554
  %v556 = vsub.f32 0.0, %v555
  %v557 = vmul.f32 %v551, %v556
  %v558 = vadd.f32 %v555, %v557
  %559 = vst [vmem:[#allocation3] sm:$0xff] %v558
  %s560 = smul.u32 1, 3
  %s561 = smul.addr %s560, 8
  %s562 = scalar_lea.vmem [#allocation2], %s561
  %v563 = vld [vmem:[%s562] sm:$0xff]
  %v564 = vld [vmem:[%s562 + $0x8] sm:$0xff]
  %v565 = vld [vmem:[%s562 + $0x10] sm:$0xff]
  %v566 = vld [vmem:[%s2] sm:$0xff]
  %v567 = vld [vmem:[%s2 + $0x8] sm:$0xff]
  %v568 = vld [vmem:[%s2 + $0x10] sm:$0xff]
  %v569 = vld [vmem:[%s2 + $0x18] sm:$0xff]
  %v570 = vld [vmem:[%s2 + $0x20] sm:$0xff]
  %v571 = vld [vmem:[%s2 + $0x28] sm:$0xff]
  %v572 = vld [vmem:[%s2 + $0x30] sm:$0xff]
  %v573 = vld [vmem:[%s2 + $0x38] sm:$0xff]
  %v574 = vld [vmem:[%s2 + $0x40] sm:$0xff]
  %v575 = vld [vmem:[%s2 + $0x48] sm:$0xff]
  %v576 = vld [vmem:[%s2 + $0x50] sm:$0xff]
  %v577 = vld [vmem:[%s2 + $0x58] sm:$0xff]
  %v578 = vld [vmem:[%s2 + $0x60] sm:$0xff]
  %v579 = vld [vmem:[%s2 + $0x68] sm:$0xff]
  %v580 = vld [vmem:[%s2 + $0x70] sm:$0xff]
  %v581 = vld [vmem:[%s2 + $0x78] sm:$0xff]
  %v582 = vld [vmem:[%s2 + $0x80] sm:$0xff]
  %v583 = vld [vmem:[%s2 + $0x88] sm:$0xff]
  %v584 = vld [vmem:[%s2 + $0x90] sm:$0xff]
  %v585 = vld [vmem:[%s2 + $0x98] sm:$0xff]
  %v586 = vld [vmem:[%s2 + $0xa0] sm:$0xff]
  %v587 = vld [vmem:[%s2 + $0xa8] sm:$0xff]
  %v588 = vld [vmem:[%s2 + $0xb0] sm:$0xff]
  %v589 = vld [vmem:[%s2 + $0xb8] sm:$0xff]
  %v590 = vld [vmem:[%s2 + $0xc0] sm:$0xff]
  %v591 = vld [vmem:[%s2 + $0xc8] sm:$0xff]
  %v592 = vld [vmem:[%s2 + $0xd0] sm:$0xff]
  %v593 = vld [vmem:[%s2 + $0xd8] sm:$0xff]
  %v594 = vld [vmem:[%s2 + $0xe0] sm:$0xff]
  %v595 = vld [vmem:[%s2 + $0xe8] sm:$0xff]
  %v596 = vld [vmem:[%s2 + $0xf0] sm:$0xff]
  %v597 = vld [vmem:[%s2 + $0xf8] sm:$0xff]
  %v598 = vld [vmem:[%s2 + $0x100] sm:$0xff]
  %v599 = vld [vmem:[%s2 + $0x108] sm:$0xff]
  %v600 = vld [vmem:[%s2 + $0x110] sm:$0xff]
  %v601 = vld [vmem:[%s2 + $0x118] sm:$0xff]
  %v602 = vld [vmem:[%s2 + $0x120] sm:$0xff]
  %v603 = vld [vmem:[%s2 + $0x128] sm:$0xff]
  %v604 = vld [vmem:[%s2 + $0x130] sm:$0xff]
  %v605 = vld [vmem:[%s2 + $0x138] sm:$0xff]
  %v606 = vld [vmem:[%s2 + $0x140] sm:$0xff]
  %v607 = vld [vmem:[%s2 + $0x148] sm:$0xff]
  %v608 = vld [vmem:[%s2 + $0x150] sm:$0xff]
  %v609 = vld [vmem:[%s2 + $0x158] sm:$0xff]
  %v610 = vld [vmem:[%s2 + $0x160] sm:$0xff]
  %v611 = vld [vmem:[%s2 + $0x168] sm:$0xff]
  %v612 = vld [vmem:[%s2 + $0x170] sm:$0xff]
  %v613 = vld [vmem:[%s2 + $0x178] sm:$0xff]
  %614 = vmatprep.subr.mxu0 %v567
  %615 = vmatpush1.msra.mxu0 %v566
  %616 = vmatprep.subr.mxu0 %v570
  %617 = vmatpush1.msra.mxu0 %v569
  %618 = vmatprep.subr.mxu0 %v573
  %619 = vmatpush1.msra.mxu0 %v572
  %620 = vmatprep.subr.mxu0 %v576
  %621 = vmatpush1.msra.mxu0 %v575
  %622 = vmatprep.subr.mxu0 %v579
  %623 = vmatpush1.msra.mxu0 %v578
  %624 = vmatprep.subr.mxu0 %v582
  %625 = vmatpush1.msra.mxu0 %v581
  %626 = vmatprep.subr.mxu0 %v585
  %627 = vmatpush1.msra.mxu0 %v584
  %628 = vmatprep.subr.mxu0 %v588
  %629 = vmatpush1.msra.mxu0 %v587
  %630 = vmatprep.subr.mxu0 %v591
  %631 = vmatpush1.msra.mxu0 %v590
  %632 = vmatprep.subr.mxu0 %v594
  %633 = vmatpush1.msra.mxu0 %v593
  %634 = vmatprep.subr.mxu0 %v597
  %635 = vmatpush1.msra.mxu0 %v596
  %636 = vmatprep.subr.mxu0 %v600
  %637 = vmatpush1.msra.mxu0 %v599
  %638 = vmatprep.subr.mxu0 %v603
  %639 = vmatpush1.msra.mxu0 %v602
  %640 = vmatprep.subr.mxu0 %v606
  %641 = vmatpush1.msra.mxu0 %v605
  %642 = vmatprep.subr.mxu0 %v609
  %643 = vmatpush1.msra.mxu0 %v608
  %644 = vmatprep.subr.mxu0 %v612
  %645 = vmatpush1.msra.mxu0 %v611
  %646 = vmatprep.subr.mxu0 0.0
  %647 = vmatpush1.msra.mxu0 0.0
  %648 = vmatprep.subr.mxu0 0.0
  %649 = vmatpush1.msra.mxu0 0.0
  %650 = vmatprep.subr.mxu0 0.0
  %651 = vmatpush1.msra.mxu0 0.0
  %652 = vmatprep.subr.mxu0 0.0
  %653 = vmatpush1.msra.mxu0 0.0
  %654 = vmatprep.subr.mxu0 0.0
  %655 = vmatpush1.msra.mxu0 0.0
  %656 = vmatprep.subr.mxu0 0.0
  %657 = vmatpush1.msra.mxu0 0.0
  %658 = vmatprep.subr.mxu0 0.0
  %659 = vmatpush1.msra.mxu0 0.0
  %660 = vmatprep.subr.mxu0 0.0
  %661 = vmatpush1.msra.mxu0 0.0
  %662 = vmatprep.subr.mxu0 0.0
  %663 = vmatpush1.msra.mxu0 0.0
  %664 = vmatprep.subr.mxu0 0.0
  %665 = vmatpush1.msra.mxu0 0.0
  %666 = vmatprep.subr.mxu0 0.0
  %667 = vmatpush1.msra.mxu0 0.0
  %668 = vmatprep.subr.mxu0 0.0
  %669 = vmatpush1.msra.mxu0 0.0
  %670 = vmatprep.subr.mxu0 0.0
  %671 = vmatpush1.msra.mxu0 0.0
  %672 = vmatprep.subr.mxu0 0.0
  %673 = vmatpush1.msra.mxu0 0.0
  %674 = vmatprep.subr.mxu0 0.0
  %675 = vmatpush1.msra.mxu0 0.0
  %676 = vmatprep.subr.mxu0 0.0
  %677 = vmatpush1.msra.mxu0 0.0
  %678 = vmatprep.mubr.f32.mxu0 0.0
  %679 = vmatmul.mubr.f32.gmra.mrb[0].mxu0 %v558
  %v680 = vpop.f32.mrb[0].mxu0
  %v681 = vadd.f32 0.0, %v680
  %v682 = vpop.f32.mrb[0].mxu0
  %v683 = vadd.f32 0.0, %v682
  %684 = vdwg.mxu0
  %685 = vmatprep.subr.mxu0 0.0
  %686 = vmatpush1.msra.mxu0 %v568
  %687 = vmatprep.subr.mxu0 0.0
  %688 = vmatpush1.msra.mxu0 %v571
  %689 = vmatprep.subr.mxu0 0.0
  %690 = vmatpush1.msra.mxu0 %v574
  %691 = vmatprep.subr.mxu0 0.0
  %692 = vmatpush1.msra.mxu0 %v577
  %693 = vmatprep.subr.mxu0 0.0
  %694 = vmatpush1.msra.mxu0 %v580
  %695 = vmatprep.subr.mxu0 0.0
  %696 = vmatpush1.msra.mxu0 %v583
  %697 = vmatprep.subr.mxu0 0.0
  %698 = vmatpush1.msra.mxu0 %v586
  %699 = vmatprep.subr.mxu0 0.0
  %700 = vmatpush1.msra.mxu0 %v589
  %701 = vmatprep.subr.mxu0 0.0
  %702 = vmatpush1.msra.mxu0 %v592
  %703 = vmatprep.subr.mxu0 0.0
  %704 = vmatpush1.msra.mxu0 %v595
  %705 = vmatprep.subr.mxu0 0.0
  %706 = vmatpush1.msra.mxu0 %v598
  %707 = vmatprep.subr.mxu0 0.0
  %708 = vmatpush1.msra.mxu0 %v601
  %709 = vmatprep.subr.mxu0 0.0
  %710 = vmatpush1.msra.mxu0 %v604
  %711 = vmatprep.subr.mxu0 0.0
  %712 = vmatpush1.msra.mxu0 %v607
  %713 = vmatprep.subr.mxu0 0.0
  %714 = vmatpush1.msra.mxu0 %v610
  %715 = vmatprep.subr.mxu0 0.0
  %716 = vmatpush1.msra.mxu0 %v613
  %717 = vmatprep.subr.mxu0 0.0
  %718 = vmatpush1.msra.mxu0 0.0
  %719 = vmatprep.subr.mxu0 0.0
  %720 = vmatpush1.msra.mxu0 0.0
  %721 = vmatprep.subr.mxu0 0.0
  %722 = vmatpush1.msra.mxu0 0.0
  %723 = vmatprep.subr.mxu0 0.0
  %724 = vmatpush1.msra.mxu0 0.0
  %725 = vmatprep.subr.mxu0 0.0
  %726 = vmatpush1.msra.mxu0 0.0
  %727 = vmatprep.subr.mxu0 0.0
  %728 = vmatpush1.msra.mxu0 0.0
  %729 = vmatprep.subr.mxu0 0.0
  %730 = vmatpush1.msra.mxu0 0.0
  %731 = vmatprep.subr.mxu0 0.0
  %732 = vmatpush1.msra.mxu0 0.0
  %733 = vmatprep.subr.mxu0 0.0
  %734 = vmatpush1.msra.mxu0 0.0
  %735 = vmatprep.subr.mxu0 0.0
  %736 = vmatpush1.msra.mxu0 0.0
  %737 = vmatprep.subr.mxu0 0.0
  %738 = vmatpush1.msra.mxu0 0.0
  %739 = vmatprep.subr.mxu0 0.0
  %740 = vmatpush1.msra.mxu0 0.0
  %741 = vmatprep.subr.mxu0 0.0
  %742 = vmatpush1.msra.mxu0 0.0
  %743 = vmatprep.subr.mxu0 0.0
  %744 = vmatpush1.msra.mxu0 0.0
  %745 = vmatprep.subr.mxu0 0.0
  %746 = vmatpush1.msra.mxu0 0.0
  %747 = vmatprep.subr.mxu0 0.0
  %748 = vmatpush1.msra.mxu0 0.0
  %749 = vmatprep.mubr.f32.mxu0 0.0
  %750 = vmatmul.mubr.f32.gmra.mrb[0].mxu0 %v558
  %v751 = vpop.f32.mrb[0].mxu0
  %v752 = vadd.f32 0.0, %v751
  %v753 = vpop.f32.mrb[0].mxu0
  %754 = vdwg.mxu0
  %v755 = vadd.f32 %v563, %v681
  %v756 = vxor.u32 %v755, 2147483648
  %v757 = vmul.f32 %v756, 1.442695
  %v758 = vpow.pop %v757
  %v759 = vadd.f32 %v758, 1.0
  %v760 = vrcp.pop %v759
  %v761 = vmul.f32 1.0, %v760
  %v762 = vadd.f32 %v564, %v683
  %v763 = vxor.u32 %v762, 2147483648
  %v764 = vmul.f32 %v763, 1.442695
  %v765 = vpow.pop %v764
  %v766 = vadd.f32 %v765, 1.0
  %v767 = vrcp.pop %v766
  %v768 = vmul.f32 1.0, %v767
  %v769 = vadd.f32 %v752, %v341
  %v770 = vmul.f32 %v761, %v769
  %v771 = vadd.f32 %v565, %v770
  %v772 = vtanh.pop %v771
  %v773 = vsub.f32 %v558, %v772
  %v774 = vmul.f32 %v768, %v773
  %v775 = vadd.f32 %v772, %v774
  %s776 = scalar_lea.vmem [#allocation3], 8
  %777 = vst [vmem:[%s776] sm:$0xff] %v775
  %s778 = smul.u32 2, 3
  %s779 = smul.addr %s778, 8
  %s780 = scalar_lea.vmem [#allocation2], %s779
  %v781 = vld [vmem:[%s780] sm:$0xff]
  %v782 = vld [vmem:[%s780 + $0x8] sm:$0xff]
  %v783 = vld [vmem:[%s780 + $0x10] sm:$0xff]
  %v784 = vld [vmem:[%s2] sm:$0xff]
  %v785 = vld [vmem:[%s2 + $0x8] sm:$0xff]
  %v786 = vld [vmem:[%s2 + $0x10] sm:$0xff]
  %v787 = vld [vmem:[%s2 + $0x18] sm:$0xff]
  %v788 = vld [vmem:[%s2 + $0x20] sm:$0xff]
  %v789 = vld [vmem:[%s2 + $0x28] sm:$0xff]
  %v790 = vld [vmem:[%s2 + $0x30] sm:$0xff]
  %v791 = vld [vmem:[%s2 + $0x38] sm:$0xff]
  %v792 = vld [vmem:[%s2 + $0x40] sm:$0xff]
  %v793 = vld [vmem:[%s2 + $0x48] sm:$0xff]
  %v794 = vld [vmem:[%s2 + $0x50] sm:$0xff]
  %v795 = vld [vmem:[%s2 + $0x58] sm:$0xff]
  %v796 = vld [vmem:[%s2 + $0x60] sm:$0xff]
  %v797 = vld [vmem:[%s2 + $0x68] sm:$0xff]
  %v798 = vld [vmem:[%s2 + $0x70] sm:$0xff]
  %v799 = vld [vmem:[%s2 + $0x78] sm:$0xff]
  %v800 = vld [vmem:[%s2 + $0x80] sm:$0xff]
  %v801 = vld [vmem:[%s2 + $0x88] sm:$0xff]
  %v802 = vld [vmem:[%s2 + $0x90] sm:$0xff]
  %v803 = vld [vmem:[%s2 + $0x98] sm:$0xff]
  %v804 = vld [vmem:[%s2 + $0xa0] sm:$0xff]
  %v805 = vld [vmem:[%s2 + $0xa8] sm:$0xff]
  %v806 = vld [vmem:[%s2 + $0xb0] sm:$0xff]
  %v807 = vld [vmem:[%s2 + $0xb8] sm:$0xff]
  %v808 = vld [vmem:[%s2 + $0xc0] sm:$0xff]
  %v809 = vld [vmem:[%s2 + $0xc8] sm:$0xff]
  %v810 = vld [vmem:[%s2 + $0xd0] sm:$0xff]
  %v811 = vld [vmem:[%s2 + $0xd8] sm:$0xff]
  %v812 = vld [vmem:[%s2 + $0xe0] sm:$0xff]
  %v813 = vld [vmem:[%s2 + $0xe8] sm:$0xff]
  %v814 = vld [vmem:[%s2 + $0xf0] sm:$0xff]
  %v815 = vld [vmem:[%s2 + $0xf8] sm:$0xff]
  %v816 = vld [vmem:[%s2 + $0x100] sm:$0xff]
  %v817 = vld [vmem:[%s2 + $0x108] sm:$0xff]
  %v818 = vld [vmem:[%s2 + $0x110] sm:$0xff]
  %v819 = vld [vmem:[%s2 + $0x118] sm:$0xff]
  %v820 = vld [vmem:[%s2 + $0x120] sm:$0xff]
  %v821 = vld [vmem:[%s2 + $0x128] sm:$0xff]
  %v822 = vld [vmem:[%s2 + $0x130] sm:$0xff]
  %v823 = vld [vmem:[%s2 + $0x138] sm:$0xff]
  %v824 = vld [vmem:[%s2 + $0x140] sm:$0xff]
  %v825 = vld [vmem:[%s2 + $0x148] sm:$0xff]
  %v826 = vld [vmem:[%s2 + $0x150] sm:$0xff]
  %v827 = vld [vmem:[%s2 + $0x158] sm:$0xff]
  %v828 = vld [vmem:[%s2 + $0x160] sm:$0xff]
  %v829 = vld [vmem:[%s2 + $0x168] sm:$0xff]
  %v830 = vld [vmem:[%s2 + $0x170] sm:$0xff]
  %v831 = vld [vmem:[%s2 + $0x178] sm:$0xff]
  %832 = vmatprep.subr.mxu0 %v785
  %833 = vmatpush1.msra.mxu0 %v784
  %834 = vmatprep.subr.mxu0 %v788
  %835 = vmatpush1.msra.mxu0 %v787
  %836 = vmatprep.subr.mxu0 %v791
  %837 = vmatpush1.msra.mxu0 %v790
  %838 = vmatprep.subr.mxu0 %v794
  %839 = vmatpush1.msra.mxu0 %v793
  %840 = vmatprep.subr.mxu0 %v797
  %841 = vmatpush1.msra.mxu0 %v796
  %842 = vmatprep.subr.mxu0 %v800
  %843 = vmatpush1.msra.mxu0 %v799
  %844 = vmatprep.subr.mxu0 %v803
  %845 = vmatpush1.msra.mxu0 %v802
  %846 = vmatprep.subr.mxu0 %v806
  %847 = vmatpush1.msra.mxu0 %v805
  %848 = vmatprep.subr.mxu0 %v809
  %849 = vmatpush1.msra.mxu0 %v808
  %850 = vmatprep.subr.mxu0 %v812
  %851 = vmatpush1.msra.mxu0 %v811
  %852 = vmatprep.subr.mxu0 %v815
  %853 = vmatpush1.msra.mxu0 %v814
  %854 = vmatprep.subr.mxu0 %v818
  %855 = vmatpush1.msra.mxu0 %v817
  %856 = vmatprep.subr.mxu0 %v821
  %857 = vmatpush1.msra.mxu0 %v820
  %858 = vmatprep.subr.mxu0 %v824
  %859 = vmatpush1.msra.mxu0 %v823
  %860 = vmatprep.subr.mxu0 %v827
  %861 = vmatpush1.msra.mxu0 %v826
  %862 = vmatprep.subr.mxu0 %v830
  %863 = vmatpush1.msra.mxu0 %v829
  %864 = vmatprep.subr.mxu0 0.0
  %865 = vmatpush1.msra.mxu0 0.0
  %866 = vmatprep.subr.mxu0 0.0
  %867 = vmatpush1.msra.mxu0 0.0
  %868 = vmatprep.subr.mxu0 0.0
  %869 = vmatpush1.msra.mxu0 0.0
  %870 = vmatprep.subr.mxu0 0.0
  %871 = vmatpush1.msra.mxu0 0.0
  %872 = vmatprep.subr.mxu0 0.0
  %873 = vmatpush1.msra.mxu0 0.0
  %874 = vmatprep.subr.mxu0 0.0
  %875 = vmatpush1.msra.mxu0 0.0
  %876 = vmatprep.subr.mxu0 0.0
  %877 = vmatpush1.msra.mxu0 0.0
  %878 = vmatprep.subr.mxu0 0.0
  %879 = vmatpush1.msra.mxu0 0.0
  %880 = vmatprep.subr.mxu0 0.0
  %881 = vmatpush1.msra.mxu0 0.0
  %882 = vmatprep.subr.mxu0 0.0
  %883 = vmatpush1.msra.mxu0 0.0
  %884 = vmatprep.subr.mxu0 0.0
  %885 = vmatpush1.msra.mxu0 0.0
  %886 = vmatprep.subr.mxu0 0.0
  %887 = vmatpush1.msra.mxu0 0.0
  %888 = vmatprep.subr.mxu0 0.0
  %889 = vmatpush1.msra.mxu0 0.0
  %890 = vmatprep.subr.mxu0 0.0
  %891 = vmatpush1.msra.mxu0 0.0
  %892 = vmatprep.subr.mxu0 0.0
  %893 = vmatpush1.msra.mxu0 0.0
  %894 = vmatprep.subr.mxu0 0.0
  %895 = vmatpush1.msra.mxu0 0.0
  %896 = vmatprep.mubr.f32.mxu0 0.0
  %897 = vmatmul.mubr.f32.gmra.mrb[0].mxu0 %v775
  %v898 = vpop.f32.mrb[0].mxu0
  %v899 = vadd.f32 0.0, %v898
  %v900 = vpop.f32.mrb[0].mxu0
  %v901 = vadd.f32 0.0, %v900
  %902 = vdwg.mxu0
  %903 = vmatprep.subr.mxu0 0.0
  %904 = vmatpush1.msra.mxu0 %v786
  %905 = vmatprep.subr.mxu0 0.0
  %906 = vmatpush1.msra.mxu0 %v789
  %907 = vmatprep.subr.mxu0 0.0
  %908 = vmatpush1.msra.mxu0 %v792
  %909 = vmatprep.subr.mxu0 0.0
  %910 = vmatpush1.msra.mxu0 %v795
  %911 = vmatprep.subr.mxu0 0.0
  %912 = vmatpush1.msra.mxu0 %v798
  %913 = vmatprep.subr.mxu0 0.0
  %914 = vmatpush1.msra.mxu0 %v801
  %915 = vmatprep.subr.mxu0 0.0
  %916 = vmatpush1.msra.mxu0 %v804
  %917 = vmatprep.subr.mxu0 0.0
  %918 = vmatpush1.msra.mxu0 %v807
  %919 = vmatprep.subr.mxu0 0.0
  %920 = vmatpush1.msra.mxu0 %v810
  %921 = vmatprep.subr.mxu0 0.0
  %922 = vmatpush1.msra.mxu0 %v813
  %923 = vmatprep.subr.mxu0 0.0
  %924 = vmatpush1.msra.mxu0 %v816
  %925 = vmatprep.subr.mxu0 0.0
  %926 = vmatpush1.msra.mxu0 %v819
  %927 = vmatprep.subr.mxu0 0.0
  %928 = vmatpush1.msra.mxu0 %v822
  %929 = vmatprep.subr.mxu0 0.0
  %930 = vmatpush1.msra.mxu0 %v825
  %931 = vmatprep.subr.mxu0 0.0
  %932 = vmatpush1.msra.mxu0 %v828
  %933 = vmatprep.subr.mxu0 0.0
  %934 = vmatpush1.msra.mxu0 %v831
  %935 = vmatprep.subr.mxu0 0.0
  %936 = vmatpush1.msra.mxu0 0.0
  %937 = vmatprep.subr.mxu0 0.0
  %938 = vmatpush1.msra.mxu0 0.0
  %939 = vmatprep.subr.mxu0 0.0
  %940 = vmatpush1.msra.mxu0 0.0
  %941 = vmatprep.subr.mxu0 0.0
  %942 = vmatpush1.msra.mxu0 0.0
  %943 = vmatprep.subr.mxu0 0.0
  %944 = vmatpush1.msra.mxu0 0.0
  %945 = vmatprep.subr.mxu0 0.0
  %946 = vmatpush1.msra.mxu0 0.0
  %947 = vmatprep.subr.mxu0 0.0
  %948 = vmatpush1.msra.mxu0 0.0
  %949 = vmatprep.subr.mxu0 0.0
  %950 = vmatpush1.msra.mxu0 0.0
  %951 = vmatprep.subr.mxu0 0.0
  %952 = vmatpush1.msra.mxu0 0.0
  %953 = vmatprep.subr.mxu0 0.0
  %954 = vmatpush1.msra.mxu0 0.0
  %955 = vmatprep.subr.mxu0 0.0
  %956 = vmatpush1.msra.mxu0 0.0
  %957 = vmatprep.subr.mxu0 0.0
  %958 = vmatpush1.msra.mxu0 0.0
  %959 = vmatprep.subr.mxu0 0.0
  %960 = vmatpush1.msra.mxu0 0.0
  %961 = vmatprep.subr.mxu0 0.0
  %962 = vmatpush1.msra.mxu0 0.0
  %963 = vmatprep.subr.mxu0 0.0
  %964 = vmatpush1.msra.mxu0 0.0
  %965 = vmatprep.subr.mxu0 0.0
  %966 = vmatpush1.msra.mxu0 0.0
  %967 = vmatprep.mubr.f32.mxu0 0.0
  %968 = vmatmul.mubr.f32.gmra.mrb[0].mxu0 %v775
  %v969 = vpop.f32.mrb[0].mxu0
  %v970 = vadd.f32 0.0, %v969
  %v971 = vpop.f32.mrb[0].mxu0
  %972 = vdwg.mxu0
  %v973 = vadd.f32 %v781, %v899
  %v974 = vxor.u32 %v973, 2147483648
  %v975 = vmul.f32 %v974, 1.442695
  %v976 = vpow.pop %v975
  %v977 = vadd.f32 %v976, 1.0
  %v978 = vrcp.pop %v977
  %v979 = vmul.f32 1.0, %v978
  %v980 = vadd.f32 %v782, %v901
  %v981 = vxor.u32 %v980, 2147483648
  %v982 = vmul.f32 %v981, 1.442695
  %v983 = vpow.pop %v982
  %v984 = vadd.f32 %v983, 1.0
  %v985 = vrcp.pop %v984
  %v986 = vmul.f32 1.0, %v985
  %v987 = vadd.f32 %v970, %v341
  %v988 = vmul.f32 %v979, %v987
  %v989 = vadd.f32 %v783, %v988
  %v990 = vtanh.pop %v989
  %v991 = vsub.f32 %v775, %v990
  %v992 = vmul.f32 %v986, %v991
  %v993 = vadd.f32 %v990, %v992
  %s994 = scalar_lea.vmem [#allocation3], 16
  %995 = vst [vmem:[%s994] sm:$0xff] %v993
  %s996 = smul.u32 3, 3
  %s997 = smul.addr %s996, 8
  %s998 = scalar_lea.vmem [#allocation2], %s997
  %v999 = vld [vmem:[%s998] sm:$0xff]
  %v1000 = vld [vmem:[%s998 + $0x8] sm:$0xff]
  %v1001 = vld [vmem:[%s998 + $0x10] sm:$0xff]
  %v1002 = vld [vmem:[%s2] sm:$0xff]
  %v1003 = vld [vmem:[%s2 + $0x8] sm:$0xff]
  %v1004 = vld [vmem:[%s2 + $0x10] sm:$0xff]
  %v1005 = vld [vmem:[%s2 + $0x18] sm:$0xff]
  %v1006 = vld [vmem:[%s2 + $0x20] sm:$0xff]
  %v1007 = vld [vmem:[%s2 + $0x28] sm:$0xff]
  %v1008 = vld [vmem:[%s2 + $0x30] sm:$0xff]
  %v1009 = vld [vmem:[%s2 + $0x38] sm:$0xff]
  %v1010 = vld [vmem:[%s2 + $0x40] sm:$0xff]
  %v1011 = vld [vmem:[%s2 + $0x48] sm:$0xff]
  %v1012 = vld [vmem:[%s2 + $0x50] sm:$0xff]
  %v1013 = vld [vmem:[%s2 + $0x58] sm:$0xff]
  %v1014 = vld [vmem:[%s2 + $0x60] sm:$0xff]
  %v1015 = vld [vmem:[%s2 + $0x68] sm:$0xff]
  %v1016 = vld [vmem:[%s2 + $0x70] sm:$0xff]
  %v1017 = vld [vmem:[%s2 + $0x78] sm:$0xff]
  %v1018 = vld [vmem:[%s2 + $0x80] sm:$0xff]
  %v1019 = vld [vmem:[%s2 + $0x88] sm:$0xff]
  %v1020 = vld [vmem:[%s2 + $0x90] sm:$0xff]
  %v1021 = vld [vmem:[%s2 + $0x98] sm:$0xff]
  %v1022 = vld [vmem:[%s2 + $0xa0] sm:$0xff]
  %v1023 = vld [vmem:[%s2 + $0xa8] sm:$0xff]
  %v1024 = vld [vmem:[%s2 + $0xb0] sm:$0xff]
  %v1025 = vld [vmem:[%s2 + $0xb8] sm:$0xff]
  %v1026 = vld [vmem:[%s2 + $0xc0] sm:$0xff]
  %v1027 = vld [vmem:[%s2 + $0xc8] sm:$0xff]
  %v1028 = vld [vmem:[%s2 + $0xd0] sm:$0xff]
  %v1029 = vld [vmem:[%s2 + $0xd8] sm:$0xff]
  %v1030 = vld [vmem:[%s2 + $0xe0] sm:$0xff]
  %v1031 = vld [vmem:[%s2 + $0xe8] sm:$0xff]
  %v1032 = vld [vmem:[%s2 + $0xf0] sm:$0xff]
  %v1033 = vld [vmem:[%s2 + $0xf8] sm:$0xff]
  %v1034 = vld [vmem:[%s2 + $0x100] sm:$0xff]
  %v1035 = vld [vmem:[%s2 + $0x108] sm:$0xff]
  %v1036 = vld [vmem:[%s2 + $0x110] sm:$0xff]
  %v1037 = vld [vmem:[%s2 + $0x118] sm:$0xff]
  %v1038 = vld [vmem:[%s2 + $0x120] sm:$0xff]
  %v1039 = vld [vmem:[%s2 + $0x128] sm:$0xff]
  %v1040 = vld [vmem:[%s2 + $0x130] sm:$0xff]
  %v1041 = vld [vmem:[%s2 + $0x138] sm:$0xff]
  %v1042 = vld [vmem:[%s2 + $0x140] sm:$0xff]
  %v1043 = vld [vmem:[%s2 + $0x148] sm:$0xff]
  %v1044 = vld [vmem:[%s2 + $0x150] sm:$0xff]
  %v1045 = vld [vmem:[%s2 + $0x158] sm:$0xff]
  %v1046 = vld [vmem:[%s2 + $0x160] sm:$0xff]
  %v1047 = vld [vmem:[%s2 + $0x168] sm:$0xff]
  %v1048 = vld [vmem:[%s2 + $0x170] sm:$0xff]
  %v1049 = vld [vmem:[%s2 + $0x178] sm:$0xff]
  %1050 = vmatprep.subr.mxu0 %v1003
  %1051 = vmatpush1.msra.mxu0 %v1002
  %1052 = vmatprep.subr.mxu0 %v1006
  %1053 = vmatpush1.msra.mxu0 %v1005
  %1054 = vmatprep.subr.mxu0 %v1009
  %1055 = vmatpush1.msra.mxu0 %v1008
  %1056 = vmatprep.subr.mxu0 %v1012
  %1057 = vmatpush1.msra.mxu0 %v1011
  %1058 = vmatprep.subr.mxu0 %v1015
  %1059 = vmatpush1.msra.mxu0 %v1014
  %1060 = vmatprep.subr.mxu0 %v1018
  %1061 = vmatpush1.msra.mxu0 %v1017
  %1062 = vmatprep.subr.mxu0 %v1021
  %1063 = vmatpush1.msra.mxu0 %v1020
  %1064 = vmatprep.subr.mxu0 %v1024
  %1065 = vmatpush1.msra.mxu0 %v1023
  %1066 = vmatprep.subr.mxu0 %v1027
  %1067 = vmatpush1.msra.mxu0 %v1026
  %1068 = vmatprep.subr.mxu0 %v1030
  %1069 = vmatpush1.msra.mxu0 %v1029
  %1070 = vmatprep.subr.mxu0 %v1033
  %1071 = vmatpush1.msra.mxu0 %v1032
  %1072 = vmatprep.subr.mxu0 %v1036
  %1073 = vmatpush1.msra.mxu0 %v1035
  %1074 = vmatprep.subr.mxu0 %v1039
  %1075 = vmatpush1.msra.mxu0 %v1038
  %1076 = vmatprep.subr.mxu0 %v1042
  %1077 = vmatpush1.msra.mxu0 %v1041
  %1078 = vmatprep.subr.mxu0 %v1045
  %1079 = vmatpush1.msra.mxu0 %v1044
  %1080 = vmatprep.subr.mxu0 %v1048
  %1081 = vmatpush1.msra.mxu0 %v1047
  %1082 = vmatprep.subr.mxu0 0.0
  %1083 = vmatpush1.msra.mxu0 0.0
  %1084 = vmatprep.subr.mxu0 0.0
  %1085 = vmatpush1.msra.mxu0 0.0
  %1086 = vmatprep.subr.mxu0 0.0
  %1087 = vmatpush1.msra.mxu0 0.0
  %1088 = vmatprep.subr.mxu0 0.0
  %1089 = vmatpush1.msra.mxu0 0.0
  %1090 = vmatprep.subr.mxu0 0.0
  %1091 = vmatpush1.msra.mxu0 0.0
  %1092 = vmatprep.subr.mxu0 0.0
  %1093 = vmatpush1.msra.mxu0 0.0
  %1094 = vmatprep.subr.mxu0 0.0
  %1095 = vmatpush1.msra.mxu0 0.0
  %1096 = vmatprep.subr.mxu0 0.0
  %1097 = vmatpush1.msra.mxu0 0.0
  %1098 = vmatprep.subr.mxu0 0.0
  %1099 = vmatpush1.msra.mxu0 0.0
  %1100 = vmatprep.subr.mxu0 0.0
  %1101 = vmatpush1.msra.mxu0 0.0
  %1102 = vmatprep.subr.mxu0 0.0
  %1103 = vmatpush1.msra.mxu0 0.0
  %1104 = vmatprep.subr.mxu0 0.0
  %1105 = vmatpush1.msra.mxu0 0.0
  %1106 = vmatprep.subr.mxu0 0.0
  %1107 = vmatpush1.msra.mxu0 0.0
  %1108 = vmatprep.subr.mxu0 0.0
  %1109 = vmatpush1.msra.mxu0 0.0
  %1110 = vmatprep.subr.mxu0 0.0
  %1111 = vmatpush1.msra.mxu0 0.0
  %1112 = vmatprep.subr.mxu0 0.0
  %1113 = vmatpush1.msra.mxu0 0.0
  %1114 = vmatprep.mubr.f32.mxu0 0.0
  %1115 = vmatmul.mubr.f32.gmra.mrb[0].mxu0 %v993
  %v1116 = vpop.f32.mrb[0].mxu0
  %v1117 = vadd.f32 0.0, %v1116
  %v1118 = vpop.f32.mrb[0].mxu0
  %v1119 = vadd.f32 0.0, %v1118
  %1120 = vdwg.mxu0
  %1121 = vmatprep.subr.mxu0 0.0
  %1122 = vmatpush1.msra.mxu0 %v1004
  %1123 = vmatprep.subr.mxu0 0.0
  %1124 = vmatpush1.msra.mxu0 %v1007
  %1125 = vmatprep.subr.mxu0 0.0
  %1126 = vmatpush1.msra.mxu0 %v1010
  %1127 = vmatprep.subr.mxu0 0.0
  %1128 = vmatpush1.msra.mxu0 %v1013
  %1129 = vmatprep.subr.mxu0 0.0
  %1130 = vmatpush1.msra.mxu0 %v1016
  %1131 = vmatprep.subr.mxu0 0.0
  %1132 = vmatpush1.msra.mxu0 %v1019
  %1133 = vmatprep.subr.mxu0 0.0
  %1134 = vmatpush1.msra.mxu0 %v1022
  %1135 = vmatprep.subr.mxu0 0.0
  %1136 = vmatpush1.msra.mxu0 %v1025
  %1137 = vmatprep.subr.mxu0 0.0
  %1138 = vmatpush1.msra.mxu0 %v1028
  %1139 = vmatprep.subr.mxu0 0.0
  %1140 = vmatpush1.msra.mxu0 %v1031
  %1141 = vmatprep.subr.mxu0 0.0
  %1142 = vmatpush1.msra.mxu0 %v1034
  %1143 = vmatprep.subr.mxu0 0.0
  %1144 = vmatpush1.msra.mxu0 %v1037
  %1145 = vmatprep.subr.mxu0 0.0
  %1146 = vmatpush1.msra.mxu0 %v1040
  %1147 = vmatprep.subr.mxu0 0.0
  %1148 = vmatpush1.msra.mxu0 %v1043
  %1149 = vmatprep.subr.mxu0 0.0
  %1150 = vmatpush1.msra.mxu0 %v1046
  %1151 = vmatprep.subr.mxu0 0.0
  %1152 = vmatpush1.msra.mxu0 %v1049
  %1153 = vmatprep.subr.mxu0 0.0
  %1154 = vmatpush1.msra.mxu0 0.0
  %1155 = vmatprep.subr.mxu0 0.0
  %1156 = vmatpush1.msra.mxu0 0.0
  %1157 = vmatprep.subr.mxu0 0.0
  %1158 = vmatpush1.msra.mxu0 0.0
  %1159 = vmatprep.subr.mxu0 0.0
  %1160 = vmatpush1.msra.mxu0 0.0
  %1161 = vmatprep.subr.mxu0 0.0
  %1162 = vmatpush1.msra.mxu0 0.0
  %1163 = vmatprep.subr.mxu0 0.0
  %1164 = vmatpush1.msra.mxu0 0.0
  %1165 = vmatprep.subr.mxu0 0.0
  %1166 = vmatpush1.msra.mxu0 0.0
  %1167 = vmatprep.subr.mxu0 0.0
  %1168 = vmatpush1.msra.mxu0 0.0
  %1169 = vmatprep.subr.mxu0 0.0
  %1170 = vmatpush1.msra.mxu0 0.0
  %1171 = vmatprep.subr.mxu0 0.0
  %1172 = vmatpush1.msra.mxu0 0.0
  %1173 = vmatprep.subr.mxu0 0.0
  %1174 = vmatpush1.msra.mxu0 0.0
  %1175 = vmatprep.subr.mxu0 0.0
  %1176 = vmatpush1.msra.mxu0 0.0
  %1177 = vmatprep.subr.mxu0 0.0
  %1178 = vmatpush1.msra.mxu0 0.0
  %1179 = vmatprep.subr.mxu0 0.0
  %1180 = vmatpush1.msra.mxu0 0.0
  %1181 = vmatprep.subr.mxu0 0.0
  %1182 = vmatpush1.msra.mxu0 0.0
  %1183 = vmatprep.subr.mxu0 0.0
  %1184 = vmatpush1.msra.mxu0 0.0
  %1185 = vmatprep.mubr.f32.mxu0 0.0
  %1186 = vmatmul.mubr.f32.gmra.mrb[0].mxu0 %v993
  %v1187 = vpop.f32.mrb[0].mxu0
  %v1188 = vadd.f32 0.0, %v1187
  %v1189 = vpop.f32.mrb[0].mxu0
  %1190 = vdwg.mxu0
  %v1191 = vadd.f32 %v999, %v1117
  %v1192 = vxor.u32 %v1191, 2147483648
  %v1193 = vmul.f32 %v1192, 1.442695
  %v1194 = vpow.pop %v1193
  %v1195 = vadd.f32 %v1194, 1.0
  %v1196 = vrcp.pop %v1195
  %v1197 = vmul.f32 1.0, %v1196
  %v1198 = vadd.f32 %v1000, %v1119
  %v1199 = vxor.u32 %v1198, 2147483648
  %v1200 = vmul.f32 %v1199, 1.442695
  %v1201 = vpow.pop %v1200
  %v1202 = vadd.f32 %v1201, 1.0
  %v1203 = vrcp.pop %v1202
  %v1204 = vmul.f32 1.0, %v1203
  %v1205 = vadd.f32 %v1188, %v341
  %v1206 = vmul.f32 %v1197, %v1205
  %v1207 = vadd.f32 %v1001, %v1206
  %v1208 = vtanh.pop %v1207
  %v1209 = vsub.f32 %v993, %v1208
  %v1210 = vmul.f32 %v1204, %v1209
  %v1211 = vadd.f32 %v1208, %v1210
  %s1212 = scalar_lea.vmem [#allocation3], 24
  %1213 = vst [vmem:[%s1212] sm:$0xff] %v1211
  %s1214 = smul.u32 4, 3
  %s1215 = smul.addr %s1214, 8
  %s1216 = scalar_lea.vmem [#allocation2], %s1215
  %v1217 = vld [vmem:[%s1216] sm:$0xff]
  %v1218 = vld [vmem:[%s1216 + $0x8] sm:$0xff]
  %v1219 = vld [vmem:[%s1216 + $0x10] sm:$0xff]
  %v1220 = vld [vmem:[%s2] sm:$0xff]
  %v1221 = vld [vmem:[%s2 + $0x8] sm:$0xff]
  %v1222 = vld [vmem:[%s2 + $0x10] sm:$0xff]
  %v1223 = vld [vmem:[%s2 + $0x18] sm:$0xff]
  %v1224 = vld [vmem:[%s2 + $0x20] sm:$0xff]
  %v1225 = vld [vmem:[%s2 + $0x28] sm:$0xff]
  %v1226 = vld [vmem:[%s2 + $0x30] sm:$0xff]
  %v1227 = vld [vmem:[%s2 + $0x38] sm:$0xff]
  %v1228 = vld [vmem:[%s2 + $0x40] sm:$0xff]
  %v1229 = vld [vmem:[%s2 + $0x48] sm:$0xff]
  %v1230 = vld [vmem:[%s2 + $0x50] sm:$0xff]
  %v1231 = vld [vmem:[%s2 + $0x58] sm:$0xff]
  %v1232 = vld [vmem:[%s2 + $0x60] sm:$0xff]
  %v1233 = vld [vmem:[%s2 + $0x68] sm:$0xff]
  %v1234 = vld [vmem:[%s2 + $0x70] sm:$0xff]
  %v1235 = vld [vmem:[%s2 + $0x78] sm:$0xff]
  %v1236 = vld [vmem:[%s2 + $0x80] sm:$0xff]
  %v1237 = vld [vmem:[%s2 + $0x88] sm:$0xff]
  %v1238 = vld [vmem:[%s2 + $0x90] sm:$0xff]
  %v1239 = vld [vmem:[%s2 + $0x98] sm:$0xff]
  %v1240 = vld [vmem:[%s2 + $0xa0] sm:$0xff]
  %v1241 = vld [vmem:[%s2 + $0xa8] sm:$0xff]
  %v1242 = vld [vmem:[%s2 + $0xb0] sm:$0xff]
  %v1243 = vld [vmem:[%s2 + $0xb8] sm:$0xff]
  %v1244 = vld [vmem:[%s2 + $0xc0] sm:$0xff]
  %v1245 = vld [vmem:[%s2 + $0xc8] sm:$0xff]
  %v1246 = vld [vmem:[%s2 + $0xd0] sm:$0xff]
  %v1247 = vld [vmem:[%s2 + $0xd8] sm:$0xff]
  %v1248 = vld [vmem:[%s2 + $0xe0] sm:$0xff]
  %v1249 = vld [vmem:[%s2 + $0xe8] sm:$0xff]
  %v1250 = vld [vmem:[%s2 + $0xf0] sm:$0xff]
  %v1251 = vld [vmem:[%s2 + $0xf8] sm:$0xff]
  %v1252 = vld [vmem:[%s2 + $0x100] sm:$0xff]
  %v1253 = vld [vmem:[%s2 + $0x108] sm:$0xff]
  %v1254 = vld [vmem:[%s2 + $0x110] sm:$0xff]
  %v1255 = vld [vmem:[%s2 + $0x118] sm:$0xff]
  %v1256 = vld [vmem:[%s2 + $0x120] sm:$0xff]
  %v1257 = vld [vmem:[%s2 + $0x128] sm:$0xff]
  %v1258 = vld [vmem:[%s2 + $0x130] sm:$0xff]
  %v1259 = vld [vmem:[%s2 + $0x138] sm:$0xff]
  %v1260 = vld [vmem:[%s2 + $0x140] sm:$0xff]
  %v1261 = vld [vmem:[%s2 + $0x148] sm:$0xff]
  %v1262 = vld [vmem:[%s2 + $0x150] sm:$0xff]
  %v1263 = vld [vmem:[%s2 + $0x158] sm:$0xff]
  %v1264 = vld [vmem:[%s2 + $0x160] sm:$0xff]
  %v1265 = vld [vmem:[%s2 + $0x168] sm:$0xff]
  %v1266 = vld [vmem:[%s2 + $0x170] sm:$0xff]
  %v1267 = vld [vmem:[%s2 + $0x178] sm:$0xff]
  %1268 = vmatprep.subr.mxu0 %v1221
  %1269 = vmatpush1.msra.mxu0 %v1220
  %1270 = vmatprep.subr.mxu0 %v1224
  %1271 = vmatpush1.msra.mxu0 %v1223
  %1272 = vmatprep.subr.mxu0 %v1227
  %1273 = vmatpush1.msra.mxu0 %v1226
  %1274 = vmatprep.subr.mxu0 %v1230
  %1275 = vmatpush1.msra.mxu0 %v1229
  %1276 = vmatprep.subr.mxu0 %v1233
  %1277 = vmatpush1.msra.mxu0 %v1232
  %1278 = vmatprep.subr.mxu0 %v1236
  %1279 = vmatpush1.msra.mxu0 %v1235
  %1280 = vmatprep.subr.mxu0 %v1239
  %1281 = vmatpush1.msra.mxu0 %v1238
  %1282 = vmatprep.subr.mxu0 %v1242
  %1283 = vmatpush1.msra.mxu0 %v1241
  %1284 = vmatprep.subr.mxu0 %v1245
  %1285 = vmatpush1.msra.mxu0 %v1244
  %1286 = vmatprep.subr.mxu0 %v1248
  %1287 = vmatpush1.msra.mxu0 %v1247
  %1288 = vmatprep.subr.mxu0 %v1251
  %1289 = vmatpush1.msra.mxu0 %v1250
  %1290 = vmatprep.subr.mxu0 %v1254
  %1291 = vmatpush1.msra.mxu0 %v1253
  %1292 = vmatprep.subr.mxu0 %v1257
  %1293 = vmatpush1.msra.mxu0 %v1256
  %1294 = vmatprep.subr.mxu0 %v1260
  %1295 = vmatpush1.msra.mxu0 %v1259
  %1296 = vmatprep.subr.mxu0 %v1263
  %1297 = vmatpush1.msra.mxu0 %v1262
  %1298 = vmatprep.subr.mxu0 %v1266
  %1299 = vmatpush1.msra.mxu0 %v1265
  %1300 = vmatprep.subr.mxu0 0.0
  %1301 = vmatpush1.msra.mxu0 0.0
  %1302 = vmatprep.subr.mxu0 0.0
  %1303 = vmatpush1.msra.mxu0 0.0
  %1304 = vmatprep.subr.mxu0 0.0
  %1305 = vmatpush1.msra.mxu0 0.0
  %1306 = vmatprep.subr.mxu0 0.0
  %1307 = vmatpush1.msra.mxu0 0.0
  %1308 = vmatprep.subr.mxu0 0.0
  %1309 = vmatpush1.msra.mxu0 0.0
  %1310 = vmatprep.subr.mxu0 0.0
  %1311 = vmatpush1.msra.mxu0 0.0
  %1312 = vmatprep.subr.mxu0 0.0
  %1313 = vmatpush1.msra.mxu0 0.0
  %1314 = vmatprep.subr.mxu0 0.0
  %1315 = vmatpush1.msra.mxu0 0.0
  %1316 = vmatprep.subr.mxu0 0.0
  %1317 = vmatpush1.msra.mxu0 0.0
  %1318 = vmatprep.subr.mxu0 0.0
  %1319 = vmatpush1.msra.mxu0 0.0
  %1320 = vmatprep.subr.mxu0 0.0
  %1321 = vmatpush1.msra.mxu0 0.0
  %1322 = vmatprep.subr.mxu0 0.0
  %1323 = vmatpush1.msra.mxu0 0.0
  %1324 = vmatprep.subr.mxu0 0.0
  %1325 = vmatpush1.msra.mxu0 0.0
  %1326 = vmatprep.subr.mxu0 0.0
  %1327 = vmatpush1.msra.mxu0 0.0
  %1328 = vmatprep.subr.mxu0 0.0
  %1329 = vmatpush1.msra.mxu0 0.0
  %1330 = vmatprep.subr.mxu0 0.0
  %1331 = vmatpush1.msra.mxu0 0.0
  %1332 = vmatprep.mubr.f32.mxu0 0.0
  %1333 = vmatmul.mubr.f32.gmra.mrb[0].mxu0 %v1211
  %v1334 = vpop.f32.mrb[0].mxu0
  %v1335 = vadd.f32 0.0, %v1334
  %v1336 = vpop.f32.mrb[0].mxu0
  %v1337 = vadd.f32 0.0, %v1336
  %1338 = vdwg.mxu0
  %1339 = vmatprep.subr.mxu0 0.0
  %1340 = vmatpush1.msra.mxu0 %v1222
  %1341 = vmatprep.subr.mxu0 0.0
  %1342 = vmatpush1.msra.mxu0 %v1225
  %1343 = vmatprep.subr.mxu0 0.0
  %1344 = vmatpush1.msra.mxu0 %v1228
  %1345 = vmatprep.subr.mxu0 0.0
  %1346 = vmatpush1.msra.mxu0 %v1231
  %1347 = vmatprep.subr.mxu0 0.0
  %1348 = vmatpush1.msra.mxu0 %v1234
  %1349 = vmatprep.subr.mxu0 0.0
  %1350 = vmatpush1.msra.mxu0 %v1237
  %1351 = vmatprep.subr.mxu0 0.0
  %1352 = vmatpush1.msra.mxu0 %v1240
  %1353 = vmatprep.subr.mxu0 0.0
  %1354 = vmatpush1.msra.mxu0 %v1243
  %1355 = vmatprep.subr.mxu0 0.0
  %1356 = vmatpush1.msra.mxu0 %v1246
  %1357 = vmatprep.subr.mxu0 0.0
  %1358 = vmatpush1.msra.mxu0 %v1249
  %1359 = vmatprep.subr.mxu0 0.0
  %1360 = vmatpush1.msra.mxu0 %v1252
  %1361 = vmatprep.subr.mxu0 0.0
  %1362 = vmatpush1.msra.mxu0 %v1255
  %1363 = vmatprep.subr.mxu0 0.0
  %1364 = vmatpush1.msra.mxu0 %v1258
  %1365 = vmatprep.subr.mxu0 0.0
  %1366 = vmatpush1.msra.mxu0 %v1261
  %1367 = vmatprep.subr.mxu0 0.0
  %1368 = vmatpush1.msra.mxu0 %v1264
  %1369 = vmatprep.subr.mxu0 0.0
  %1370 = vmatpush1.msra.mxu0 %v1267
  %1371 = vmatprep.subr.mxu0 0.0
  %1372 = vmatpush1.msra.mxu0 0.0
  %1373 = vmatprep.subr.mxu0 0.0
  %1374 = vmatpush1.msra.mxu0 0.0
  %1375 = vmatprep.subr.mxu0 0.0
  %1376 = vmatpush1.msra.mxu0 0.0
  %1377 = vmatprep.subr.mxu0 0.0
  %1378 = vmatpush1.msra.mxu0 0.0
  %1379 = vmatprep.subr.mxu0 0.0
  %1380 = vmatpush1.msra.mxu0 0.0
  %1381 = vmatprep.subr.mxu0 0.0
  %1382 = vmatpush1.msra.mxu0 0.0
  %1383 = vmatprep.subr.mxu0 0.0
  %1384 = vmatpush1.msra.mxu0 0.0
  %1385 = vmatprep.subr.mxu0 0.0
  %1386 = vmatpush1.msra.mxu0 0.0
  %1387 = vmatprep.subr.mxu0 0.0
  %1388 = vmatpush1.msra.mxu0 0.0
  %1389 = vmatprep.subr.mxu0 0.0
  %1390 = vmatpush1.msra.mxu0 0.0
  %1391 = vmatprep.subr.mxu0 0.0
  %1392 = vmatpush1.msra.mxu0 0.0
  %1393 = vmatprep.subr.mxu0 0.0
  %1394 = vmatpush1.msra.mxu0 0.0
  %1395 = vmatprep.subr.mxu0 0.0
  %1396 = vmatpush1.msra.mxu0 0.0
  %1397 = vmatprep.subr.mxu0 0.0
  %1398 = vmatpush1.msra.mxu0 0.0
  %1399 = vmatprep.subr.mxu0 0.0
  %1400 = vmatpush1.msra.mxu0 0.0
  %1401 = vmatprep.subr.mxu0 0.0
  %1402 = vmatpush1.msra.mxu0 0.0
  %1403 = vmatprep.mubr.f32.mxu0 0.0
  %1404 = vmatmul.mubr.f32.gmra.mrb[0].mxu0 %v1211
  %v1405 = vpop.f32.mrb[0].mxu0
  %v1406 = vadd.f32 0.0, %v1405
  %v1407 = vpop.f32.mrb[0].mxu0
  %1408 = vdwg.mxu0
  %v1409 = vadd.f32 %v1217, %v1335
  %v1410 = vxor.u32 %v1409, 2147483648
  %v1411 = vmul.f32 %v1410, 1.442695
  %v1412 = vpow.pop %v1411
  %v1413 = vadd.f32 %v1412, 1.0
  %v1414 = vrcp.pop %v1413
  %v1415 = vmul.f32 1.0, %v1414
  %v1416 = vadd.f32 %v1218, %v1337
  %v1417 = vxor.u32 %v1416, 2147483648
  %v1418 = vmul.f32 %v1417, 1.442695
  %v1419 = vpow.pop %v1418
  %v1420 = vadd.f32 %v1419, 1.0
  %v1421 = vrcp.pop %v1420
  %v1422 = vmul.f32 1.0, %v1421
  %v1423 = vadd.f32 %v1406, %v341
  %v1424 = vmul.f32 %v1415, %v1423
  %v1425 = vadd.f32 %v1219, %v1424
  %v1426 = vtanh.pop %v1425
  %v1427 = vsub.f32 %v1211, %v1426
  %v1428 = vmul.f32 %v1422, %v1427
  %v1429 = vadd.f32 %v1426, %v1428
  %s1430 = scalar_lea.vmem [#allocation3], 32
  %1431 = vst [vmem:[%s1430] sm:$0xff] %v1429
  %s1432 = smul.u32 5, 3
  %s1433 = smul.addr %s1432, 8
  %s1434 = scalar_lea.vmem [#allocation2], %s1433
  %v1435 = vld [vmem:[%s1434] sm:$0xff]
  %v1436 = vld [vmem:[%s1434 + $0x8] sm:$0xff]
  %v1437 = vld [vmem:[%s1434 + $0x10] sm:$0xff]
  %v1438 = vld [vmem:[%s2] sm:$0xff]
  %v1439 = vld [vmem:[%s2 + $0x8] sm:$0xff]
  %v1440 = vld [vmem:[%s2 + $0x10] sm:$0xff]
  %v1441 = vld [vmem:[%s2 + $0x18] sm:$0xff]
  %v1442 = vld [vmem:[%s2 + $0x20] sm:$0xff]
  %v1443 = vld [vmem:[%s2 + $0x28] sm:$0xff]
  %v1444 = vld [vmem:[%s2 + $0x30] sm:$0xff]
  %v1445 = vld [vmem:[%s2 + $0x38] sm:$0xff]
  %v1446 = vld [vmem:[%s2 + $0x40] sm:$0xff]
  %v1447 = vld [vmem:[%s2 + $0x48] sm:$0xff]
  %v1448 = vld [vmem:[%s2 + $0x50] sm:$0xff]
  %v1449 = vld [vmem:[%s2 + $0x58] sm:$0xff]
  %v1450 = vld [vmem:[%s2 + $0x60] sm:$0xff]
  %v1451 = vld [vmem:[%s2 + $0x68] sm:$0xff]
  %v1452 = vld [vmem:[%s2 + $0x70] sm:$0xff]
  %v1453 = vld [vmem:[%s2 + $0x78] sm:$0xff]
  %v1454 = vld [vmem:[%s2 + $0x80] sm:$0xff]
  %v1455 = vld [vmem:[%s2 + $0x88] sm:$0xff]
  %v1456 = vld [vmem:[%s2 + $0x90] sm:$0xff]
  %v1457 = vld [vmem:[%s2 + $0x98] sm:$0xff]
  %v1458 = vld [vmem:[%s2 + $0xa0] sm:$0xff]
  %v1459 = vld [vmem:[%s2 + $0xa8] sm:$0xff]
  %v1460 = vld [vmem:[%s2 + $0xb0] sm:$0xff]
  %v1461 = vld [vmem:[%s2 + $0xb8] sm:$0xff]
  %v1462 = vld [vmem:[%s2 + $0xc0] sm:$0xff]
  %v1463 = vld [vmem:[%s2 + $0xc8] sm:$0xff]
  %v1464 = vld [vmem:[%s2 + $0xd0] sm:$0xff]
  %v1465 = vld [vmem:[%s2 + $0xd8] sm:$0xff]
  %v1466 = vld [vmem:[%s2 + $0xe0] sm:$0xff]
  %v1467 = vld [vmem:[%s2 + $0xe8] sm:$0xff]
  %v1468 = vld [vmem:[%s2 + $0xf0] sm:$0xff]
  %v1469 = vld [vmem:[%s2 + $0xf8] sm:$0xff]
  %v1470 = vld [vmem:[%s2 + $0x100] sm:$0xff]
  %v1471 = vld [vmem:[%s2 + $0x108] sm:$0xff]
  %v1472 = vld [vmem:[%s2 + $0x110] sm:$0xff]
  %v1473 = vld [vmem:[%s2 + $0x118] sm:$0xff]
  %v1474 = vld [vmem:[%s2 + $0x120] sm:$0xff]
  %v1475 = vld [vmem:[%s2 + $0x128] sm:$0xff]
  %v1476 = vld [vmem:[%s2 + $0x130] sm:$0xff]
  %v1477 = vld [vmem:[%s2 + $0x138] sm:$0xff]
  %v1478 = vld [vmem:[%s2 + $0x140] sm:$0xff]
  %v1479 = vld [vmem:[%s2 + $0x148] sm:$0xff]
  %v1480 = vld [vmem:[%s2 + $0x150] sm:$0xff]
  %v1481 = vld [vmem:[%s2 + $0x158] sm:$0xff]
  %v1482 = vld [vmem:[%s2 + $0x160] sm:$0xff]
  %v1483 = vld [vmem:[%s2 + $0x168] sm:$0xff]
  %v1484 = vld [vmem:[%s2 + $0x170] sm:$0xff]
  %v1485 = vld [vmem:[%s2 + $0x178] sm:$0xff]
  %1486 = vmatprep.subr.mxu0 %v1439
  %1487 = vmatpush1.msra.mxu0 %v1438
  %1488 = vmatprep.subr.mxu0 %v1442
  %1489 = vmatpush1.msra.mxu0 %v1441
  %1490 = vmatprep.subr.mxu0 %v1445
  %1491 = vmatpush1.msra.mxu0 %v1444
  %1492 = vmatprep.subr.mxu0 %v1448
  %1493 = vmatpush1.msra.mxu0 %v1447
  %1494 = vmatprep.subr.mxu0 %v1451
  %1495 = vmatpush1.msra.mxu0 %v1450
  %1496 = vmatprep.subr.mxu0 %v1454
  %1497 = vmatpush1.msra.mxu0 %v1453
  %1498 = vmatprep.subr.mxu0 %v1457
  %1499 = vmatpush1.msra.mxu0 %v1456
  %1500 = vmatprep.subr.mxu0 %v1460
  %1501 = vmatpush1.msra.mxu0 %v1459
  %1502 = vmatprep.subr.mxu0 %v1463
  %1503 = vmatpush1.msra.mxu0 %v1462
  %1504 = vmatprep.subr.mxu0 %v1466
  %1505 = vmatpush1.msra.mxu0 %v1465
  %1506 = vmatprep.subr.mxu0 %v1469
  %1507 = vmatpush1.msra.mxu0 %v1468
  %1508 = vmatprep.subr.mxu0 %v1472
  %1509 = vmatpush1.msra.mxu0 %v1471
  %1510 = vmatprep.subr.mxu0 %v1475
  %1511 = vmatpush1.msra.mxu0 %v1474
  %1512 = vmatprep.subr.mxu0 %v1478
  %1513 = vmatpush1.msra.mxu0 %v1477
  %1514 = vmatprep.subr.mxu0 %v1481
  %1515 = vmatpush1.msra.mxu0 %v1480
  %1516 = vmatprep.subr.mxu0 %v1484
  %1517 = vmatpush1.msra.mxu0 %v1483
  %1518 = vmatprep.subr.mxu0 0.0
  %1519 = vmatpush1.msra.mxu0 0.0
  %1520 = vmatprep.subr.mxu0 0.0
  %1521 = vmatpush1.msra.mxu0 0.0
  %1522 = vmatprep.subr.mxu0 0.0
  %1523 = vmatpush1.msra.mxu0 0.0
  %1524 = vmatprep.subr.mxu0 0.0
  %1525 = vmatpush1.msra.mxu0 0.0
  %1526 = vmatprep.subr.mxu0 0.0
  %1527 = vmatpush1.msra.mxu0 0.0
  %1528 = vmatprep.subr.mxu0 0.0
  %1529 = vmatpush1.msra.mxu0 0.0
  %1530 = vmatprep.subr.mxu0 0.0
  %1531 = vmatpush1.msra.mxu0 0.0
  %1532 = vmatprep.subr.mxu0 0.0
  %1533 = vmatpush1.msra.mxu0 0.0
  %1534 = vmatprep.subr.mxu0 0.0
  %1535 = vmatpush1.msra.mxu0 0.0
  %1536 = vmatprep.subr.mxu0 0.0
  %1537 = vmatpush1.msra.mxu0 0.0
  %1538 = vmatprep.subr.mxu0 0.0
  %1539 = vmatpush1.msra.mxu0 0.0
  %1540 = vmatprep.subr.mxu0 0.0
  %1541 = vmatpush1.msra.mxu0 0.0
  %1542 = vmatprep.subr.mxu0 0.0
  %1543 = vmatpush1.msra.mxu0 0.0
  %1544 = vmatprep.subr.mxu0 0.0
  %1545 = vmatpush1.msra.mxu0 0.0
  %1546 = vmatprep.subr.mxu0 0.0
  %1547 = vmatpush1.msra.mxu0 0.0
  %1548 = vmatprep.subr.mxu0 0.0
  %1549 = vmatpush1.msra.mxu0 0.0
  %1550 = vmatprep.mubr.f32.mxu0 0.0
  %1551 = vmatmul.mubr.f32.gmra.mrb[0].mxu0 %v1429
  %v1552 = vpop.f32.mrb[0].mxu0
  %v1553 = vadd.f32 0.0, %v1552
  %v1554 = vpop.f32.mrb[0].mxu0
  %v1555 = vadd.f32 0.0, %v1554
  %1556 = vdwg.mxu0
  %1557 = vmatprep.subr.mxu0 0.0
  %1558 = vmatpush1.msra.mxu0 %v1440
  %1559 = vmatprep.subr.mxu0 0.0
  %1560 = vmatpush1.msra.mxu0 %v1443
  %1561 = vmatprep.subr.mxu0 0.0
  %1562 = vmatpush1.msra.mxu0 %v1446
  %1563 = vmatprep.subr.mxu0 0.0
  %1564 = vmatpush1.msra.mxu0 %v1449
  %1565 = vmatprep.subr.mxu0 0.0
  %1566 = vmatpush1.msra.mxu0 %v1452
  %1567 = vmatprep.subr.mxu0 0.0
  %1568 = vmatpush1.msra.mxu0 %v1455
  %1569 = vmatprep.subr.mxu0 0.0
  %1570 = vmatpush1.msra.mxu0 %v1458
  %1571 = vmatprep.subr.mxu0 0.0
  %1572 = vmatpush1.msra.mxu0 %v1461
  %1573 = vmatprep.subr.mxu0 0.0
  %1574 = vmatpush1.msra.mxu0 %v1464
  %1575 = vmatprep.subr.mxu0 0.0
  %1576 = vmatpush1.msra.mxu0 %v1467
  %1577 = vmatprep.subr.mxu0 0.0
  %1578 = vmatpush1.msra.mxu0 %v1470
  %1579 = vmatprep.subr.mxu0 0.0
  %1580 = vmatpush1.msra.mxu0 %v1473
  %1581 = vmatprep.subr.mxu0 0.0
  %1582 = vmatpush1.msra.mxu0 %v1476
  %1583 = vmatprep.subr.mxu0 0.0
  %1584 = vmatpush1.msra.mxu0 %v1479
  %1585 = vmatprep.subr.mxu0 0.0
  %1586 = vmatpush1.msra.mxu0 %v1482
  %1587 = vmatprep.subr.mxu0 0.0
  %1588 = vmatpush1.msra.mxu0 %v1485
  %1589 = vmatprep.subr.mxu0 0.0
  %1590 = vmatpush1.msra.mxu0 0.0
  %1591 = vmatprep.subr.mxu0 0.0
  %1592 = vmatpush1.msra.mxu0 0.0
  %1593 = vmatprep.subr.mxu0 0.0
  %1594 = vmatpush1.msra.mxu0 0.0
  %1595 = vmatprep.subr.mxu0 0.0
  %1596 = vmatpush1.msra.mxu0 0.0
  %1597 = vmatprep.subr.mxu0 0.0
  %1598 = vmatpush1.msra.mxu0 0.0
  %1599 = vmatprep.subr.mxu0 0.0
  %1600 = vmatpush1.msra.mxu0 0.0
  %1601 = vmatprep.subr.mxu0 0.0
  %1602 = vmatpush1.msra.mxu0 0.0
  %1603 = vmatprep.subr.mxu0 0.0
  %1604 = vmatpush1.msra.mxu0 0.0
  %1605 = vmatprep.subr.mxu0 0.0
  %1606 = vmatpush1.msra.mxu0 0.0
  %1607 = vmatprep.subr.mxu0 0.0
  %1608 = vmatpush1.msra.mxu0 0.0
  %1609 = vmatprep.subr.mxu0 0.0
  %1610 = vmatpush1.msra.mxu0 0.0
  %1611 = vmatprep.subr.mxu0 0.0
  %1612 = vmatpush1.msra.mxu0 0.0
  %1613 = vmatprep.subr.mxu0 0.0
  %1614 = vmatpush1.msra.mxu0 0.0
  %1615 = vmatprep.subr.mxu0 0.0
  %1616 = vmatpush1.msra.mxu0 0.0
  %1617 = vmatprep.subr.mxu0 0.0
  %1618 = vmatpush1.msra.mxu0 0.0
  %1619 = vmatprep.subr.mxu0 0.0
  %1620 = vmatpush1.msra.mxu0 0.0
  %1621 = vmatprep.mubr.f32.mxu0 0.0
  %1622 = vmatmul.mubr.f32.gmra.mrb[0].mxu0 %v1429
  %v1623 = vpop.f32.mrb[0].mxu0
  %v1624 = vadd.f32 0.0, %v1623
  %v1625 = vpop.f32.mrb[0].mxu0
  %1626 = vdwg.mxu0
  %v1627 = vadd.f32 %v1435, %v1553
  %v1628 = vxor.u32 %v1627, 2147483648
  %v1629 = vmul.f32 %v1628, 1.442695
  %v1630 = vpow.pop %v1629
  %v1631 = vadd.f32 %v1630, 1.0
  %v1632 = vrcp.pop %v1631
  %v1633 = vmul.f32 1.0, %v1632
  %v1634 = vadd.f32 %v1436, %v1555
  %v1635 = vxor.u32 %v1634, 2147483648
  %v1636 = vmul.f32 %v1635, 1.442695
  %v1637 = vpow.pop %v1636
  %v1638 = vadd.f32 %v1637, 1.0
  %v1639 = vrcp.pop %v1638
  %v1640 = vmul.f32 1.0, %v1639
  %v1641 = vadd.f32 %v1624, %v341
  %v1642 = vmul.f32 %v1633, %v1641
  %v1643 = vadd.f32 %v1437, %v1642
  %v1644 = vtanh.pop %v1643
  %v1645 = vsub.f32 %v1429, %v1644
  %v1646 = vmul.f32 %v1640, %v1645
  %v1647 = vadd.f32 %v1644, %v1646
  %s1648 = scalar_lea.vmem [#allocation3], 40
  %1649 = vst [vmem:[%s1648] sm:$0xff] %v1647
  %s1650 = smul.u32 6, 3
  %s1651 = smul.addr %s1650, 8
  %s1652 = scalar_lea.vmem [#allocation2], %s1651
  %v1653 = vld [vmem:[%s1652] sm:$0xff]
  %v1654 = vld [vmem:[%s1652 + $0x8] sm:$0xff]
  %v1655 = vld [vmem:[%s1652 + $0x10] sm:$0xff]
  %v1656 = vld [vmem:[%s2] sm:$0xff]
  %v1657 = vld [vmem:[%s2 + $0x8] sm:$0xff]
  %v1658 = vld [vmem:[%s2 + $0x10] sm:$0xff]
  %v1659 = vld [vmem:[%s2 + $0x18] sm:$0xff]
  %v1660 = vld [vmem:[%s2 + $0x20] sm:$0xff]
  %v1661 = vld [vmem:[%s2 + $0x28] sm:$0xff]
  %v1662 = vld [vmem:[%s2 + $0x30] sm:$0xff]
  %v1663 = vld [vmem:[%s2 + $0x38] sm:$0xff]
  %v1664 = vld [vmem:[%s2 + $0x40] sm:$0xff]
  %v1665 = vld [vmem:[%s2 + $0x48] sm:$0xff]
  %v1666 = vld [vmem:[%s2 + $0x50] sm:$0xff]
  %v1667 = vld [vmem:[%s2 + $0x58] sm:$0xff]
  %v1668 = vld [vmem:[%s2 + $0x60] sm:$0xff]
  %v1669 = vld [vmem:[%s2 + $0x68] sm:$0xff]
  %v1670 = vld [vmem:[%s2 + $0x70] sm:$0xff]
  %v1671 = vld [vmem:[%s2 + $0x78] sm:$0xff]
  %v1672 = vld [vmem:[%s2 + $0x80] sm:$0xff]
  %v1673 = vld [vmem:[%s2 + $0x88] sm:$0xff]
  %v1674 = vld [vmem:[%s2 + $0x90] sm:$0xff]
  %v1675 = vld [vmem:[%s2 + $0x98] sm:$0xff]
  %v1676 = vld [vmem:[%s2 + $0xa0] sm:$0xff]
  %v1677 = vld [vmem:[%s2 + $0xa8] sm:$0xff]
  %v1678 = vld [vmem:[%s2 + $0xb0] sm:$0xff]
  %v1679 = vld [vmem:[%s2 + $0xb8] sm:$0xff]
  %v1680 = vld [vmem:[%s2 + $0xc0] sm:$0xff]
  %v1681 = vld [vmem:[%s2 + $0xc8] sm:$0xff]
  %v1682 = vld [vmem:[%s2 + $0xd0] sm:$0xff]
  %v1683 = vld [vmem:[%s2 + $0xd8] sm:$0xff]
  %v1684 = vld [vmem:[%s2 + $0xe0] sm:$0xff]
  %v1685 = vld [vmem:[%s2 + $0xe8] sm:$0xff]
  %v1686 = vld [vmem:[%s2 + $0xf0] sm:$0xff]
  %v1687 = vld [vmem:[%s2 + $0xf8] sm:$0xff]
  %v1688 = vld [vmem:[%s2 + $0x100] sm:$0xff]
  %v1689 = vld [vmem:[%s2 + $0x108] sm:$0xff]
  %v1690 = vld [vmem:[%s2 + $0x110] sm:$0xff]
  %v1691 = vld [vmem:[%s2 + $0x118] sm:$0xff]
  %v1692 = vld [vmem:[%s2 + $0x120] sm:$0xff]
  %v1693 = vld [vmem:[%s2 + $0x128] sm:$0xff]
  %v1694 = vld [vmem:[%s2 + $0x130] sm:$0xff]
  %v1695 = vld [vmem:[%s2 + $0x138] sm:$0xff]
  %v1696 = vld [vmem:[%s2 + $0x140] sm:$0xff]
  %v1697 = vld [vmem:[%s2 + $0x148] sm:$0xff]
  %v1698 = vld [vmem:[%s2 + $0x150] sm:$0xff]
  %v1699 = vld [vmem:[%s2 + $0x158] sm:$0xff]
  %v1700 = vld [vmem:[%s2 + $0x160] sm:$0xff]
  %v1701 = vld [vmem:[%s2 + $0x168] sm:$0xff]
  %v1702 = vld [vmem:[%s2 + $0x170] sm:$0xff]
  %v1703 = vld [vmem:[%s2 + $0x178] sm:$0xff]
  %1704 = vmatprep.subr.mxu0 %v1657
  %1705 = vmatpush1.msra.mxu0 %v1656
  %1706 = vmatprep.subr.mxu0 %v1660
  %1707 = vmatpush1.msra.mxu0 %v1659
  %1708 = vmatprep.subr.mxu0 %v1663
  %1709 = vmatpush1.msra.mxu0 %v1662
  %1710 = vmatprep.subr.mxu0 %v1666
  %1711 = vmatpush1.msra.mxu0 %v1665
  %1712 = vmatprep.subr.mxu0 %v1669
  %1713 = vmatpush1.msra.mxu0 %v1668
  %1714 = vmatprep.subr.mxu0 %v1672
  %1715 = vmatpush1.msra.mxu0 %v1671
  %1716 = vmatprep.subr.mxu0 %v1675
  %1717 = vmatpush1.msra.mxu0 %v1674
  %1718 = vmatprep.subr.mxu0 %v1678
  %1719 = vmatpush1.msra.mxu0 %v1677
  %1720 = vmatprep.subr.mxu0 %v1681
  %1721 = vmatpush1.msra.mxu0 %v1680
  %1722 = vmatprep.subr.mxu0 %v1684
  %1723 = vmatpush1.msra.mxu0 %v1683
  %1724 = vmatprep.subr.mxu0 %v1687
  %1725 = vmatpush1.msra.mxu0 %v1686
  %1726 = vmatprep.subr.mxu0 %v1690
  %1727 = vmatpush1.msra.mxu0 %v1689
  %1728 = vmatprep.subr.mxu0 %v1693
  %1729 = vmatpush1.msra.mxu0 %v1692
  %1730 = vmatprep.subr.mxu0 %v1696
  %1731 = vmatpush1.msra.mxu0 %v1695
  %1732 = vmatprep.subr.mxu0 %v1699
  %1733 = vmatpush1.msra.mxu0 %v1698
  %1734 = vmatprep.subr.mxu0 %v1702
  %1735 = vmatpush1.msra.mxu0 %v1701
  %1736 = vmatprep.subr.mxu0 0.0
  %1737 = vmatpush1.msra.mxu0 0.0
  %1738 = vmatprep.subr.mxu0 0.0
  %1739 = vmatpush1.msra.mxu0 0.0
  %1740 = vmatprep.subr.mxu0 0.0
  %1741 = vmatpush1.msra.mxu0 0.0
  %1742 = vmatprep.subr.mxu0 0.0
  %1743 = vmatpush1.msra.mxu0 0.0
  %1744 = vmatprep.subr.mxu0 0.0
  %1745 = vmatpush1.msra.mxu0 0.0
  %1746 = vmatprep.subr.mxu0 0.0
  %1747 = vmatpush1.msra.mxu0 0.0
  %1748 = vmatprep.subr.mxu0 0.0
  %1749 = vmatpush1.msra.mxu0 0.0
  %1750 = vmatprep.subr.mxu0 0.0
  %1751 = vmatpush1.msra.mxu0 0.0
  %1752 = vmatprep.subr.mxu0 0.0
  %1753 = vmatpush1.msra.mxu0 0.0
  %1754 = vmatprep.subr.mxu0 0.0
  %1755 = vmatpush1.msra.mxu0 0.0
  %1756 = vmatprep.subr.mxu0 0.0
  %1757 = vmatpush1.msra.mxu0 0.0
  %1758 = vmatprep.subr.mxu0 0.0
  %1759 = vmatpush1.msra.mxu0 0.0
  %1760 = vmatprep.subr.mxu0 0.0
  %1761 = vmatpush1.msra.mxu0 0.0
  %1762 = vmatprep.subr.mxu0 0.0
  %1763 = vmatpush1.msra.mxu0 0.0
  %1764 = vmatprep.subr.mxu0 0.0
  %1765 = vmatpush1.msra.mxu0 0.0
  %1766 = vmatprep.subr.mxu0 0.0
  %1767 = vmatpush1.msra.mxu0 0.0
  %1768 = vmatprep.mubr.f32.mxu0 0.0
  %1769 = vmatmul.mubr.f32.gmra.mrb[0].mxu0 %v1647
  %v1770 = vpop.f32.mrb[0].mxu0
  %v1771 = vadd.f32 0.0, %v1770
  %v1772 = vpop.f32.mrb[0].mxu0
  %v1773 = vadd.f32 0.0, %v1772
  %1774 = vdwg.mxu0
  %1775 = vmatprep.subr.mxu0 0.0
  %1776 = vmatpush1.msra.mxu0 %v1658
  %1777 = vmatprep.subr.mxu0 0.0
  %1778 = vmatpush1.msra.mxu0 %v1661
  %1779 = vmatprep.subr.mxu0 0.0
  %1780 = vmatpush1.msra.mxu0 %v1664
  %1781 = vmatprep.subr.mxu0 0.0
  %1782 = vmatpush1.msra.mxu0 %v1667
  %1783 = vmatprep.subr.mxu0 0.0
  %1784 = vmatpush1.msra.mxu0 %v1670
  %1785 = vmatprep.subr.mxu0 0.0
  %1786 = vmatpush1.msra.mxu0 %v1673
  %1787 = vmatprep.subr.mxu0 0.0
  %1788 = vmatpush1.msra.mxu0 %v1676
  %1789 = vmatprep.subr.mxu0 0.0
  %1790 = vmatpush1.msra.mxu0 %v1679
  %1791 = vmatprep.subr.mxu0 0.0
  %1792 = vmatpush1.msra.mxu0 %v1682
  %1793 = vmatprep.subr.mxu0 0.0
  %1794 = vmatpush1.msra.mxu0 %v1685
  %1795 = vmatprep.subr.mxu0 0.0
  %1796 = vmatpush1.msra.mxu0 %v1688
  %1797 = vmatprep.subr.mxu0 0.0
  %1798 = vmatpush1.msra.mxu0 %v1691
  %1799 = vmatprep.subr.mxu0 0.0
  %1800 = vmatpush1.msra.mxu0 %v1694
  %1801 = vmatprep.subr.mxu0 0.0
  %1802 = vmatpush1.msra.mxu0 %v1697
  %1803 = vmatprep.subr.mxu0 0.0
  %1804 = vmatpush1.msra.mxu0 %v1700
  %1805 = vmatprep.subr.mxu0 0.0
  %1806 = vmatpush1.msra.mxu0 %v1703
  %1807 = vmatprep.subr.mxu0 0.0
  %1808 = vmatpush1.msra.mxu0 0.0
  %1809 = vmatprep.subr.mxu0 0.0
  %1810 = vmatpush1.msra.mxu0 0.0
  %1811 = vmatprep.subr.mxu0 0.0
  %1812 = vmatpush1.msra.mxu0 0.0
  %1813 = vmatprep.subr.mxu0 0.0
  %1814 = vmatpush1.msra.mxu0 0.0
  %1815 = vmatprep.subr.mxu0 0.0
  %1816 = vmatpush1.msra.mxu0 0.0
  %1817 = vmatprep.subr.mxu0 0.0
  %1818 = vmatpush1.msra.mxu0 0.0
  %1819 = vmatprep.subr.mxu0 0.0
  %1820 = vmatpush1.msra.mxu0 0.0
  %1821 = vmatprep.subr.mxu0 0.0
  %1822 = vmatpush1.msra.mxu0 0.0
  %1823 = vmatprep.subr.mxu0 0.0
  %1824 = vmatpush1.msra.mxu0 0.0
  %1825 = vmatprep.subr.mxu0 0.0
  %1826 = vmatpush1.msra.mxu0 0.0
  %1827 = vmatprep.subr.mxu0 0.0
  %1828 = vmatpush1.msra.mxu0 0.0
  %1829 = vmatprep.subr.mxu0 0.0
  %1830 = vmatpush1.msra.mxu0 0.0
  %1831 = vmatprep.subr.mxu0 0.0
  %1832 = vmatpush1.msra.mxu0 0.0
  %1833 = vmatprep.subr.mxu0 0.0
  %1834 = vmatpush1.msra.mxu0 0.0
  %1835 = vmatprep.subr.mxu0 0.0
  %1836 = vmatpush1.msra.mxu0 0.0
  %1837 = vmatprep.subr.mxu0 0.0
  %1838 = vmatpush1.msra.mxu0 0.0
  %1839 = vmatprep.mubr.f32.mxu0 0.0
  %1840 = vmatmul.mubr.f32.gmra.mrb[0].mxu0 %v1647
  %v1841 = vpop.f32.mrb[0].mxu0
  %v1842 = vadd.f32 0.0, %v1841
  %v1843 = vpop.f32.mrb[0].mxu0
  %1844 = vdwg.mxu0
  %v1845 = vadd.f32 %v1653, %v1771
  %v1846 = vxor.u32 %v1845, 2147483648
  %v1847 = vmul.f32 %v1846, 1.442695
  %v1848 = vpow.pop %v1847
  %v1849 = vadd.f32 %v1848, 1.0
  %v1850 = vrcp.pop %v1849
  %v1851 = vmul.f32 1.0, %v1850
  %v1852 = vadd.f32 %v1654, %v1773
  %v1853 = vxor.u32 %v1852, 2147483648
  %v1854 = vmul.f32 %v1853, 1.442695
  %v1855 = vpow.pop %v1854
  %v1856 = vadd.f32 %v1855, 1.0
  %v1857 = vrcp.pop %v1856
  %v1858 = vmul.f32 1.0, %v1857
  %v1859 = vadd.f32 %v1842, %v341
  %v1860 = vmul.f32 %v1851, %v1859
  %v1861 = vadd.f32 %v1655, %v1860
  %v1862 = vtanh.pop %v1861
  %v1863 = vsub.f32 %v1647, %v1862
  %v1864 = vmul.f32 %v1858, %v1863
  %v1865 = vadd.f32 %v1862, %v1864
  %s1866 = scalar_lea.vmem [#allocation3], 48
  %1867 = vst [vmem:[%s1866] sm:$0xff] %v1865
  %s1868 = smul.u32 7, 3
  %s1869 = smul.addr %s1868, 8
  %s1870 = scalar_lea.vmem [#allocation2], %s1869
  %v1871 = vld [vmem:[%s1870] sm:$0xff]
  %v1872 = vld [vmem:[%s1870 + $0x8] sm:$0xff]
  %v1873 = vld [vmem:[%s1870 + $0x10] sm:$0xff]
  %v1874 = vld [vmem:[%s2] sm:$0xff]
  %v1875 = vld [vmem:[%s2 + $0x8] sm:$0xff]
  %v1876 = vld [vmem:[%s2 + $0x10] sm:$0xff]
  %v1877 = vld [vmem:[%s2 + $0x18] sm:$0xff]
  %v1878 = vld [vmem:[%s2 + $0x20] sm:$0xff]
  %v1879 = vld [vmem:[%s2 + $0x28] sm:$0xff]
  %v1880 = vld [vmem:[%s2 + $0x30] sm:$0xff]
  %v1881 = vld [vmem:[%s2 + $0x38] sm:$0xff]
  %v1882 = vld [vmem:[%s2 + $0x40] sm:$0xff]
  %v1883 = vld [vmem:[%s2 + $0x48] sm:$0xff]
  %v1884 = vld [vmem:[%s2 + $0x50] sm:$0xff]
  %v1885 = vld [vmem:[%s2 + $0x58] sm:$0xff]
  %v1886 = vld [vmem:[%s2 + $0x60] sm:$0xff]
  %v1887 = vld [vmem:[%s2 + $0x68] sm:$0xff]
  %v1888 = vld [vmem:[%s2 + $0x70] sm:$0xff]
  %v1889 = vld [vmem:[%s2 + $0x78] sm:$0xff]
  %v1890 = vld [vmem:[%s2 + $0x80] sm:$0xff]
  %v1891 = vld [vmem:[%s2 + $0x88] sm:$0xff]
  %v1892 = vld [vmem:[%s2 + $0x90] sm:$0xff]
  %v1893 = vld [vmem:[%s2 + $0x98] sm:$0xff]
  %v1894 = vld [vmem:[%s2 + $0xa0] sm:$0xff]
  %v1895 = vld [vmem:[%s2 + $0xa8] sm:$0xff]
  %v1896 = vld [vmem:[%s2 + $0xb0] sm:$0xff]
  %v1897 = vld [vmem:[%s2 + $0xb8] sm:$0xff]
  %v1898 = vld [vmem:[%s2 + $0xc0] sm:$0xff]
  %v1899 = vld [vmem:[%s2 + $0xc8] sm:$0xff]
  %v1900 = vld [vmem:[%s2 + $0xd0] sm:$0xff]
  %v1901 = vld [vmem:[%s2 + $0xd8] sm:$0xff]
  %v1902 = vld [vmem:[%s2 + $0xe0] sm:$0xff]
  %v1903 = vld [vmem:[%s2 + $0xe8] sm:$0xff]
  %v1904 = vld [vmem:[%s2 + $0xf0] sm:$0xff]
  %v1905 = vld [vmem:[%s2 + $0xf8] sm:$0xff]
  %v1906 = vld [vmem:[%s2 + $0x100] sm:$0xff]
  %v1907 = vld [vmem:[%s2 + $0x108] sm:$0xff]
  %v1908 = vld [vmem:[%s2 + $0x110] sm:$0xff]
  %v1909 = vld [vmem:[%s2 + $0x118] sm:$0xff]
  %v1910 = vld [vmem:[%s2 + $0x120] sm:$0xff]
  %v1911 = vld [vmem:[%s2 + $0x128] sm:$0xff]
  %v1912 = vld [vmem:[%s2 + $0x130] sm:$0xff]
  %v1913 = vld [vmem:[%s2 + $0x138] sm:$0xff]
  %v1914 = vld [vmem:[%s2 + $0x140] sm:$0xff]
  %v1915 = vld [vmem:[%s2 + $0x148] sm:$0xff]
  %v1916 = vld [vmem:[%s2 + $0x150] sm:$0xff]
  %v1917 = vld [vmem:[%s2 + $0x158] sm:$0xff]
  %v1918 = vld [vmem:[%s2 + $0x160] sm:$0xff]
  %v1919 = vld [vmem:[%s2 + $0x168] sm:$0xff]
  %v1920 = vld [vmem:[%s2 + $0x170] sm:$0xff]
  %v1921 = vld [vmem:[%s2 + $0x178] sm:$0xff]
  %1922 = vmatprep.subr.mxu0 %v1875
  %1923 = vmatpush1.msra.mxu0 %v1874
  %1924 = vmatprep.subr.mxu0 %v1878
  %1925 = vmatpush1.msra.mxu0 %v1877
  %1926 = vmatprep.subr.mxu0 %v1881
  %1927 = vmatpush1.msra.mxu0 %v1880
  %1928 = vmatprep.subr.mxu0 %v1884
  %1929 = vmatpush1.msra.mxu0 %v1883
  %1930 = vmatprep.subr.mxu0 %v1887
  %1931 = vmatpush1.msra.mxu0 %v1886
  %1932 = vmatprep.subr.mxu0 %v1890
  %1933 = vmatpush1.msra.mxu0 %v1889
  %1934 = vmatprep.subr.mxu0 %v1893
  %1935 = vmatpush1.msra.mxu0 %v1892
  %1936 = vmatprep.subr.mxu0 %v1896
  %1937 = vmatpush1.msra.mxu0 %v1895
  %1938 = vmatprep.subr.mxu0 %v1899
  %1939 = vmatpush1.msra.mxu0 %v1898
  %1940 = vmatprep.subr.mxu0 %v1902
  %1941 = vmatpush1.msra.mxu0 %v1901
  %1942 = vmatprep.subr.mxu0 %v1905
  %1943 = vmatpush1.msra.mxu0 %v1904
  %1944 = vmatprep.subr.mxu0 %v1908
  %1945 = vmatpush1.msra.mxu0 %v1907
  %1946 = vmatprep.subr.mxu0 %v1911
  %1947 = vmatpush1.msra.mxu0 %v1910
  %1948 = vmatprep.subr.mxu0 %v1914
  %1949 = vmatpush1.msra.mxu0 %v1913
  %1950 = vmatprep.subr.mxu0 %v1917
  %1951 = vmatpush1.msra.mxu0 %v1916
  %1952 = vmatprep.subr.mxu0 %v1920
  %1953 = vmatpush1.msra.mxu0 %v1919
  %1954 = vmatprep.subr.mxu0 0.0
  %1955 = vmatpush1.msra.mxu0 0.0
  %1956 = vmatprep.subr.mxu0 0.0
  %1957 = vmatpush1.msra.mxu0 0.0
  %1958 = vmatprep.subr.mxu0 0.0
  %1959 = vmatpush1.msra.mxu0 0.0
  %1960 = vmatprep.subr.mxu0 0.0
  %1961 = vmatpush1.msra.mxu0 0.0
  %1962 = vmatprep.subr.mxu0 0.0
  %1963 = vmatpush1.msra.mxu0 0.0
  %1964 = vmatprep.subr.mxu0 0.0
  %1965 = vmatpush1.msra.mxu0 0.0
  %1966 = vmatprep.subr.mxu0 0.0
  %1967 = vmatpush1.msra.mxu0 0.0
  %1968 = vmatprep.subr.mxu0 0.0
  %1969 = vmatpush1.msra.mxu0 0.0
  %1970 = vmatprep.subr.mxu0 0.0
  %1971 = vmatpush1.msra.mxu0 0.0
  %1972 = vmatprep.subr.mxu0 0.0
  %1973 = vmatpush1.msra.mxu0 0.0
  %1974 = vmatprep.subr.mxu0 0.0
  %1975 = vmatpush1.msra.mxu0 0.0
  %1976 = vmatprep.subr.mxu0 0.0
  %1977 = vmatpush1.msra.mxu0 0.0
  %1978 = vmatprep.subr.mxu0 0.0
  %1979 = vmatpush1.msra.mxu0 0.0
  %1980 = vmatprep.subr.mxu0 0.0
  %1981 = vmatpush1.msra.mxu0 0.0
  %1982 = vmatprep.subr.mxu0 0.0
  %1983 = vmatpush1.msra.mxu0 0.0
  %1984 = vmatprep.subr.mxu0 0.0
  %1985 = vmatpush1.msra.mxu0 0.0
  %1986 = vmatprep.mubr.f32.mxu0 0.0
  %1987 = vmatmul.mubr.f32.gmra.mrb[0].mxu0 %v1865
  %v1988 = vpop.f32.mrb[0].mxu0
  %v1989 = vadd.f32 0.0, %v1988
  %v1990 = vpop.f32.mrb[0].mxu0
  %v1991 = vadd.f32 0.0, %v1990
  %1992 = vdwg.mxu0
  %1993 = vmatprep.subr.mxu0 0.0
  %1994 = vmatpush1.msra.mxu0 %v1876
  %1995 = vmatprep.subr.mxu0 0.0
  %1996 = vmatpush1.msra.mxu0 %v1879
  %1997 = vmatprep.subr.mxu0 0.0
  %1998 = vmatpush1.msra.mxu0 %v1882
  %1999 = vmatprep.subr.mxu0 0.0
  %2000 = vmatpush1.msra.mxu0 %v1885
  %2001 = vmatprep.subr.mxu0 0.0
  %2002 = vmatpush1.msra.mxu0 %v1888
  %2003 = vmatprep.subr.mxu0 0.0
  %2004 = vmatpush1.msra.mxu0 %v1891
  %2005 = vmatprep.subr.mxu0 0.0
  %2006 = vmatpush1.msra.mxu0 %v1894
  %2007 = vmatprep.subr.mxu0 0.0
  %2008 = vmatpush1.msra.mxu0 %v1897
  %2009 = vmatprep.subr.mxu0 0.0
  %2010 = vmatpush1.msra.mxu0 %v1900
  %2011 = vmatprep.subr.mxu0 0.0
  %2012 = vmatpush1.msra.mxu0 %v1903
  %2013 = vmatprep.subr.mxu0 0.0
  %2014 = vmatpush1.msra.mxu0 %v1906
  %2015 = vmatprep.subr.mxu0 0.0
  %2016 = vmatpush1.msra.mxu0 %v1909
  %2017 = vmatprep.subr.mxu0 0.0
  %2018 = vmatpush1.msra.mxu0 %v1912
  %2019 = vmatprep.subr.mxu0 0.0
  %2020 = vmatpush1.msra.mxu0 %v1915
  %2021 = vmatprep.subr.mxu0 0.0
  %2022 = vmatpush1.msra.mxu0 %v1918
  %2023 = vmatprep.subr.mxu0 0.0
  %2024 = vmatpush1.msra.mxu0 %v1921
  %2025 = vmatprep.subr.mxu0 0.0
  %2026 = vmatpush1.msra.mxu0 0.0
  %2027 = vmatprep.subr.mxu0 0.0
  %2028 = vmatpush1.msra.mxu0 0.0
  %2029 = vmatprep.subr.mxu0 0.0
  %2030 = vmatpush1.msra.mxu0 0.0
  %2031 = vmatprep.subr.mxu0 0.0
  %2032 = vmatpush1.msra.mxu0 0.0
  %2033 = vmatprep.subr.mxu0 0.0
  %2034 = vmatpush1.msra.mxu0 0.0
  %2035 = vmatprep.subr.mxu0 0.0
  %2036 = vmatpush1.msra.mxu0 0.0
  %2037 = vmatprep.subr.mxu0 0.0
  %2038 = vmatpush1.msra.mxu0 0.0
  %2039 = vmatprep.subr.mxu0 0.0
  %2040 = vmatpush1.msra.mxu0 0.0
  %2041 = vmatprep.subr.mxu0 0.0
  %2042 = vmatpush1.msra.mxu0 0.0
  %2043 = vmatprep.subr.mxu0 0.0
  %2044 = vmatpush1.msra.mxu0 0.0
  %2045 = vmatprep.subr.mxu0 0.0
  %2046 = vmatpush1.msra.mxu0 0.0
  %2047 = vmatprep.subr.mxu0 0.0
  %2048 = vmatpush1.msra.mxu0 0.0
  %2049 = vmatprep.subr.mxu0 0.0
  %2050 = vmatpush1.msra.mxu0 0.0
  %2051 = vmatprep.subr.mxu0 0.0
  %2052 = vmatpush1.msra.mxu0 0.0
  %2053 = vmatprep.subr.mxu0 0.0
  %2054 = vmatpush1.msra.mxu0 0.0
  %2055 = vmatprep.subr.mxu0 0.0
  %2056 = vmatpush1.msra.mxu0 0.0
  %2057 = vmatprep.mubr.f32.mxu0 0.0
  %2058 = vmatmul.mubr.f32.gmra.mrb[0].mxu0 %v1865
  %v2059 = vpop.f32.mrb[0].mxu0
  %v2060 = vadd.f32 0.0, %v2059
  %v2061 = vpop.f32.mrb[0].mxu0
  %2062 = vdwg.mxu0
  %v2063 = vadd.f32 %v1871, %v1989
  %v2064 = vxor.u32 %v2063, 2147483648
  %v2065 = vmul.f32 %v2064, 1.442695
  %v2066 = vpow.pop %v2065
  %v2067 = vadd.f32 %v2066, 1.0
  %v2068 = vrcp.pop %v2067
  %v2069 = vmul.f32 1.0, %v2068
  %v2070 = vadd.f32 %v1872, %v1991
  %v2071 = vxor.u32 %v2070, 2147483648
  %v2072 = vmul.f32 %v2071, 1.442695
  %v2073 = vpow.pop %v2072
  %v2074 = vadd.f32 %v2073, 1.0
  %v2075 = vrcp.pop %v2074
  %v2076 = vmul.f32 1.0, %v2075
  %v2077 = vadd.f32 %v2060, %v341
  %v2078 = vmul.f32 %v2069, %v2077
  %v2079 = vadd.f32 %v1873, %v2078
  %v2080 = vtanh.pop %v2079
  %v2081 = vsub.f32 %v1865, %v2080
  %v2082 = vmul.f32 %v2076, %v2081
  %v2083 = vadd.f32 %v2080, %v2082
  %s2084 = scalar_lea.vmem [#allocation3], 56
  %2085 = vst [vmem:[%s2084] sm:$0xff] %v2083
  %v2086 = vld [vmem:[#allocation3] sm:$0xff]
  %v2087 = vld [vmem:[#allocation3 + $0x8] sm:$0xff]
  %v2088 = vld [vmem:[#allocation3 + $0x10] sm:$0xff]
  %v2089 = vld [vmem:[#allocation3 + $0x18] sm:$0xff]
  %v2090 = vld [vmem:[#allocation3 + $0x20] sm:$0xff]
  %v2091 = vld [vmem:[#allocation3 + $0x28] sm:$0xff]
  %v2092 = vld [vmem:[#allocation3 + $0x30] sm:$0xff]
  %v2093 = vld [vmem:[#allocation3 + $0x38] sm:$0xff]
  %v2094 = vld [vmem:[%s5] sm:$0xff]
  %v2095 = vld [vmem:[%s5 + $0x8] sm:$0xff]
  %v2096 = vld [vmem:[%s5 + $0x10] sm:$0xff]
  %v2097 = vld [vmem:[%s5 + $0x18] sm:$0xff]
  %v2098 = vld [vmem:[%s5 + $0x20] sm:$0xff]
  %v2099 = vld [vmem:[%s5 + $0x28] sm:$0xff]
  %v2100 = vld [vmem:[%s5 + $0x30] sm:$0xff]
  %v2101 = vld [vmem:[%s5 + $0x38] sm:$0xff]
  %v2102 = vld [vmem:[%s5 + $0x40] sm:$0xff]
  %v2103 = vld [vmem:[%s5 + $0x48] sm:$0xff]
  %v2104 = vld [vmem:[%s5 + $0x50] sm:$0xff]
  %v2105 = vld [vmem:[%s5 + $0x58] sm:$0xff]
  %v2106 = vld [vmem:[%s5 + $0x60] sm:$0xff]
  %v2107 = vld [vmem:[%s5 + $0x68] sm:$0xff]
  %v2108 = vld [vmem:[%s5 + $0x70] sm:$0xff]
  %v2109 = vld [vmem:[%s5 + $0x78] sm:$0xff]
  %v2110 = vld [vmem:[%s5 + $0x80] sm:$0xff]
  %v2111 = vld [vmem:[%s5 + $0x88] sm:$0xff]
  %v2112 = vld [vmem:[%s5 + $0x90] sm:$0xff]
  %v2113 = vld [vmem:[%s5 + $0x98] sm:$0xff]
  %v2114 = vld [vmem:[%s5 + $0xa0] sm:$0xff]
  %v2115 = vld [vmem:[%s5 + $0xa8] sm:$0xff]
  %v2116 = vld [vmem:[%s5 + $0xb0] sm:$0xff]
  %v2117 = vld [vmem:[%s5 + $0xb8] sm:$0xff]
  %v2118 = vld [vmem:[%s5 + $0xc0] sm:$0xff]
  %v2119 = vld [vmem:[%s5 + $0xc8] sm:$0xff]
  %v2120 = vld [vmem:[%s5 + $0xd0] sm:$0xff]
  %v2121 = vld [vmem:[%s5 + $0xd8] sm:$0xff]
  %v2122 = vld [vmem:[%s5 + $0xe0] sm:$0xff]
  %v2123 = vld [vmem:[%s5 + $0xe8] sm:$0xff]
  %v2124 = vld [vmem:[%s5 + $0xf0] sm:$0xff]
  %v2125 = vld [vmem:[%s5 + $0xf8] sm:$0xff]
  %v2126 = vld [vmem:[%s5 + $0x100] sm:$0xff]
  %v2127 = vld [vmem:[%s5 + $0x108] sm:$0xff]
  %v2128 = vld [vmem:[%s5 + $0x110] sm:$0xff]
  %v2129 = vld [vmem:[%s5 + $0x118] sm:$0xff]
  %v2130 = vld [vmem:[%s5 + $0x120] sm:$0xff]
  %v2131 = vld [vmem:[%s5 + $0x128] sm:$0xff]
  %v2132 = vld [vmem:[%s5 + $0x130] sm:$0xff]
  %v2133 = vld [vmem:[%s5 + $0x138] sm:$0xff]
  %v2134 = vld [vmem:[%s5 + $0x140] sm:$0xff]
  %v2135 = vld [vmem:[%s5 + $0x148] sm:$0xff]
  %v2136 = vld [vmem:[%s5 + $0x150] sm:$0xff]
  %v2137 = vld [vmem:[%s5 + $0x158] sm:$0xff]
  %v2138 = vld [vmem:[%s5 + $0x160] sm:$0xff]
  %v2139 = vld [vmem:[%s5 + $0x168] sm:$0xff]
  %v2140 = vld [vmem:[%s5 + $0x170] sm:$0xff]
  %v2141 = vld [vmem:[%s5 + $0x178] sm:$0xff]
  %v2142 = vld [vmem:[%s7] sm:$0x7]
  %v2144 = vlaneseq
  %v2145 = vshrl.u32 %v2144, 7
  %v2146 = vsub.s32 0, %v2145
  %v2147 = vrot.slane %v2142, %v2146
  %v2148 = vlaneseq
  %v2149 = vshrl.u32 %v2148, 7
  %v2150 = vsub.s32 1, %v2149
  %v2151 = vrot.slane %v2142, %v2150
  %v2152 = vlaneseq
  %v2153 = vshrl.u32 %v2152, 7
  %v2154 = vsub.s32 2, %v2153
  %v2155 = vrot.slane %v2142, %v2154
  %2159 = vmatprep.subr.mxu0 %v2095
  %2160 = vmatpush1.msra.mxu0 %v2094
  %2161 = vmatprep.subr.mxu0 %v2098
  %2162 = vmatpush1.msra.mxu0 %v2097
  %2163 = vmatprep.subr.mxu0 %v2101
  %2164 = vmatpush1.msra.mxu0 %v2100
  %2165 = vmatprep.subr.mxu0 %v2104
  %2166 = vmatpush1.msra.mxu0 %v2103
  %2167 = vmatprep.subr.mxu0 %v2107
  %2168 = vmatpush1.msra.mxu0 %v2106
  %2169 = vmatprep.subr.mxu0 %v2110
  %2170 = vmatpush1.msra.mxu0 %v2109
  %2171 = vmatprep.subr.mxu0 %v2113
  %2172 = vmatpush1.msra.mxu0 %v2112
  %2173 = vmatprep.subr.mxu0 %v2116
  %2174 = vmatpush1.msra.mxu0 %v2115
  %2175 = vmatprep.subr.mxu0 %v2119
  %2176 = vmatpush1.msra.mxu0 %v2118
  %2177 = vmatprep.subr.mxu0 %v2122
  %2178 = vmatpush1.msra.mxu0 %v2121
  %2179 = vmatprep.subr.mxu0 %v2125
  %2180 = vmatpush1.msra.mxu0 %v2124
  %2181 = vmatprep.subr.mxu0 %v2128
  %2182 = vmatpush1.msra.mxu0 %v2127
  %2183 = vmatprep.subr.mxu0 %v2131
  %2184 = vmatpush1.msra.mxu0 %v2130
  %2185 = vmatprep.subr.mxu0 %v2134
  %2186 = vmatpush1.msra.mxu0 %v2133
  %2187 = vmatprep.subr.mxu0 %v2137
  %2188 = vmatpush1.msra.mxu0 %v2136
  %2189 = vmatprep.subr.mxu0 %v2140
  %2190 = vmatpush1.msra.mxu0 %v2139
  %2191 = vmatprep.subr.mxu0 0.0
  %2192 = vmatpush1.msra.mxu0 0.0
  %2193 = vmatprep.subr.mxu0 0.0
  %2194 = vmatpush1.msra.mxu0 0.0
  %2195 = vmatprep.subr.mxu0 0.0
  %2196 = vmatpush1.msra.mxu0 0.0
  %2197 = vmatprep.subr.mxu0 0.0
  %2198 = vmatpush1.msra.mxu0 0.0
  %2199 = vmatprep.subr.mxu0 0.0
  %2200 = vmatpush1.msra.mxu0 0.0
  %2201 = vmatprep.subr.mxu0 0.0
  %2202 = vmatpush1.msra.mxu0 0.0
  %2203 = vmatprep.subr.mxu0 0.0
  %2204 = vmatpush1.msra.mxu0 0.0
  %2205 = vmatprep.subr.mxu0 0.0
  %2206 = vmatpush1.msra.mxu0 0.0
  %2207 = vmatprep.subr.mxu0 0.0
  %2208 = vmatpush1.msra.mxu0 0.0
  %2209 = vmatprep.subr.mxu0 0.0
  %2210 = vmatpush1.msra.mxu0 0.0
  %2211 = vmatprep.subr.mxu0 0.0
  %2212 = vmatpush1.msra.mxu0 0.0
  %2213 = vmatprep.subr.mxu0 0.0
  %2214 = vmatpush1.msra.mxu0 0.0
  %2215 = vmatprep.subr.mxu0 0.0
  %2216 = vmatpush1.msra.mxu0 0.0
  %2217 = vmatprep.subr.mxu0 0.0
  %2218 = vmatpush1.msra.mxu0 0.0
  %2219 = vmatprep.subr.mxu0 0.0
  %2220 = vmatpush1.msra.mxu0 0.0
  %2221 = vmatprep.subr.mxu0 0.0
  %2222 = vmatpush1.msra.mxu0 0.0
  %2223 = vmatprep.mubr.f32.mxu0 0.0
  %2224 = vmatmul.mubr.f32.gmra.mrb[0].mxu0 %v2086
  %v2225 = vpop.f32.mrb[0].mxu0
  %v2226 = vadd.f32 %v2147, %v2225
  %v2227 = vpop.f32.mrb[0].mxu0
  %v2228 = vadd.f32 %v2151, %v2227
  %2229 = vmatprep.mubr.f32.mxu0 0.0
  %2230 = vmatmul.mubr.f32.gmra.mrb[0].mxu0 %v2087
  %v2231 = vpop.f32.mrb[0].mxu0
  %v2232 = vadd.f32 %v2147, %v2231
  %v2233 = vpop.f32.mrb[0].mxu0
  %v2234 = vadd.f32 %v2151, %v2233
  %2235 = vmatprep.mubr.f32.mxu0 0.0
  %2236 = vmatmul.mubr.f32.gmra.mrb[0].mxu0 %v2088
  %v2237 = vpop.f32.mrb[0].mxu0
  %v2238 = vadd.f32 %v2147, %v2237
  %v2239 = vpop.f32.mrb[0].mxu0
  %v2240 = vadd.f32 %v2151, %v2239
  %2241 = vmatprep.mubr.f32.mxu0 0.0
  %2242 = vmatmul.mubr.f32.gmra.mrb[0].mxu0 %v2089
  %v2243 = vpop.f32.mrb[0].mxu0
  %v2244 = vadd.f32 %v2147, %v2243
  %v2245 = vpop.f32.mrb[0].mxu0
  %v2246 = vadd.f32 %v2151, %v2245
  %2247 = vmatprep.mubr.f32.mxu0 0.0
  %2248 = vmatmul.mubr.f32.gmra.mrb[0].mxu0 %v2090
  %v2249 = vpop.f32.mrb[0].mxu0
  %v2250 = vadd.f32 %v2147, %v2249
  %v2251 = vpop.f32.mrb[0].mxu0
  %v2252 = vadd.f32 %v2151, %v2251
  %2253 = vmatprep.mubr.f32.mxu0 0.0
  %2254 = vmatmul.mubr.f32.gmra.mrb[0].mxu0 %v2091
  %v2255 = vpop.f32.mrb[0].mxu0
  %v2256 = vadd.f32 %v2147, %v2255
  %v2257 = vpop.f32.mrb[0].mxu0
  %v2258 = vadd.f32 %v2151, %v2257
  %2259 = vmatprep.mubr.f32.mxu0 0.0
  %2260 = vmatmul.mubr.f32.gmra.mrb[0].mxu0 %v2092
  %v2261 = vpop.f32.mrb[0].mxu0
  %v2262 = vadd.f32 %v2147, %v2261
  %v2263 = vpop.f32.mrb[0].mxu0
  %v2264 = vadd.f32 %v2151, %v2263
  %2265 = vmatprep.mubr.f32.mxu0 0.0
  %2266 = vmatmul.mubr.f32.gmra.mrb[0].mxu0 %v2093
  %v2267 = vpop.f32.mrb[0].mxu0
  %v2268 = vadd.f32 %v2147, %v2267
  %v2269 = vpop.f32.mrb[0].mxu0
  %v2270 = vadd.f32 %v2151, %v2269
  %2271 = vdwg.mxu0
  %2272 = vmatprep.subr.mxu0 0.0
  %2273 = vmatpush1.msra.mxu0 %v2096
  %2274 = vmatprep.subr.mxu0 0.0
  %2275 = vmatpush1.msra.mxu0 %v2099
  %2276 = vmatprep.subr.mxu0 0.0
  %2277 = vmatpush1.msra.mxu0 %v2102
  %2278 = vmatprep.subr.mxu0 0.0
  %2279 = vmatpush1.msra.mxu0 %v2105
  %2280 = vmatprep.subr.mxu0 0.0
  %2281 = vmatpush1.msra.mxu0 %v2108
  %2282 = vmatprep.subr.mxu0 0.0
  %2283 = vmatpush1.msra.mxu0 %v2111
  %2284 = vmatprep.subr.mxu0 0.0
  %2285 = vmatpush1.msra.mxu0 %v2114
  %2286 = vmatprep.subr.mxu0 0.0
  %2287 = vmatpush1.msra.mxu0 %v2117
  %2288 = vmatprep.subr.mxu0 0.0
  %2289 = vmatpush1.msra.mxu0 %v2120
  %2290 = vmatprep.subr.mxu0 0.0
  %2291 = vmatpush1.msra.mxu0 %v2123
  %2292 = vmatprep.subr.mxu0 0.0
  %2293 = vmatpush1.msra.mxu0 %v2126
  %2294 = vmatprep.subr.mxu0 0.0
  %2295 = vmatpush1.msra.mxu0 %v2129
  %2296 = vmatprep.subr.mxu0 0.0
  %2297 = vmatpush1.msra.mxu0 %v2132
  %2298 = vmatprep.subr.mxu0 0.0
  %2299 = vmatpush1.msra.mxu0 %v2135
  %2300 = vmatprep.subr.mxu0 0.0
  %2301 = vmatpush1.msra.mxu0 %v2138
  %2302 = vmatprep.subr.mxu0 0.0
  %2303 = vmatpush1.msra.mxu0 %v2141
  %2304 = vmatprep.subr.mxu0 0.0
  %2305 = vmatpush1.msra.mxu0 0.0
  %2306 = vmatprep.subr.mxu0 0.0
  %2307 = vmatpush1.msra.mxu0 0.0
  %2308 = vmatprep.subr.mxu0 0.0
  %2309 = vmatpush1.msra.mxu0 0.0
  %2310 = vmatprep.subr.mxu0 0.0
  %2311 = vmatpush1.msra.mxu0 0.0
  %2312 = vmatprep.subr.mxu0 0.0
  %2313 = vmatpush1.msra.mxu0 0.0
  %2314 = vmatprep.subr.mxu0 0.0
  %2315 = vmatpush1.msra.mxu0 0.0
  %2316 = vmatprep.subr.mxu0 0.0
  %2317 = vmatpush1.msra.mxu0 0.0
  %2318 = vmatprep.subr.mxu0 0.0
  %2319 = vmatpush1.msra.mxu0 0.0
  %2320 = vmatprep.subr.mxu0 0.0
  %2321 = vmatpush1.msra.mxu0 0.0
  %2322 = vmatprep.subr.mxu0 0.0
  %2323 = vmatpush1.msra.mxu0 0.0
  %2324 = vmatprep.subr.mxu0 0.0
  %2325 = vmatpush1.msra.mxu0 0.0
  %2326 = vmatprep.subr.mxu0 0.0
  %2327 = vmatpush1.msra.mxu0 0.0
  %2328 = vmatprep.subr.mxu0 0.0
  %2329 = vmatpush1.msra.mxu0 0.0
  %2330 = vmatprep.subr.mxu0 0.0
  %2331 = vmatpush1.msra.mxu0 0.0
  %2332 = vmatprep.subr.mxu0 0.0
  %2333 = vmatpush1.msra.mxu0 0.0
  %2334 = vmatprep.subr.mxu0 0.0
  %2335 = vmatpush1.msra.mxu0 0.0
  %2336 = vmatprep.mubr.f32.mxu0 0.0
  %2337 = vmatmul.mubr.f32.gmra.mrb[0].mxu0 %v2086
  %v2338 = vpop.f32.mrb[0].mxu0
  %v2339 = vadd.f32 %v2155, %v2338
  %v2340 = vpop.f32.mrb[0].mxu0
  %2341 = vmatprep.mubr.f32.mxu0 0.0
  %2342 = vmatmul.mubr.f32.gmra.mrb[0].mxu0 %v2087
  %v2343 = vpop.f32.mrb[0].mxu0
  %v2344 = vadd.f32 %v2155, %v2343
  %v2345 = vpop.f32.mrb[0].mxu0
  %2346 = vmatprep.mubr.f32.mxu0 0.0
  %2347 = vmatmul.mubr.f32.gmra.mrb[0].mxu0 %v2088
  %v2348 = vpop.f32.mrb[0].mxu0
  %v2349 = vadd.f32 %v2155, %v2348
  %v2350 = vpop.f32.mrb[0].mxu0
  %2351 = vmatprep.mubr.f32.mxu0 0.0
  %2352 = vmatmul.mubr.f32.gmra.mrb[0].mxu0 %v2089
  %v2353 = vpop.f32.mrb[0].mxu0
  %v2354 = vadd.f32 %v2155, %v2353
  %v2355 = vpop.f32.mrb[0].mxu0
  %2356 = vmatprep.mubr.f32.mxu0 0.0
  %2357 = vmatmul.mubr.f32.gmra.mrb[0].mxu0 %v2090
  %v2358 = vpop.f32.mrb[0].mxu0
  %v2359 = vadd.f32 %v2155, %v2358
  %v2360 = vpop.f32.mrb[0].mxu0
  %2361 = vmatprep.mubr.f32.mxu0 0.0
  %2362 = vmatmul.mubr.f32.gmra.mrb[0].mxu0 %v2091
  %v2363 = vpop.f32.mrb[0].mxu0
  %v2364 = vadd.f32 %v2155, %v2363
  %v2365 = vpop.f32.mrb[0].mxu0
  %2366 = vmatprep.mubr.f32.mxu0 0.0
  %2367 = vmatmul.mubr.f32.gmra.mrb[0].mxu0 %v2092
  %v2368 = vpop.f32.mrb[0].mxu0
  %v2369 = vadd.f32 %v2155, %v2368
  %v2370 = vpop.f32.mrb[0].mxu0
  %2371 = vmatprep.mubr.f32.mxu0 0.0
  %2372 = vmatmul.mubr.f32.gmra.mrb[0].mxu0 %v2093
  %v2373 = vpop.f32.mrb[0].mxu0
  %v2374 = vadd.f32 %v2155, %v2373
  %v2375 = vpop.f32.mrb[0].mxu0
  %2376 = vdwg.mxu0
  %2377 = vst [vmem:[#allocation2] sm:$0xff] %v2226
  %2378 = vst [vmem:[#allocation2 + $0x8] sm:$0xff] %v2228
  %2379 = vst [vmem:[#allocation2 + $0x10] sm:$0xff] %v2339
  %2380 = vst [vmem:[#allocation2 + $0x18] sm:$0xff] %v2232
  %2381 = vst [vmem:[#allocation2 + $0x20] sm:$0xff] %v2234
  %2382 = vst [vmem:[#allocation2 + $0x28] sm:$0xff] %v2344
  %2383 = vst [vmem:[#allocation2 + $0x30] sm:$0xff] %v2238
  %2384 = vst [vmem:[#allocation2 + $0x38] sm:$0xff] %v2240
  %2385 = vst [vmem:[#allocation2 + $0x40] sm:$0xff] %v2349
  %2386 = vst [vmem:[#allocation2 + $0x48] sm:$0xff] %v2244
  %2387 = vst [vmem:[#allocation2 + $0x50] sm:$0xff] %v2246
  %2388 = vst [vmem:[#allocation2 + $0x58] sm:$0xff] %v2354
  %2389 = vst [vmem:[#allocation2 + $0x60] sm:$0xff] %v2250
  %2390 = vst [vmem:[#allocation2 + $0x68] sm:$0xff] %v2252
  %2391 = vst [vmem:[#allocation2 + $0x70] sm:$0xff] %v2359
  %2392 = vst [vmem:[#allocation2 + $0x78] sm:$0xff] %v2256
  %2393 = vst [vmem:[#allocation2 + $0x80] sm:$0xff] %v2258
  %2394 = vst [vmem:[#allocation2 + $0x88] sm:$0xff] %v2364
  %2395 = vst [vmem:[#allocation2 + $0x90] sm:$0xff] %v2262
  %2396 = vst [vmem:[#allocation2 + $0x98] sm:$0xff] %v2264
  %2397 = vst [vmem:[#allocation2 + $0xa0] sm:$0xff] %v2369
  %2398 = vst [vmem:[#allocation2 + $0xa8] sm:$0xff] %v2268
  %2399 = vst [vmem:[#allocation2 + $0xb0] sm:$0xff] %v2270
  %2400 = vst [vmem:[#allocation2 + $0xb8] sm:$0xff] %v2374
  %v2401 = vld [vmem:[%s8] sm:$0x1]
  %v2403 = vlaneseq
  %v2404 = vshrl.u32 %v2403, 7
  %v2405 = vsub.s32 0, %v2404
  %v2406 = vrot.slane %v2401, %v2405
  %v2408 = vld [vmem:[%s345] sm:$0xff]
  %v2409 = vld [vmem:[%s345 + $0x8] sm:$0xff]
  %v2410 = vld [vmem:[%s345 + $0x10] sm:$0xff]
  %v2411 = vld [vmem:[%s6] sm:$0xff]
  %v2412 = vld [vmem:[%s6 + $0x8] sm:$0xff]
  %v2413 = vld [vmem:[%s6 + $0x10] sm:$0xff]
  %v2414 = vld [vmem:[%s6 + $0x18] sm:$0xff]
  %v2415 = vld [vmem:[%s6 + $0x20] sm:$0xff]
  %v2416 = vld [vmem:[%s6 + $0x28] sm:$0xff]
  %v2417 = vld [vmem:[%s6 + $0x30] sm:$0xff]
  %v2418 = vld [vmem:[%s6 + $0x38] sm:$0xff]
  %v2419 = vld [vmem:[%s6 + $0x40] sm:$0xff]
  %v2420 = vld [vmem:[%s6 + $0x48] sm:$0xff]
  %v2421 = vld [vmem:[%s6 + $0x50] sm:$0xff]
  %v2422 = vld [vmem:[%s6 + $0x58] sm:$0xff]
  %v2423 = vld [vmem:[%s6 + $0x60] sm:$0xff]
  %v2424 = vld [vmem:[%s6 + $0x68] sm:$0xff]
  %v2425 = vld [vmem:[%s6 + $0x70] sm:$0xff]
  %v2426 = vld [vmem:[%s6 + $0x78] sm:$0xff]
  %v2427 = vld [vmem:[%s6 + $0x80] sm:$0xff]
  %v2428 = vld [vmem:[%s6 + $0x88] sm:$0xff]
  %v2429 = vld [vmem:[%s6 + $0x90] sm:$0xff]
  %v2430 = vld [vmem:[%s6 + $0x98] sm:$0xff]
  %v2431 = vld [vmem:[%s6 + $0xa0] sm:$0xff]
  %v2432 = vld [vmem:[%s6 + $0xa8] sm:$0xff]
  %v2433 = vld [vmem:[%s6 + $0xb0] sm:$0xff]
  %v2434 = vld [vmem:[%s6 + $0xb8] sm:$0xff]
  %v2435 = vld [vmem:[%s6 + $0xc0] sm:$0xff]
  %v2436 = vld [vmem:[%s6 + $0xc8] sm:$0xff]
  %v2437 = vld [vmem:[%s6 + $0xd0] sm:$0xff]
  %v2438 = vld [vmem:[%s6 + $0xd8] sm:$0xff]
  %v2439 = vld [vmem:[%s6 + $0xe0] sm:$0xff]
  %v2440 = vld [vmem:[%s6 + $0xe8] sm:$0xff]
  %v2441 = vld [vmem:[%s6 + $0xf0] sm:$0xff]
  %v2442 = vld [vmem:[%s6 + $0xf8] sm:$0xff]
  %v2443 = vld [vmem:[%s6 + $0x100] sm:$0xff]
  %v2444 = vld [vmem:[%s6 + $0x108] sm:$0xff]
  %v2445 = vld [vmem:[%s6 + $0x110] sm:$0xff]
  %v2446 = vld [vmem:[%s6 + $0x118] sm:$0xff]
  %v2447 = vld [vmem:[%s6 + $0x120] sm:$0xff]
  %v2448 = vld [vmem:[%s6 + $0x128] sm:$0xff]
  %v2449 = vld [vmem:[%s6 + $0x130] sm:$0xff]
  %v2450 = vld [vmem:[%s6 + $0x138] sm:$0xff]
  %v2451 = vld [vmem:[%s6 + $0x140] sm:$0xff]
  %v2452 = vld [vmem:[%s6 + $0x148] sm:$0xff]
  %v2453 = vld [vmem:[%s6 + $0x150] sm:$0xff]
  %v2454 = vld [vmem:[%s6 + $0x158] sm:$0xff]
  %v2455 = vld [vmem:[%s6 + $0x160] sm:$0xff]
  %v2456 = vld [vmem:[%s6 + $0x168] sm:$0xff]
  %v2457 = vld [vmem:[%s6 + $0x170] sm:$0xff]
  %v2458 = vld [vmem:[%s6 + $0x178] sm:$0xff]
  %2459 = vmatprep.subr.mxu0 %v2412
  %2460 = vmatpush1.msra.mxu0 %v2411
  %2461 = vmatprep.subr.mxu0 %v2415
  %2462 = vmatpush1.msra.mxu0 %v2414
  %2463 = vmatprep.subr.mxu0 %v2418
  %2464 = vmatpush1.msra.mxu0 %v2417
  %2465 = vmatprep.subr.mxu0 %v2421
  %2466 = vmatpush1.msra.mxu0 %v2420
  %2467 = vmatprep.subr.mxu0 %v2424
  %2468 = vmatpush1.msra.mxu0 %v2423
  %2469 = vmatprep.subr.mxu0 %v2427
  %2470 = vmatpush1.msra.mxu0 %v2426
  %2471 = vmatprep.subr.mxu0 %v2430
  %2472 = vmatpush1.msra.mxu0 %v2429
  %2473 = vmatprep.subr.mxu0 %v2433
  %2474 = vmatpush1.msra.mxu0 %v2432
  %2475 = vmatprep.subr.mxu0 %v2436
  %2476 = vmatpush1.msra.mxu0 %v2435
  %2477 = vmatprep.subr.mxu0 %v2439
  %2478 = vmatpush1.msra.mxu0 %v2438
  %2479 = vmatprep.subr.mxu0 %v2442
  %2480 = vmatpush1.msra.mxu0 %v2441
  %2481 = vmatprep.subr.mxu0 %v2445
  %2482 = vmatpush1.msra.mxu0 %v2444
  %2483 = vmatprep.subr.mxu0 %v2448
  %2484 = vmatpush1.msra.mxu0 %v2447
  %2485 = vmatprep.subr.mxu0 %v2451
  %2486 = vmatpush1.msra.mxu0 %v2450
  %2487 = vmatprep.subr.mxu0 %v2454
  %2488 = vmatpush1.msra.mxu0 %v2453
  %2489 = vmatprep.subr.mxu0 %v2457
  %2490 = vmatpush1.msra.mxu0 %v2456
  %2491 = vmatprep.subr.mxu0 0.0
  %2492 = vmatpush1.msra.mxu0 0.0
  %2493 = vmatprep.subr.mxu0 0.0
  %2494 = vmatpush1.msra.mxu0 0.0
  %2495 = vmatprep.subr.mxu0 0.0
  %2496 = vmatpush1.msra.mxu0 0.0
  %2497 = vmatprep.subr.mxu0 0.0
  %2498 = vmatpush1.msra.mxu0 0.0
  %2499 = vmatprep.subr.mxu0 0.0
  %2500 = vmatpush1.msra.mxu0 0.0
  %2501 = vmatprep.subr.mxu0 0.0
  %2502 = vmatpush1.msra.mxu0 0.0
  %2503 = vmatprep.subr.mxu0 0.0
  %2504 = vmatpush1.msra.mxu0 0.0
  %2505 = vmatprep.subr.mxu0 0.0
  %2506 = vmatpush1.msra.mxu0 0.0
  %2507 = vmatprep.subr.mxu0 0.0
  %2508 = vmatpush1.msra.mxu0 0.0
  %2509 = vmatprep.subr.mxu0 0.0
  %2510 = vmatpush1.msra.mxu0 0.0
  %2511 = vmatprep.subr.mxu0 0.0
  %2512 = vmatpush1.msra.mxu0 0.0
  %2513 = vmatprep.subr.mxu0 0.0
  %2514 = vmatpush1.msra.mxu0 0.0
  %2515 = vmatprep.subr.mxu0 0.0
  %2516 = vmatpush1.msra.mxu0 0.0
  %2517 = vmatprep.subr.mxu0 0.0
  %2518 = vmatpush1.msra.mxu0 0.0
  %2519 = vmatprep.subr.mxu0 0.0
  %2520 = vmatpush1.msra.mxu0 0.0
  %2521 = vmatprep.subr.mxu0 0.0
  %2522 = vmatpush1.msra.mxu0 0.0
  %2523 = vmatprep.mubr.f32.mxu0 0.0
  %2524 = vmatmul.mubr.f32.gmra.mrb[0].mxu0 0.0
  %v2525 = vpop.f32.mrb[0].mxu0
  %v2526 = vadd.f32 0.0, %v2525
  %v2527 = vpop.f32.mrb[0].mxu0
  %v2528 = vadd.f32 0.0, %v2527
  %2529 = vdwg.mxu0
  %2530 = vmatprep.subr.mxu0 0.0
  %2531 = vmatpush1.msra.mxu0 %v2413
  %2532 = vmatprep.subr.mxu0 0.0
  %2533 = vmatpush1.msra.mxu0 %v2416
  %2534 = vmatprep.subr.mxu0 0.0
  %2535 = vmatpush1.msra.mxu0 %v2419
  %2536 = vmatprep.subr.mxu0 0.0
  %2537 = vmatpush1.msra.mxu0 %v2422
  %2538 = vmatprep.subr.mxu0 0.0
  %2539 = vmatpush1.msra.mxu0 %v2425
  %2540 = vmatprep.subr.mxu0 0.0
  %2541 = vmatpush1.msra.mxu0 %v2428
  %2542 = vmatprep.subr.mxu0 0.0
  %2543 = vmatpush1.msra.mxu0 %v2431
  %2544 = vmatprep.subr.mxu0 0.0
  %2545 = vmatpush1.msra.mxu0 %v2434
  %2546 = vmatprep.subr.mxu0 0.0
  %2547 = vmatpush1.msra.mxu0 %v2437
  %2548 = vmatprep.subr.mxu0 0.0
  %2549 = vmatpush1.msra.mxu0 %v2440
  %2550 = vmatprep.subr.mxu0 0.0
  %2551 = vmatpush1.msra.mxu0 %v2443
  %2552 = vmatprep.subr.mxu0 0.0
  %2553 = vmatpush1.msra.mxu0 %v2446
  %2554 = vmatprep.subr.mxu0 0.0
  %2555 = vmatpush1.msra.mxu0 %v2449
  %2556 = vmatprep.subr.mxu0 0.0
  %2557 = vmatpush1.msra.mxu0 %v2452
  %2558 = vmatprep.subr.mxu0 0.0
  %2559 = vmatpush1.msra.mxu0 %v2455
  %2560 = vmatprep.subr.mxu0 0.0
  %2561 = vmatpush1.msra.mxu0 %v2458
  %2562 = vmatprep.subr.mxu0 0.0
  %2563 = vmatpush1.msra.mxu0 0.0
  %2564 = vmatprep.subr.mxu0 0.0
  %2565 = vmatpush1.msra.mxu0 0.0
  %2566 = vmatprep.subr.mxu0 0.0
  %2567 = vmatpush1.msra.mxu0 0.0
  %2568 = vmatprep.subr.mxu0 0.0
  %2569 = vmatpush1.msra.mxu0 0.0
  %2570 = vmatprep.subr.mxu0 0.0
  %2571 = vmatpush1.msra.mxu0 0.0
  %2572 = vmatprep.subr.mxu0 0.0
  %2573 = vmatpush1.msra.mxu0 0.0
  %2574 = vmatprep.subr.mxu0 0.0
  %2575 = vmatpush1.msra.mxu0 0.0
  %2576 = vmatprep.subr.mxu0 0.0
  %2577 = vmatpush1.msra.mxu0 0.0
  %2578 = vmatprep.subr.mxu0 0.0
  %2579 = vmatpush1.msra.mxu0 0.0
  %2580 = vmatprep.subr.mxu0 0.0
  %2581 = vmatpush1.msra.mxu0 0.0
  %2582 = vmatprep.subr.mxu0 0.0
  %2583 = vmatpush1.msra.mxu0 0.0
  %2584 = vmatprep.subr.mxu0 0.0
  %2585 = vmatpush1.msra.mxu0 0.0
  %2586 = vmatprep.subr.mxu0 0.0
  %2587 = vmatpush1.msra.mxu0 0.0
  %2588 = vmatprep.subr.mxu0 0.0
  %2589 = vmatpush1.msra.mxu0 0.0
  %2590 = vmatprep.subr.mxu0 0.0
  %2591 = vmatpush1.msra.mxu0 0.0
  %2592 = vmatprep.subr.mxu0 0.0
  %2593 = vmatpush1.msra.mxu0 0.0
  %2594 = vmatprep.mubr.f32.mxu0 0.0
  %2595 = vmatmul.mubr.f32.gmra.mrb[0].mxu0 0.0
  %v2596 = vpop.f32.mrb[0].mxu0
  %v2597 = vadd.f32 0.0, %v2596
  %v2598 = vpop.f32.mrb[0].mxu0
  %2599 = vdwg.mxu0
  %v2600 = vadd.f32 %v2408, %v2526
  %v2601 = vxor.u32 %v2600, 2147483648
  %v2602 = vmul.f32 %v2601, 1.442695
  %v2603 = vpow.pop %v2602
  %v2604 = vadd.f32 %v2603, 1.0
  %v2605 = vrcp.pop %v2604
  %v2606 = vmul.f32 1.0, %v2605
  %v2607 = vadd.f32 %v2409, %v2528
  %v2608 = vxor.u32 %v2607, 2147483648
  %v2609 = vmul.f32 %v2608, 1.442695
  %v2610 = vpow.pop %v2609
  %v2611 = vadd.f32 %v2610, 1.0
  %v2612 = vrcp.pop %v2611
  %v2613 = vmul.f32 1.0, %v2612
  %v2614 = vadd.f32 %v2597, %v2406
  %v2615 = vmul.f32 %v2606, %v2614
  %v2616 = vadd.f32 %v2410, %v2615
  %v2617 = vtanh.pop %v2616
  %v2618 = vsub.f32 0.0, %v2617
  %v2619 = vmul.f32 %v2613, %v2618
  %v2620 = vadd.f32 %v2617, %v2619
  %2621 = vst [vmem:[#allocation3] sm:$0xff] %v2620
  %v2622 = vld [vmem:[%s562] sm:$0xff]
  %v2623 = vld [vmem:[%s562 + $0x8] sm:$0xff]
  %v2624 = vld [vmem:[%s562 + $0x10] sm:$0xff]
  %v2625 = vld [vmem:[%s6] sm:$0xff]
  %v2626 = vld [vmem:[%s6 + $0x8] sm:$0xff]
  %v2627 = vld [vmem:[%s6 + $0x10] sm:$0xff]
  %v2628 = vld [vmem:[%s6 + $0x18] sm:$0xff]
  %v2629 = vld [vmem:[%s6 + $0x20] sm:$0xff]
  %v2630 = vld [vmem:[%s6 + $0x28] sm:$0xff]
  %v2631 = vld [vmem:[%s6 + $0x30] sm:$0xff]
  %v2632 = vld [vmem:[%s6 + $0x38] sm:$0xff]
  %v2633 = vld [vmem:[%s6 + $0x40] sm:$0xff]
  %v2634 = vld [vmem:[%s6 + $0x48] sm:$0xff]
  %v2635 = vld [vmem:[%s6 + $0x50] sm:$0xff]
  %v2636 = vld [vmem:[%s6 + $0x58] sm:$0xff]
  %v2637 = vld [vmem:[%s6 + $0x60] sm:$0xff]
  %v2638 = vld [vmem:[%s6 + $0x68] sm:$0xff]
  %v2639 = vld [vmem:[%s6 + $0x70] sm:$0xff]
  %v2640 = vld [vmem:[%s6 + $0x78] sm:$0xff]
  %v2641 = vld [vmem:[%s6 + $0x80] sm:$0xff]
  %v2642 = vld [vmem:[%s6 + $0x88] sm:$0xff]
  %v2643 = vld [vmem:[%s6 + $0x90] sm:$0xff]
  %v2644 = vld [vmem:[%s6 + $0x98] sm:$0xff]
  %v2645 = vld [vmem:[%s6 + $0xa0] sm:$0xff]
  %v2646 = vld [vmem:[%s6 + $0xa8] sm:$0xff]
  %v2647 = vld [vmem:[%s6 + $0xb0] sm:$0xff]
  %v2648 = vld [vmem:[%s6 + $0xb8] sm:$0xff]
  %v2649 = vld [vmem:[%s6 + $0xc0] sm:$0xff]
  %v2650 = vld [vmem:[%s6 + $0xc8] sm:$0xff]
  %v2651 = vld [vmem:[%s6 + $0xd0] sm:$0xff]
  %v2652 = vld [vmem:[%s6 + $0xd8] sm:$0xff]
  %v2653 = vld [vmem:[%s6 + $0xe0] sm:$0xff]
  %v2654 = vld [vmem:[%s6 + $0xe8] sm:$0xff]
  %v2655 = vld [vmem:[%s6 + $0xf0] sm:$0xff]
  %v2656 = vld [vmem:[%s6 + $0xf8] sm:$0xff]
  %v2657 = vld [vmem:[%s6 + $0x100] sm:$0xff]
  %v2658 = vld [vmem:[%s6 + $0x108] sm:$0xff]
  %v2659 = vld [vmem:[%s6 + $0x110] sm:$0xff]
  %v2660 = vld [vmem:[%s6 + $0x118] sm:$0xff]
  %v2661 = vld [vmem:[%s6 + $0x120] sm:$0xff]
  %v2662 = vld [vmem:[%s6 + $0x128] sm:$0xff]
  %v2663 = vld [vmem:[%s6 + $0x130] sm:$0xff]
  %v2664 = vld [vmem:[%s6 + $0x138] sm:$0xff]
  %v2665 = vld [vmem:[%s6 + $0x140] sm:$0xff]
  %v2666 = vld [vmem:[%s6 + $0x148] sm:$0xff]
  %v2667 = vld [vmem:[%s6 + $0x150] sm:$0xff]
  %v2668 = vld [vmem:[%s6 + $0x158] sm:$0xff]
  %v2669 = vld [vmem:[%s6 + $0x160] sm:$0xff]
  %v2670 = vld [vmem:[%s6 + $0x168] sm:$0xff]
  %v2671 = vld [vmem:[%s6 + $0x170] sm:$0xff]
  %v2672 = vld [vmem:[%s6 + $0x178] sm:$0xff]
  %2673 = vmatprep.subr.mxu0 %v2626
  %2674 = vmatpush1.msra.mxu0 %v2625
  %2675 = vmatprep.subr.mxu0 %v2629
  %2676 = vmatpush1.msra.mxu0 %v2628
  %2677 = vmatprep.subr.mxu0 %v2632
  %2678 = vmatpush1.msra.mxu0 %v2631
  %2679 = vmatprep.subr.mxu0 %v2635
  %2680 = vmatpush1.msra.mxu0 %v2634
  %2681 = vmatprep.subr.mxu0 %v2638
  %2682 = vmatpush1.msra.mxu0 %v2637
  %2683 = vmatprep.subr.mxu0 %v2641
  %2684 = vmatpush1.msra.mxu0 %v2640
  %2685 = vmatprep.subr.mxu0 %v2644
  %2686 = vmatpush1.msra.mxu0 %v2643
  %2687 = vmatprep.subr.mxu0 %v2647
  %2688 = vmatpush1.msra.mxu0 %v2646
  %2689 = vmatprep.subr.mxu0 %v2650
  %2690 = vmatpush1.msra.mxu0 %v2649
  %2691 = vmatprep.subr.mxu0 %v2653
  %2692 = vmatpush1.msra.mxu0 %v2652
  %2693 = vmatprep.subr.mxu0 %v2656
  %2694 = vmatpush1.msra.mxu0 %v2655
  %2695 = vmatprep.subr.mxu0 %v2659
  %2696 = vmatpush1.msra.mxu0 %v2658
  %2697 = vmatprep.subr.mxu0 %v2662
  %2698 = vmatpush1.msra.mxu0 %v2661
  %2699 = vmatprep.subr.mxu0 %v2665
  %2700 = vmatpush1.msra.mxu0 %v2664
  %2701 = vmatprep.subr.mxu0 %v2668
  %2702 = vmatpush1.msra.mxu0 %v2667
  %2703 = vmatprep.subr.mxu0 %v2671
  %2704 = vmatpush1.msra.mxu0 %v2670
  %2705 = vmatprep.subr.mxu0 0.0
  %2706 = vmatpush1.msra.mxu0 0.0
  %2707 = vmatprep.subr.mxu0 0.0
  %2708 = vmatpush1.msra.mxu0 0.0
  %2709 = vmatprep.subr.mxu0 0.0
  %2710 = vmatpush1.msra.mxu0 0.0
  %2711 = vmatprep.subr.mxu0 0.0
  %2712 = vmatpush1.msra.mxu0 0.0
  %2713 = vmatprep.subr.mxu0 0.0
  %2714 = vmatpush1.msra.mxu0 0.0
  %2715 = vmatprep.subr.mxu0 0.0
  %2716 = vmatpush1.msra.mxu0 0.0
  %2717 = vmatprep.subr.mxu0 0.0
  %2718 = vmatpush1.msra.mxu0 0.0
  %2719 = vmatprep.subr.mxu0 0.0
  %2720 = vmatpush1.msra.mxu0 0.0
  %2721 = vmatprep.subr.mxu0 0.0
  %2722 = vmatpush1.msra.mxu0 0.0
  %2723 = vmatprep.subr.mxu0 0.0
  %2724 = vmatpush1.msra.mxu0 0.0
  %2725 = vmatprep.subr.mxu0 0.0
  %2726 = vmatpush1.msra.mxu0 0.0
  %2727 = vmatprep.subr.mxu0 0.0
  %2728 = vmatpush1.msra.mxu0 0.0
  %2729 = vmatprep.subr.mxu0 0.0
  %2730 = vmatpush1.msra.mxu0 0.0
  %2731 = vmatprep.subr.mxu0 0.0
  %2732 = vmatpush1.msra.mxu0 0.0
  %2733 = vmatprep.subr.mxu0 0.0
  %2734 = vmatpush1.msra.mxu0 0.0
  %2735 = vmatprep.subr.mxu0 0.0
  %2736 = vmatpush1.msra.mxu0 0.0
  %2737 = vmatprep.mubr.f32.mxu0 0.0
  %2738 = vmatmul.mubr.f32.gmra.mrb[0].mxu0 %v2620
  %v2739 = vpop.f32.mrb[0].mxu0
  %v2740 = vadd.f32 0.0, %v2739
  %v2741 = vpop.f32.mrb[0].mxu0
  %v2742 = vadd.f32 0.0, %v2741
  %2743 = vdwg.mxu0
  %2744 = vmatprep.subr.mxu0 0.0
  %2745 = vmatpush1.msra.mxu0 %v2627
  %2746 = vmatprep.subr.mxu0 0.0
  %2747 = vmatpush1.msra.mxu0 %v2630
  %2748 = vmatprep.subr.mxu0 0.0
  %2749 = vmatpush1.msra.mxu0 %v2633
  %2750 = vmatprep.subr.mxu0 0.0
  %2751 = vmatpush1.msra.mxu0 %v2636
  %2752 = vmatprep.subr.mxu0 0.0
  %2753 = vmatpush1.msra.mxu0 %v2639
  %2754 = vmatprep.subr.mxu0 0.0
  %2755 = vmatpush1.msra.mxu0 %v2642
  %2756 = vmatprep.subr.mxu0 0.0
  %2757 = vmatpush1.msra.mxu0 %v2645
  %2758 = vmatprep.subr.mxu0 0.0
  %2759 = vmatpush1.msra.mxu0 %v2648
  %2760 = vmatprep.subr.mxu0 0.0
  %2761 = vmatpush1.msra.mxu0 %v2651
  %2762 = vmatprep.subr.mxu0 0.0
  %2763 = vmatpush1.msra.mxu0 %v2654
  %2764 = vmatprep.subr.mxu0 0.0
  %2765 = vmatpush1.msra.mxu0 %v2657
  %2766 = vmatprep.subr.mxu0 0.0
  %2767 = vmatpush1.msra.mxu0 %v2660
  %2768 = vmatprep.subr.mxu0 0.0
  %2769 = vmatpush1.msra.mxu0 %v2663
  %2770 = vmatprep.subr.mxu0 0.0
  %2771 = vmatpush1.msra.mxu0 %v2666
  %2772 = vmatprep.subr.mxu0 0.0
  %2773 = vmatpush1.msra.mxu0 %v2669
  %2774 = vmatprep.subr.mxu0 0.0
  %2775 = vmatpush1.msra.mxu0 %v2672
  %2776 = vmatprep.subr.mxu0 0.0
  %2777 = vmatpush1.msra.mxu0 0.0
  %2778 = vmatprep.subr.mxu0 0.0
  %2779 = vmatpush1.msra.mxu0 0.0
  %2780 = vmatprep.subr.mxu0 0.0
  %2781 = vmatpush1.msra.mxu0 0.0
  %2782 = vmatprep.subr.mxu0 0.0
  %2783 = vmatpush1.msra.mxu0 0.0
  %2784 = vmatprep.subr.mxu0 0.0
  %2785 = vmatpush1.msra.mxu0 0.0
  %2786 = vmatprep.subr.mxu0 0.0
  %2787 = vmatpush1.msra.mxu0 0.0
  %2788 = vmatprep.subr.mxu0 0.0
  %2789 = vmatpush1.msra.mxu0 0.0
  %2790 = vmatprep.subr.mxu0 0.0
  %2791 = vmatpush1.msra.mxu0 0.0
  %2792 = vmatprep.subr.mxu0 0.0
  %2793 = vmatpush1.msra.mxu0 0.0
  %2794 = vmatprep.subr.mxu0 0.0
  %2795 = vmatpush1.msra.mxu0 0.0
  %2796 = vmatprep.subr.mxu0 0.0
  %2797 = vmatpush1.msra.mxu0 0.0
  %2798 = vmatprep.subr.mxu0 0.0
  %2799 = vmatpush1.msra.mxu0 0.0
  %2800 = vmatprep.subr.mxu0 0.0
  %2801 = vmatpush1.msra.mxu0 0.0
  %2802 = vmatprep.subr.mxu0 0.0
  %2803 = vmatpush1.msra.mxu0 0.0
  %2804 = vmatprep.subr.mxu0 0.0
  %2805 = vmatpush1.msra.mxu0 0.0
  %2806 = vmatprep.subr.mxu0 0.0
  %2807 = vmatpush1.msra.mxu0 0.0
  %2808 = vmatprep.mubr.f32.mxu0 0.0
  %2809 = vmatmul.mubr.f32.gmra.mrb[0].mxu0 %v2620
  %v2810 = vpop.f32.mrb[0].mxu0
  %v2811 = vadd.f32 0.0, %v2810
  %v2812 = vpop.f32.mrb[0].mxu0
  %2813 = vdwg.mxu0
  %v2814 = vadd.f32 %v2622, %v2740
  %v2815 = vxor.u32 %v2814, 2147483648
  %v2816 = vmul.f32 %v2815, 1.442695
  %v2817 = vpow.pop %v2816
  %v2818 = vadd.f32 %v2817, 1.0
  %v2819 = vrcp.pop %v2818
  %v2820 = vmul.f32 1.0, %v2819
  %v2821 = vadd.f32 %v2623, %v2742
  %v2822 = vxor.u32 %v2821, 2147483648
  %v2823 = vmul.f32 %v2822, 1.442695
  %v2824 = vpow.pop %v2823
  %v2825 = vadd.f32 %v2824, 1.0
  %v2826 = vrcp.pop %v2825
  %v2827 = vmul.f32 1.0, %v2826
  %v2828 = vadd.f32 %v2811, %v2406
  %v2829 = vmul.f32 %v2820, %v2828
  %v2830 = vadd.f32 %v2624, %v2829
  %v2831 = vtanh.pop %v2830
  %v2832 = vsub.f32 %v2620, %v2831
  %v2833 = vmul.f32 %v2827, %v2832
  %v2834 = vadd.f32 %v2831, %v2833
  %2835 = vst [vmem:[%s776] sm:$0xff] %v2834
  %v2836 = vld [vmem:[%s780] sm:$0xff]
  %v2837 = vld [vmem:[%s780 + $0x8] sm:$0xff]
  %v2838 = vld [vmem:[%s780 + $0x10] sm:$0xff]
  %v2839 = vld [vmem:[%s6] sm:$0xff]
  %v2840 = vld [vmem:[%s6 + $0x8] sm:$0xff]
  %v2841 = vld [vmem:[%s6 + $0x10] sm:$0xff]
  %v2842 = vld [vmem:[%s6 + $0x18] sm:$0xff]
  %v2843 = vld [vmem:[%s6 + $0x20] sm:$0xff]
  %v2844 = vld [vmem:[%s6 + $0x28] sm:$0xff]
  %v2845 = vld [vmem:[%s6 + $0x30] sm:$0xff]
  %v2846 = vld [vmem:[%s6 + $0x38] sm:$0xff]
  %v2847 = vld [vmem:[%s6 + $0x40] sm:$0xff]
  %v2848 = vld [vmem:[%s6 + $0x48] sm:$0xff]
  %v2849 = vld [vmem:[%s6 + $0x50] sm:$0xff]
  %v2850 = vld [vmem:[%s6 + $0x58] sm:$0xff]
  %v2851 = vld [vmem:[%s6 + $0x60] sm:$0xff]
  %v2852 = vld [vmem:[%s6 + $0x68] sm:$0xff]
  %v2853 = vld [vmem:[%s6 + $0x70] sm:$0xff]
  %v2854 = vld [vmem:[%s6 + $0x78] sm:$0xff]
  %v2855 = vld [vmem:[%s6 + $0x80] sm:$0xff]
  %v2856 = vld [vmem:[%s6 + $0x88] sm:$0xff]
  %v2857 = vld [vmem:[%s6 + $0x90] sm:$0xff]
  %v2858 = vld [vmem:[%s6 + $0x98] sm:$0xff]
  %v2859 = vld [vmem:[%s6 + $0xa0] sm:$0xff]
  %v2860 = vld [vmem:[%s6 + $0xa8] sm:$0xff]
  %v2861 = vld [vmem:[%s6 + $0xb0] sm:$0xff]
  %v2862 = vld [vmem:[%s6 + $0xb8] sm:$0xff]
  %v2863 = vld [vmem:[%s6 + $0xc0] sm:$0xff]
  %v2864 = vld [vmem:[%s6 + $0xc8] sm:$0xff]
  %v2865 = vld [vmem:[%s6 + $0xd0] sm:$0xff]
  %v2866 = vld [vmem:[%s6 + $0xd8] sm:$0xff]
  %v2867 = vld [vmem:[%s6 + $0xe0] sm:$0xff]
  %v2868 = vld [vmem:[%s6 + $0xe8] sm:$0xff]
  %v2869 = vld [vmem:[%s6 + $0xf0] sm:$0xff]
  %v2870 = vld [vmem:[%s6 + $0xf8] sm:$0xff]
  %v2871 = vld [vmem:[%s6 + $0x100] sm:$0xff]
  %v2872 = vld [vmem:[%s6 + $0x108] sm:$0xff]
  %v2873 = vld [vmem:[%s6 + $0x110] sm:$0xff]
  %v2874 = vld [vmem:[%s6 + $0x118] sm:$0xff]
  %v2875 = vld [vmem:[%s6 + $0x120] sm:$0xff]
  %v2876 = vld [vmem:[%s6 + $0x128] sm:$0xff]
  %v2877 = vld [vmem:[%s6 + $0x130] sm:$0xff]
  %v2878 = vld [vmem:[%s6 + $0x138] sm:$0xff]
  %v2879 = vld [vmem:[%s6 + $0x140] sm:$0xff]
  %v2880 = vld [vmem:[%s6 + $0x148] sm:$0xff]
  %v2881 = vld [vmem:[%s6 + $0x150] sm:$0xff]
  %v2882 = vld [vmem:[%s6 + $0x158] sm:$0xff]
  %v2883 = vld [vmem:[%s6 + $0x160] sm:$0xff]
  %v2884 = vld [vmem:[%s6 + $0x168] sm:$0xff]
  %v2885 = vld [vmem:[%s6 + $0x170] sm:$0xff]
  %v2886 = vld [vmem:[%s6 + $0x178] sm:$0xff]
  %2887 = vmatprep.subr.mxu0 %v2840
  %2888 = vmatpush1.msra.mxu0 %v2839
  %2889 = vmatprep.subr.mxu0 %v2843
  %2890 = vmatpush1.msra.mxu0 %v2842
  %2891 = vmatprep.subr.mxu0 %v2846
  %2892 = vmatpush1.msra.mxu0 %v2845
  %2893 = vmatprep.subr.mxu0 %v2849
  %2894 = vmatpush1.msra.mxu0 %v2848
  %2895 = vmatprep.subr.mxu0 %v2852
  %2896 = vmatpush1.msra.mxu0 %v2851
  %2897 = vmatprep.subr.mxu0 %v2855
  %2898 = vmatpush1.msra.mxu0 %v2854
  %2899 = vmatprep.subr.mxu0 %v2858
  %2900 = vmatpush1.msra.mxu0 %v2857
  %2901 = vmatprep.subr.mxu0 %v2861
  %2902 = vmatpush1.msra.mxu0 %v2860
  %2903 = vmatprep.subr.mxu0 %v2864
  %2904 = vmatpush1.msra.mxu0 %v2863
  %2905 = vmatprep.subr.mxu0 %v2867
  %2906 = vmatpush1.msra.mxu0 %v2866
  %2907 = vmatprep.subr.mxu0 %v2870
  %2908 = vmatpush1.msra.mxu0 %v2869
  %2909 = vmatprep.subr.mxu0 %v2873
  %2910 = vmatpush1.msra.mxu0 %v2872
  %2911 = vmatprep.subr.mxu0 %v2876
  %2912 = vmatpush1.msra.mxu0 %v2875
  %2913 = vmatprep.subr.mxu0 %v2879
  %2914 = vmatpush1.msra.mxu0 %v2878
  %2915 = vmatprep.subr.mxu0 %v2882
  %2916 = vmatpush1.msra.mxu0 %v2881
  %2917 = vmatprep.subr.mxu0 %v2885
  %2918 = vmatpush1.msra.mxu0 %v2884
  %2919 = vmatprep.subr.mxu0 0.0
  %2920 = vmatpush1.msra.mxu0 0.0
  %2921 = vmatprep.subr.mxu0 0.0
  %2922 = vmatpush1.msra.mxu0 0.0
  %2923 = vmatprep.subr.mxu0 0.0
  %2924 = vmatpush1.msra.mxu0 0.0
  %2925 = vmatprep.subr.mxu0 0.0
  %2926 = vmatpush1.msra.mxu0 0.0
  %2927 = vmatprep.subr.mxu0 0.0
  %2928 = vmatpush1.msra.mxu0 0.0
  %2929 = vmatprep.subr.mxu0 0.0
  %2930 = vmatpush1.msra.mxu0 0.0
  %2931 = vmatprep.subr.mxu0 0.0
  %2932 = vmatpush1.msra.mxu0 0.0
  %2933 = vmatprep.subr.mxu0 0.0
  %2934 = vmatpush1.msra.mxu0 0.0
  %2935 = vmatprep.subr.mxu0 0.0
  %2936 = vmatpush1.msra.mxu0 0.0
  %2937 = vmatprep.subr.mxu0 0.0
  %2938 = vmatpush1.msra.mxu0 0.0
  %2939 = vmatprep.subr.mxu0 0.0
  %2940 = vmatpush1.msra.mxu0 0.0
  %2941 = vmatprep.subr.mxu0 0.0
  %2942 = vmatpush1.msra.mxu0 0.0
  %2943 = vmatprep.subr.mxu0 0.0
  %2944 = vmatpush1.msra.mxu0 0.0
  %2945 = vmatprep.subr.mxu0 0.0
  %2946 = vmatpush1.msra.mxu0 0.0
  %2947 = vmatprep.subr.mxu0 0.0
  %2948 = vmatpush1.msra.mxu0 0.0
  %2949 = vmatprep.subr.mxu0 0.0
  %2950 = vmatpush1.msra.mxu0 0.0
  %2951 = vmatprep.mubr.f32.mxu0 0.0
  %2952 = vmatmul.mubr.f32.gmra.mrb[0].mxu0 %v2834
  %v2953 = vpop.f32.mrb[0].mxu0
  %v2954 = vadd.f32 0.0, %v2953
  %v2955 = vpop.f32.mrb[0].mxu0
  %v2956 = vadd.f32 0.0, %v2955
  %2957 = vdwg.mxu0
  %2958 = vmatprep.subr.mxu0 0.0
  %2959 = vmatpush1.msra.mxu0 %v2841
  %2960 = vmatprep.subr.mxu0 0.0
  %2961 = vmatpush1.msra.mxu0 %v2844
  %2962 = vmatprep.subr.mxu0 0.0
  %2963 = vmatpush1.msra.mxu0 %v2847
  %2964 = vmatprep.subr.mxu0 0.0
  %2965 = vmatpush1.msra.mxu0 %v2850
  %2966 = vmatprep.subr.mxu0 0.0
  %2967 = vmatpush1.msra.mxu0 %v2853
  %2968 = vmatprep.subr.mxu0 0.0
  %2969 = vmatpush1.msra.mxu0 %v2856
  %2970 = vmatprep.subr.mxu0 0.0
  %2971 = vmatpush1.msra.mxu0 %v2859
  %2972 = vmatprep.subr.mxu0 0.0
  %2973 = vmatpush1.msra.mxu0 %v2862
  %2974 = vmatprep.subr.mxu0 0.0
  %2975 = vmatpush1.msra.mxu0 %v2865
  %2976 = vmatprep.subr.mxu0 0.0
  %2977 = vmatpush1.msra.mxu0 %v2868
  %2978 = vmatprep.subr.mxu0 0.0
  %2979 = vmatpush1.msra.mxu0 %v2871
  %2980 = vmatprep.subr.mxu0 0.0
  %2981 = vmatpush1.msra.mxu0 %v2874
  %2982 = vmatprep.subr.mxu0 0.0
  %2983 = vmatpush1.msra.mxu0 %v2877
  %2984 = vmatprep.subr.mxu0 0.0
  %2985 = vmatpush1.msra.mxu0 %v2880
  %2986 = vmatprep.subr.mxu0 0.0
  %2987 = vmatpush1.msra.mxu0 %v2883
  %2988 = vmatprep.subr.mxu0 0.0
  %2989 = vmatpush1.msra.mxu0 %v2886
  %2990 = vmatprep.subr.mxu0 0.0
  %2991 = vmatpush1.msra.mxu0 0.0
  %2992 = vmatprep.subr.mxu0 0.0
  %2993 = vmatpush1.msra.mxu0 0.0
  %2994 = vmatprep.subr.mxu0 0.0
  %2995 = vmatpush1.msra.mxu0 0.0
  %2996 = vmatprep.subr.mxu0 0.0
  %2997 = vmatpush1.msra.mxu0 0.0
  %2998 = vmatprep.subr.mxu0 0.0
  %2999 = vmatpush1.msra.mxu0 0.0
  %3000 = vmatprep.subr.mxu0 0.0
  %3001 = vmatpush1.msra.mxu0 0.0
  %3002 = vmatprep.subr.mxu0 0.0
  %3003 = vmatpush1.msra.mxu0 0.0
  %3004 = vmatprep.subr.mxu0 0.0
  %3005 = vmatpush1.msra.mxu0 0.0
  %3006 = vmatprep.subr.mxu0 0.0
  %3007 = vmatpush1.msra.mxu0 0.0
  %3008 = vmatprep.subr.mxu0 0.0
  %3009 = vmatpush1.msra.mxu0 0.0
  %3010 = vmatprep.subr.mxu0 0.0
  %3011 = vmatpush1.msra.mxu0 0.0
  %3012 = vmatprep.subr.mxu0 0.0
  %3013 = vmatpush1.msra.mxu0 0.0
  %3014 = vmatprep.subr.mxu0 0.0
  %3015 = vmatpush1.msra.mxu0 0.0
  %3016 = vmatprep.subr.mxu0 0.0
  %3017 = vmatpush1.msra.mxu0 0.0
  %3018 = vmatprep.subr.mxu0 0.0
  %3019 = vmatpush1.msra.mxu0 0.0
  %3020 = vmatprep.subr.mxu0 0.0
  %3021 = vmatpush1.msra.mxu0 0.0
  %3022 = vmatprep.mubr.f32.mxu0 0.0
  %3023 = vmatmul.mubr.f32.gmra.mrb[0].mxu0 %v2834
  %v3024 = vpop.f32.mrb[0].mxu0
  %v3025 = vadd.f32 0.0, %v3024
  %v3026 = vpop.f32.mrb[0].mxu0
  %3027 = vdwg.mxu0
  %v3028 = vadd.f32 %v2836, %v2954
  %v3029 = vxor.u32 %v3028, 2147483648
  %v3030 = vmul.f32 %v3029, 1.442695
  %v3031 = vpow.pop %v3030
  %v3032 = vadd.f32 %v3031, 1.0
  %v3033 = vrcp.pop %v3032
  %v3034 = vmul.f32 1.0, %v3033
  %v3035 = vadd.f32 %v2837, %v2956
  %v3036 = vxor.u32 %v3035, 2147483648
  %v3037 = vmul.f32 %v3036, 1.442695
  %v3038 = vpow.pop %v3037
  %v3039 = vadd.f32 %v3038, 1.0
  %v3040 = vrcp.pop %v3039
  %v3041 = vmul.f32 1.0, %v3040
  %v3042 = vadd.f32 %v3025, %v2406
  %v3043 = vmul.f32 %v3034, %v3042
  %v3044 = vadd.f32 %v2838, %v3043
  %v3045 = vtanh.pop %v3044
  %v3046 = vsub.f32 %v2834, %v3045
  %v3047 = vmul.f32 %v3041, %v3046
  %v3048 = vadd.f32 %v3045, %v3047
  %3049 = vst [vmem:[%s994] sm:$0xff] %v3048
  %v3050 = vld [vmem:[%s998] sm:$0xff]
  %v3051 = vld [vmem:[%s998 + $0x8] sm:$0xff]
  %v3052 = vld [vmem:[%s998 + $0x10] sm:$0xff]
  %v3053 = vld [vmem:[%s6] sm:$0xff]
  %v3054 = vld [vmem:[%s6 + $0x8] sm:$0xff]
  %v3055 = vld [vmem:[%s6 + $0x10] sm:$0xff]
  %v3056 = vld [vmem:[%s6 + $0x18] sm:$0xff]
  %v3057 = vld [vmem:[%s6 + $0x20] sm:$0xff]
  %v3058 = vld [vmem:[%s6 + $0x28] sm:$0xff]
  %v3059 = vld [vmem:[%s6 + $0x30] sm:$0xff]
  %v3060 = vld [vmem:[%s6 + $0x38] sm:$0xff]
  %v3061 = vld [vmem:[%s6 + $0x40] sm:$0xff]
  %v3062 = vld [vmem:[%s6 + $0x48] sm:$0xff]
  %v3063 = vld [vmem:[%s6 + $0x50] sm:$0xff]
  %v3064 = vld [vmem:[%s6 + $0x58] sm:$0xff]
  %v3065 = vld [vmem:[%s6 + $0x60] sm:$0xff]
  %v3066 = vld [vmem:[%s6 + $0x68] sm:$0xff]
  %v3067 = vld [vmem:[%s6 + $0x70] sm:$0xff]
  %v3068 = vld [vmem:[%s6 + $0x78] sm:$0xff]
  %v3069 = vld [vmem:[%s6 + $0x80] sm:$0xff]
  %v3070 = vld [vmem:[%s6 + $0x88] sm:$0xff]
  %v3071 = vld [vmem:[%s6 + $0x90] sm:$0xff]
  %v3072 = vld [vmem:[%s6 + $0x98] sm:$0xff]
  %v3073 = vld [vmem:[%s6 + $0xa0] sm:$0xff]
  %v3074 = vld [vmem:[%s6 + $0xa8] sm:$0xff]
  %v3075 = vld [vmem:[%s6 + $0xb0] sm:$0xff]
  %v3076 = vld [vmem:[%s6 + $0xb8] sm:$0xff]
  %v3077 = vld [vmem:[%s6 + $0xc0] sm:$0xff]
  %v3078 = vld [vmem:[%s6 + $0xc8] sm:$0xff]
  %v3079 = vld [vmem:[%s6 + $0xd0] sm:$0xff]
  %v3080 = vld [vmem:[%s6 + $0xd8] sm:$0xff]
  %v3081 = vld [vmem:[%s6 + $0xe0] sm:$0xff]
  %v3082 = vld [vmem:[%s6 + $0xe8] sm:$0xff]
  %v3083 = vld [vmem:[%s6 + $0xf0] sm:$0xff]
  %v3084 = vld [vmem:[%s6 + $0xf8] sm:$0xff]
  %v3085 = vld [vmem:[%s6 + $0x100] sm:$0xff]
  %v3086 = vld [vmem:[%s6 + $0x108] sm:$0xff]
  %v3087 = vld [vmem:[%s6 + $0x110] sm:$0xff]
  %v3088 = vld [vmem:[%s6 + $0x118] sm:$0xff]
  %v3089 = vld [vmem:[%s6 + $0x120] sm:$0xff]
  %v3090 = vld [vmem:[%s6 + $0x128] sm:$0xff]
  %v3091 = vld [vmem:[%s6 + $0x130] sm:$0xff]
  %v3092 = vld [vmem:[%s6 + $0x138] sm:$0xff]
  %v3093 = vld [vmem:[%s6 + $0x140] sm:$0xff]
  %v3094 = vld [vmem:[%s6 + $0x148] sm:$0xff]
  %v3095 = vld [vmem:[%s6 + $0x150] sm:$0xff]
  %v3096 = vld [vmem:[%s6 + $0x158] sm:$0xff]
  %v3097 = vld [vmem:[%s6 + $0x160] sm:$0xff]
  %v3098 = vld [vmem:[%s6 + $0x168] sm:$0xff]
  %v3099 = vld [vmem:[%s6 + $0x170] sm:$0xff]
  %v3100 = vld [vmem:[%s6 + $0x178] sm:$0xff]
  %3101 = vmatprep.subr.mxu0 %v3054
  %3102 = vmatpush1.msra.mxu0 %v3053
  %3103 = vmatprep.subr.mxu0 %v3057
  %3104 = vmatpush1.msra.mxu0 %v3056
  %3105 = vmatprep.subr.mxu0 %v3060
  %3106 = vmatpush1.msra.mxu0 %v3059
  %3107 = vmatprep.subr.mxu0 %v3063
  %3108 = vmatpush1.msra.mxu0 %v3062
  %3109 = vmatprep.subr.mxu0 %v3066
  %3110 = vmatpush1.msra.mxu0 %v3065
  %3111 = vmatprep.subr.mxu0 %v3069
  %3112 = vmatpush1.msra.mxu0 %v3068
  %3113 = vmatprep.subr.mxu0 %v3072
  %3114 = vmatpush1.msra.mxu0 %v3071
  %3115 = vmatprep.subr.mxu0 %v3075
  %3116 = vmatpush1.msra.mxu0 %v3074
  %3117 = vmatprep.subr.mxu0 %v3078
  %3118 = vmatpush1.msra.mxu0 %v3077
  %3119 = vmatprep.subr.mxu0 %v3081
  %3120 = vmatpush1.msra.mxu0 %v3080
  %3121 = vmatprep.subr.mxu0 %v3084
  %3122 = vmatpush1.msra.mxu0 %v3083
  %3123 = vmatprep.subr.mxu0 %v3087
  %3124 = vmatpush1.msra.mxu0 %v3086
  %3125 = vmatprep.subr.mxu0 %v3090
  %3126 = vmatpush1.msra.mxu0 %v3089
  %3127 = vmatprep.subr.mxu0 %v3093
  %3128 = vmatpush1.msra.mxu0 %v3092
  %3129 = vmatprep.subr.mxu0 %v3096
  %3130 = vmatpush1.msra.mxu0 %v3095
  %3131 = vmatprep.subr.mxu0 %v3099
  %3132 = vmatpush1.msra.mxu0 %v3098
  %3133 = vmatprep.subr.mxu0 0.0
  %3134 = vmatpush1.msra.mxu0 0.0
  %3135 = vmatprep.subr.mxu0 0.0
  %3136 = vmatpush1.msra.mxu0 0.0
  %3137 = vmatprep.subr.mxu0 0.0
  %3138 = vmatpush1.msra.mxu0 0.0
  %3139 = vmatprep.subr.mxu0 0.0
  %3140 = vmatpush1.msra.mxu0 0.0
  %3141 = vmatprep.subr.mxu0 0.0
  %3142 = vmatpush1.msra.mxu0 0.0
  %3143 = vmatprep.subr.mxu0 0.0
  %3144 = vmatpush1.msra.mxu0 0.0
  %3145 = vmatprep.subr.mxu0 0.0
  %3146 = vmatpush1.msra.mxu0 0.0
  %3147 = vmatprep.subr.mxu0 0.0
  %3148 = vmatpush1.msra.mxu0 0.0
  %3149 = vmatprep.subr.mxu0 0.0
  %3150 = vmatpush1.msra.mxu0 0.0
  %3151 = vmatprep.subr.mxu0 0.0
  %3152 = vmatpush1.msra.mxu0 0.0
  %3153 = vmatprep.subr.mxu0 0.0
  %3154 = vmatpush1.msra.mxu0 0.0
  %3155 = vmatprep.subr.mxu0 0.0
  %3156 = vmatpush1.msra.mxu0 0.0
  %3157 = vmatprep.subr.mxu0 0.0
  %3158 = vmatpush1.msra.mxu0 0.0
  %3159 = vmatprep.subr.mxu0 0.0
  %3160 = vmatpush1.msra.mxu0 0.0
  %3161 = vmatprep.subr.mxu0 0.0
  %3162 = vmatpush1.msra.mxu0 0.0
  %3163 = vmatprep.subr.mxu0 0.0
  %3164 = vmatpush1.msra.mxu0 0.0
  %3165 = vmatprep.mubr.f32.mxu0 0.0
  %3166 = vmatmul.mubr.f32.gmra.mrb[0].mxu0 %v3048
  %v3167 = vpop.f32.mrb[0].mxu0
  %v3168 = vadd.f32 0.0, %v3167
  %v3169 = vpop.f32.mrb[0].mxu0
  %v3170 = vadd.f32 0.0, %v3169
  %3171 = vdwg.mxu0
  %3172 = vmatprep.subr.mxu0 0.0
  %3173 = vmatpush1.msra.mxu0 %v3055
  %3174 = vmatprep.subr.mxu0 0.0
  %3175 = vmatpush1.msra.mxu0 %v3058
  %3176 = vmatprep.subr.mxu0 0.0
  %3177 = vmatpush1.msra.mxu0 %v3061
  %3178 = vmatprep.subr.mxu0 0.0
  %3179 = vmatpush1.msra.mxu0 %v3064
  %3180 = vmatprep.subr.mxu0 0.0
  %3181 = vmatpush1.msra.mxu0 %v3067
  %3182 = vmatprep.subr.mxu0 0.0
  %3183 = vmatpush1.msra.mxu0 %v3070
  %3184 = vmatprep.subr.mxu0 0.0
  %3185 = vmatpush1.msra.mxu0 %v3073
  %3186 = vmatprep.subr.mxu0 0.0
  %3187 = vmatpush1.msra.mxu0 %v3076
  %3188 = vmatprep.subr.mxu0 0.0
  %3189 = vmatpush1.msra.mxu0 %v3079
  %3190 = vmatprep.subr.mxu0 0.0
  %3191 = vmatpush1.msra.mxu0 %v3082
  %3192 = vmatprep.subr.mxu0 0.0
  %3193 = vmatpush1.msra.mxu0 %v3085
  %3194 = vmatprep.subr.mxu0 0.0
  %3195 = vmatpush1.msra.mxu0 %v3088
  %3196 = vmatprep.subr.mxu0 0.0
  %3197 = vmatpush1.msra.mxu0 %v3091
  %3198 = vmatprep.subr.mxu0 0.0
  %3199 = vmatpush1.msra.mxu0 %v3094
  %3200 = vmatprep.subr.mxu0 0.0
  %3201 = vmatpush1.msra.mxu0 %v3097
  %3202 = vmatprep.subr.mxu0 0.0
  %3203 = vmatpush1.msra.mxu0 %v3100
  %3204 = vmatprep.subr.mxu0 0.0
  %3205 = vmatpush1.msra.mxu0 0.0
  %3206 = vmatprep.subr.mxu0 0.0
  %3207 = vmatpush1.msra.mxu0 0.0
  %3208 = vmatprep.subr.mxu0 0.0
  %3209 = vmatpush1.msra.mxu0 0.0
  %3210 = vmatprep.subr.mxu0 0.0
  %3211 = vmatpush1.msra.mxu0 0.0
  %3212 = vmatprep.subr.mxu0 0.0
  %3213 = vmatpush1.msra.mxu0 0.0
  %3214 = vmatprep.subr.mxu0 0.0
  %3215 = vmatpush1.msra.mxu0 0.0
  %3216 = vmatprep.subr.mxu0 0.0
  %3217 = vmatpush1.msra.mxu0 0.0
  %3218 = vmatprep.subr.mxu0 0.0
  %3219 = vmatpush1.msra.mxu0 0.0
  %3220 = vmatprep.subr.mxu0 0.0
  %3221 = vmatpush1.msra.mxu0 0.0
  %3222 = vmatprep.subr.mxu0 0.0
  %3223 = vmatpush1.msra.mxu0 0.0
  %3224 = vmatprep.subr.mxu0 0.0
  %3225 = vmatpush1.msra.mxu0 0.0
  %3226 = vmatprep.subr.mxu0 0.0
  %3227 = vmatpush1.msra.mxu0 0.0
  %3228 = vmatprep.subr.mxu0 0.0
  %3229 = vmatpush1.msra.mxu0 0.0
  %3230 = vmatprep.subr.mxu0 0.0
  %3231 = vmatpush1.msra.mxu0 0.0
  %3232 = vmatprep.subr.mxu0 0.0
  %3233 = vmatpush1.msra.mxu0 0.0
  %3234 = vmatprep.subr.mxu0 0.0
  %3235 = vmatpush1.msra.mxu0 0.0
  %3236 = vmatprep.mubr.f32.mxu0 0.0
  %3237 = vmatmul.mubr.f32.gmra.mrb[0].mxu0 %v3048
  %v3238 = vpop.f32.mrb[0].mxu0
  %v3239 = vadd.f32 0.0, %v3238
  %v3240 = vpop.f32.mrb[0].mxu0
  %3241 = vdwg.mxu0
  %v3242 = vadd.f32 %v3050, %v3168
  %v3243 = vxor.u32 %v3242, 2147483648
  %v3244 = vmul.f32 %v3243, 1.442695
  %v3245 = vpow.pop %v3244
  %v3246 = vadd.f32 %v3245, 1.0
  %v3247 = vrcp.pop %v3246
  %v3248 = vmul.f32 1.0, %v3247
  %v3249 = vadd.f32 %v3051, %v3170
  %v3250 = vxor.u32 %v3249, 2147483648
  %v3251 = vmul.f32 %v3250, 1.442695
  %v3252 = vpow.pop %v3251
  %v3253 = vadd.f32 %v3252, 1.0
  %v3254 = vrcp.pop %v3253
  %v3255 = vmul.f32 1.0, %v3254
  %v3256 = vadd.f32 %v3239, %v2406
  %v3257 = vmul.f32 %v3248, %v3256
  %v3258 = vadd.f32 %v3052, %v3257
  %v3259 = vtanh.pop %v3258
  %v3260 = vsub.f32 %v3048, %v3259
  %v3261 = vmul.f32 %v3255, %v3260
  %v3262 = vadd.f32 %v3259, %v3261
  %3263 = vst [vmem:[%s1212] sm:$0xff] %v3262
  %v3264 = vld [vmem:[%s1216] sm:$0xff]
  %v3265 = vld [vmem:[%s1216 + $0x8] sm:$0xff]
  %v3266 = vld [vmem:[%s1216 + $0x10] sm:$0xff]
  %v3267 = vld [vmem:[%s6] sm:$0xff]
  %v3268 = vld [vmem:[%s6 + $0x8] sm:$0xff]
  %v3269 = vld [vmem:[%s6 + $0x10] sm:$0xff]
  %v3270 = vld [vmem:[%s6 + $0x18] sm:$0xff]
  %v3271 = vld [vmem:[%s6 + $0x20] sm:$0xff]
  %v3272 = vld [vmem:[%s6 + $0x28] sm:$0xff]
  %v3273 = vld [vmem:[%s6 + $0x30] sm:$0xff]
  %v3274 = vld [vmem:[%s6 + $0x38] sm:$0xff]
  %v3275 = vld [vmem:[%s6 + $0x40] sm:$0xff]
  %v3276 = vld [vmem:[%s6 + $0x48] sm:$0xff]
  %v3277 = vld [vmem:[%s6 + $0x50] sm:$0xff]
  %v3278 = vld [vmem:[%s6 + $0x58] sm:$0xff]
  %v3279 = vld [vmem:[%s6 + $0x60] sm:$0xff]
  %v3280 = vld [vmem:[%s6 + $0x68] sm:$0xff]
  %v3281 = vld [vmem:[%s6 + $0x70] sm:$0xff]
  %v3282 = vld [vmem:[%s6 + $0x78] sm:$0xff]
  %v3283 = vld [vmem:[%s6 + $0x80] sm:$0xff]
  %v3284 = vld [vmem:[%s6 + $0x88] sm:$0xff]
  %v3285 = vld [vmem:[%s6 + $0x90] sm:$0xff]
  %v3286 = vld [vmem:[%s6 + $0x98] sm:$0xff]
  %v3287 = vld [vmem:[%s6 + $0xa0] sm:$0xff]
  %v3288 = vld [vmem:[%s6 + $0xa8] sm:$0xff]
  %v3289 = vld [vmem:[%s6 + $0xb0] sm:$0xff]
  %v3290 = vld [vmem:[%s6 + $0xb8] sm:$0xff]
  %v3291 = vld [vmem:[%s6 + $0xc0] sm:$0xff]
  %v3292 = vld [vmem:[%s6 + $0xc8] sm:$0xff]
  %v3293 = vld [vmem:[%s6 + $0xd0] sm:$0xff]
  %v3294 = vld [vmem:[%s6 + $0xd8] sm:$0xff]
  %v3295 = vld [vmem:[%s6 + $0xe0] sm:$0xff]
  %v3296 = vld [vmem:[%s6 + $0xe8] sm:$0xff]
  %v3297 = vld [vmem:[%s6 + $0xf0] sm:$0xff]
  %v3298 = vld [vmem:[%s6 + $0xf8] sm:$0xff]
  %v3299 = vld [vmem:[%s6 + $0x100] sm:$0xff]
  %v3300 = vld [vmem:[%s6 + $0x108] sm:$0xff]
  %v3301 = vld [vmem:[%s6 + $0x110] sm:$0xff]
  %v3302 = vld [vmem:[%s6 + $0x118] sm:$0xff]
  %v3303 = vld [vmem:[%s6 + $0x120] sm:$0xff]
  %v3304 = vld [vmem:[%s6 + $0x128] sm:$0xff]
  %v3305 = vld [vmem:[%s6 + $0x130] sm:$0xff]
  %v3306 = vld [vmem:[%s6 + $0x138] sm:$0xff]
  %v3307 = vld [vmem:[%s6 + $0x140] sm:$0xff]
  %v3308 = vld [vmem:[%s6 + $0x148] sm:$0xff]
  %v3309 = vld [vmem:[%s6 + $0x150] sm:$0xff]
  %v3310 = vld [vmem:[%s6 + $0x158] sm:$0xff]
  %v3311 = vld [vmem:[%s6 + $0x160] sm:$0xff]
  %v3312 = vld [vmem:[%s6 + $0x168] sm:$0xff]
  %v3313 = vld [vmem:[%s6 + $0x170] sm:$0xff]
  %v3314 = vld [vmem:[%s6 + $0x178] sm:$0xff]
  %3315 = vmatprep.subr.mxu0 %v3268
  %3316 = vmatpush1.msra.mxu0 %v3267
  %3317 = vmatprep.subr.mxu0 %v3271
  %3318 = vmatpush1.msra.mxu0 %v3270
  %3319 = vmatprep.subr.mxu0 %v3274
  %3320 = vmatpush1.msra.mxu0 %v3273
  %3321 = vmatprep.subr.mxu0 %v3277
  %3322 = vmatpush1.msra.mxu0 %v3276
  %3323 = vmatprep.subr.mxu0 %v3280
  %3324 = vmatpush1.msra.mxu0 %v3279
  %3325 = vmatprep.subr.mxu0 %v3283
  %3326 = vmatpush1.msra.mxu0 %v3282
  %3327 = vmatprep.subr.mxu0 %v3286
  %3328 = vmatpush1.msra.mxu0 %v3285
  %3329 = vmatprep.subr.mxu0 %v3289
  %3330 = vmatpush1.msra.mxu0 %v3288
  %3331 = vmatprep.subr.mxu0 %v3292
  %3332 = vmatpush1.msra.mxu0 %v3291
  %3333 = vmatprep.subr.mxu0 %v3295
  %3334 = vmatpush1.msra.mxu0 %v3294
  %3335 = vmatprep.subr.mxu0 %v3298
  %3336 = vmatpush1.msra.mxu0 %v3297
  %3337 = vmatprep.subr.mxu0 %v3301
  %3338 = vmatpush1.msra.mxu0 %v3300
  %3339 = vmatprep.subr.mxu0 %v3304
  %3340 = vmatpush1.msra.mxu0 %v3303
  %3341 = vmatprep.subr.mxu0 %v3307
  %3342 = vmatpush1.msra.mxu0 %v3306
  %3343 = vmatprep.subr.mxu0 %v3310
  %3344 = vmatpush1.msra.mxu0 %v3309
  %3345 = vmatprep.subr.mxu0 %v3313
  %3346 = vmatpush1.msra.mxu0 %v3312
  %3347 = vmatprep.subr.mxu0 0.0
  %3348 = vmatpush1.msra.mxu0 0.0
  %3349 = vmatprep.subr.mxu0 0.0
  %3350 = vmatpush1.msra.mxu0 0.0
  %3351 = vmatprep.subr.mxu0 0.0
  %3352 = vmatpush1.msra.mxu0 0.0
  %3353 = vmatprep.subr.mxu0 0.0
  %3354 = vmatpush1.msra.mxu0 0.0
  %3355 = vmatprep.subr.mxu0 0.0
  %3356 = vmatpush1.msra.mxu0 0.0
  %3357 = vmatprep.subr.mxu0 0.0
  %3358 = vmatpush1.msra.mxu0 0.0
  %3359 = vmatprep.subr.mxu0 0.0
  %3360 = vmatpush1.msra.mxu0 0.0
  %3361 = vmatprep.subr.mxu0 0.0
  %3362 = vmatpush1.msra.mxu0 0.0
  %3363 = vmatprep.subr.mxu0 0.0
  %3364 = vmatpush1.msra.mxu0 0.0
  %3365 = vmatprep.subr.mxu0 0.0
  %3366 = vmatpush1.msra.mxu0 0.0
  %3367 = vmatprep.subr.mxu0 0.0
  %3368 = vmatpush1.msra.mxu0 0.0
  %3369 = vmatprep.subr.mxu0 0.0
  %3370 = vmatpush1.msra.mxu0 0.0
  %3371 = vmatprep.subr.mxu0 0.0
  %3372 = vmatpush1.msra.mxu0 0.0
  %3373 = vmatprep.subr.mxu0 0.0
  %3374 = vmatpush1.msra.mxu0 0.0
  %3375 = vmatprep.subr.mxu0 0.0
  %3376 = vmatpush1.msra.mxu0 0.0
  %3377 = vmatprep.subr.mxu0 0.0
  %3378 = vmatpush1.msra.mxu0 0.0
  %3379 = vmatprep.mubr.f32.mxu0 0.0
  %3380 = vmatmul.mubr.f32.gmra.mrb[0].mxu0 %v3262
  %v3381 = vpop.f32.mrb[0].mxu0
  %v3382 = vadd.f32 0.0, %v3381
  %v3383 = vpop.f32.mrb[0].mxu0
  %v3384 = vadd.f32 0.0, %v3383
  %3385 = vdwg.mxu0
  %3386 = vmatprep.subr.mxu0 0.0
  %3387 = vmatpush1.msra.mxu0 %v3269
  %3388 = vmatprep.subr.mxu0 0.0
  %3389 = vmatpush1.msra.mxu0 %v3272
  %3390 = vmatprep.subr.mxu0 0.0
  %3391 = vmatpush1.msra.mxu0 %v3275
  %3392 = vmatprep.subr.mxu0 0.0
  %3393 = vmatpush1.msra.mxu0 %v3278
  %3394 = vmatprep.subr.mxu0 0.0
  %3395 = vmatpush1.msra.mxu0 %v3281
  %3396 = vmatprep.subr.mxu0 0.0
  %3397 = vmatpush1.msra.mxu0 %v3284
  %3398 = vmatprep.subr.mxu0 0.0
  %3399 = vmatpush1.msra.mxu0 %v3287
  %3400 = vmatprep.subr.mxu0 0.0
  %3401 = vmatpush1.msra.mxu0 %v3290
  %3402 = vmatprep.subr.mxu0 0.0
  %3403 = vmatpush1.msra.mxu0 %v3293
  %3404 = vmatprep.subr.mxu0 0.0
  %3405 = vmatpush1.msra.mxu0 %v3296
  %3406 = vmatprep.subr.mxu0 0.0
  %3407 = vmatpush1.msra.mxu0 %v3299
  %3408 = vmatprep.subr.mxu0 0.0
  %3409 = vmatpush1.msra.mxu0 %v3302
  %3410 = vmatprep.subr.mxu0 0.0
  %3411 = vmatpush1.msra.mxu0 %v3305
  %3412 = vmatprep.subr.mxu0 0.0
  %3413 = vmatpush1.msra.mxu0 %v3308
  %3414 = vmatprep.subr.mxu0 0.0
  %3415 = vmatpush1.msra.mxu0 %v3311
  %3416 = vmatprep.subr.mxu0 0.0
  %3417 = vmatpush1.msra.mxu0 %v3314
  %3418 = vmatprep.subr.mxu0 0.0
  %3419 = vmatpush1.msra.mxu0 0.0
  %3420 = vmatprep.subr.mxu0 0.0
  %3421 = vmatpush1.msra.mxu0 0.0
  %3422 = vmatprep.subr.mxu0 0.0
  %3423 = vmatpush1.msra.mxu0 0.0
  %3424 = vmatprep.subr.mxu0 0.0
  %3425 = vmatpush1.msra.mxu0 0.0
  %3426 = vmatprep.subr.mxu0 0.0
  %3427 = vmatpush1.msra.mxu0 0.0
  %3428 = vmatprep.subr.mxu0 0.0
  %3429 = vmatpush1.msra.mxu0 0.0
  %3430 = vmatprep.subr.mxu0 0.0
  %3431 = vmatpush1.msra.mxu0 0.0
  %3432 = vmatprep.subr.mxu0 0.0
  %3433 = vmatpush1.msra.mxu0 0.0
  %3434 = vmatprep.subr.mxu0 0.0
  %3435 = vmatpush1.msra.mxu0 0.0
  %3436 = vmatprep.subr.mxu0 0.0
  %3437 = vmatpush1.msra.mxu0 0.0
  %3438 = vmatprep.subr.mxu0 0.0
  %3439 = vmatpush1.msra.mxu0 0.0
  %3440 = vmatprep.subr.mxu0 0.0
  %3441 = vmatpush1.msra.mxu0 0.0
  %3442 = vmatprep.subr.mxu0 0.0
  %3443 = vmatpush1.msra.mxu0 0.0
  %3444 = vmatprep.subr.mxu0 0.0
  %3445 = vmatpush1.msra.mxu0 0.0
  %3446 = vmatprep.subr.mxu0 0.0
  %3447 = vmatpush1.msra.mxu0 0.0
  %3448 = vmatprep.subr.mxu0 0.0
  %3449 = vmatpush1.msra.mxu0 0.0
  %3450 = vmatprep.mubr.f32.mxu0 0.0
  %3451 = vmatmul.mubr.f32.gmra.mrb[0].mxu0 %v3262
  %v3452 = vpop.f32.mrb[0].mxu0
  %v3453 = vadd.f32 0.0, %v3452
  %v3454 = vpop.f32.mrb[0].mxu0
  %3455 = vdwg.mxu0
  %v3456 = vadd.f32 %v3264, %v3382
  %v3457 = vxor.u32 %v3456, 2147483648
  %v3458 = vmul.f32 %v3457, 1.442695
  %v3459 = vpow.pop %v3458
  %v3460 = vadd.f32 %v3459, 1.0
  %v3461 = vrcp.pop %v3460
  %v3462 = vmul.f32 1.0, %v3461
  %v3463 = vadd.f32 %v3265, %v3384
  %v3464 = vxor.u32 %v3463, 2147483648
  %v3465 = vmul.f32 %v3464, 1.442695
  %v3466 = vpow.pop %v3465
  %v3467 = vadd.f32 %v3466, 1.0
  %v3468 = vrcp.pop %v3467
  %v3469 = vmul.f32 1.0, %v3468
  %v3470 = vadd.f32 %v3453, %v2406
  %v3471 = vmul.f32 %v3462, %v3470
  %v3472 = vadd.f32 %v3266, %v3471
  %v3473 = vtanh.pop %v3472
  %v3474 = vsub.f32 %v3262, %v3473
  %v3475 = vmul.f32 %v3469, %v3474
  %v3476 = vadd.f32 %v3473, %v3475
  %3477 = vst [vmem:[%s1430] sm:$0xff] %v3476
  %v3478 = vld [vmem:[%s1434] sm:$0xff]
  %v3479 = vld [vmem:[%s1434 + $0x8] sm:$0xff]
  %v3480 = vld [vmem:[%s1434 + $0x10] sm:$0xff]
  %v3481 = vld [vmem:[%s6] sm:$0xff]
  %v3482 = vld [vmem:[%s6 + $0x8] sm:$0xff]
  %v3483 = vld [vmem:[%s6 + $0x10] sm:$0xff]
  %v3484 = vld [vmem:[%s6 + $0x18] sm:$0xff]
  %v3485 = vld [vmem:[%s6 + $0x20] sm:$0xff]
  %v3486 = vld [vmem:[%s6 + $0x28] sm:$0xff]
  %v3487 = vld [vmem:[%s6 + $0x30] sm:$0xff]
  %v3488 = vld [vmem:[%s6 + $0x38] sm:$0xff]
  %v3489 = vld [vmem:[%s6 + $0x40] sm:$0xff]
  %v3490 = vld [vmem:[%s6 + $0x48] sm:$0xff]
  %v3491 = vld [vmem:[%s6 + $0x50] sm:$0xff]
  %v3492 = vld [vmem:[%s6 + $0x58] sm:$0xff]
  %v3493 = vld [vmem:[%s6 + $0x60] sm:$0xff]
  %v3494 = vld [vmem:[%s6 + $0x68] sm:$0xff]
  %v3495 = vld [vmem:[%s6 + $0x70] sm:$0xff]
  %v3496 = vld [vmem:[%s6 + $0x78] sm:$0xff]
  %v3497 = vld [vmem:[%s6 + $0x80] sm:$0xff]
  %v3498 = vld [vmem:[%s6 + $0x88] sm:$0xff]
  %v3499 = vld [vmem:[%s6 + $0x90] sm:$0xff]
  %v3500 = vld [vmem:[%s6 + $0x98] sm:$0xff]
  %v3501 = vld [vmem:[%s6 + $0xa0] sm:$0xff]
  %v3502 = vld [vmem:[%s6 + $0xa8] sm:$0xff]
  %v3503 = vld [vmem:[%s6 + $0xb0] sm:$0xff]
  %v3504 = vld [vmem:[%s6 + $0xb8] sm:$0xff]
  %v3505 = vld [vmem:[%s6 + $0xc0] sm:$0xff]
  %v3506 = vld [vmem:[%s6 + $0xc8] sm:$0xff]
  %v3507 = vld [vmem:[%s6 + $0xd0] sm:$0xff]
  %v3508 = vld [vmem:[%s6 + $0xd8] sm:$0xff]
  %v3509 = vld [vmem:[%s6 + $0xe0] sm:$0xff]
  %v3510 = vld [vmem:[%s6 + $0xe8] sm:$0xff]
  %v3511 = vld [vmem:[%s6 + $0xf0] sm:$0xff]
  %v3512 = vld [vmem:[%s6 + $0xf8] sm:$0xff]
  %v3513 = vld [vmem:[%s6 + $0x100] sm:$0xff]
  %v3514 = vld [vmem:[%s6 + $0x108] sm:$0xff]
  %v3515 = vld [vmem:[%s6 + $0x110] sm:$0xff]
  %v3516 = vld [vmem:[%s6 + $0x118] sm:$0xff]
  %v3517 = vld [vmem:[%s6 + $0x120] sm:$0xff]
  %v3518 = vld [vmem:[%s6 + $0x128] sm:$0xff]
  %v3519 = vld [vmem:[%s6 + $0x130] sm:$0xff]
  %v3520 = vld [vmem:[%s6 + $0x138] sm:$0xff]
  %v3521 = vld [vmem:[%s6 + $0x140] sm:$0xff]
  %v3522 = vld [vmem:[%s6 + $0x148] sm:$0xff]
  %v3523 = vld [vmem:[%s6 + $0x150] sm:$0xff]
  %v3524 = vld [vmem:[%s6 + $0x158] sm:$0xff]
  %v3525 = vld [vmem:[%s6 + $0x160] sm:$0xff]
  %v3526 = vld [vmem:[%s6 + $0x168] sm:$0xff]
  %v3527 = vld [vmem:[%s6 + $0x170] sm:$0xff]
  %v3528 = vld [vmem:[%s6 + $0x178] sm:$0xff]
  %3529 = vmatprep.subr.mxu0 %v3482
  %3530 = vmatpush1.msra.mxu0 %v3481
  %3531 = vmatprep.subr.mxu0 %v3485
  %3532 = vmatpush1.msra.mxu0 %v3484
  %3533 = vmatprep.subr.mxu0 %v3488
  %3534 = vmatpush1.msra.mxu0 %v3487
  %3535 = vmatprep.subr.mxu0 %v3491
  %3536 = vmatpush1.msra.mxu0 %v3490
  %3537 = vmatprep.subr.mxu0 %v3494
  %3538 = vmatpush1.msra.mxu0 %v3493
  %3539 = vmatprep.subr.mxu0 %v3497
  %3540 = vmatpush1.msra.mxu0 %v3496
  %3541 = vmatprep.subr.mxu0 %v3500
  %3542 = vmatpush1.msra.mxu0 %v3499
  %3543 = vmatprep.subr.mxu0 %v3503
  %3544 = vmatpush1.msra.mxu0 %v3502
  %3545 = vmatprep.subr.mxu0 %v3506
  %3546 = vmatpush1.msra.mxu0 %v3505
  %3547 = vmatprep.subr.mxu0 %v3509
  %3548 = vmatpush1.msra.mxu0 %v3508
  %3549 = vmatprep.subr.mxu0 %v3512
  %3550 = vmatpush1.msra.mxu0 %v3511
  %3551 = vmatprep.subr.mxu0 %v3515
  %3552 = vmatpush1.msra.mxu0 %v3514
  %3553 = vmatprep.subr.mxu0 %v3518
  %3554 = vmatpush1.msra.mxu0 %v3517
  %3555 = vmatprep.subr.mxu0 %v3521
  %3556 = vmatpush1.msra.mxu0 %v3520
  %3557 = vmatprep.subr.mxu0 %v3524
  %3558 = vmatpush1.msra.mxu0 %v3523
  %3559 = vmatprep.subr.mxu0 %v3527
  %3560 = vmatpush1.msra.mxu0 %v3526
  %3561 = vmatprep.subr.mxu0 0.0
  %3562 = vmatpush1.msra.mxu0 0.0
  %3563 = vmatprep.subr.mxu0 0.0
  %3564 = vmatpush1.msra.mxu0 0.0
  %3565 = vmatprep.subr.mxu0 0.0
  %3566 = vmatpush1.msra.mxu0 0.0
  %3567 = vmatprep.subr.mxu0 0.0
  %3568 = vmatpush1.msra.mxu0 0.0
  %3569 = vmatprep.subr.mxu0 0.0
  %3570 = vmatpush1.msra.mxu0 0.0
  %3571 = vmatprep.subr.mxu0 0.0
  %3572 = vmatpush1.msra.mxu0 0.0
  %3573 = vmatprep.subr.mxu0 0.0
  %3574 = vmatpush1.msra.mxu0 0.0
  %3575 = vmatprep.subr.mxu0 0.0
  %3576 = vmatpush1.msra.mxu0 0.0
  %3577 = vmatprep.subr.mxu0 0.0
  %3578 = vmatpush1.msra.mxu0 0.0
  %3579 = vmatprep.subr.mxu0 0.0
  %3580 = vmatpush1.msra.mxu0 0.0
  %3581 = vmatprep.subr.mxu0 0.0
  %3582 = vmatpush1.msra.mxu0 0.0
  %3583 = vmatprep.subr.mxu0 0.0
  %3584 = vmatpush1.msra.mxu0 0.0
  %3585 = vmatprep.subr.mxu0 0.0
  %3586 = vmatpush1.msra.mxu0 0.0
  %3587 = vmatprep.subr.mxu0 0.0
  %3588 = vmatpush1.msra.mxu0 0.0
  %3589 = vmatprep.subr.mxu0 0.0
  %3590 = vmatpush1.msra.mxu0 0.0
  %3591 = vmatprep.subr.mxu0 0.0
  %3592 = vmatpush1.msra.mxu0 0.0
  %3593 = vmatprep.mubr.f32.mxu0 0.0
  %3594 = vmatmul.mubr.f32.gmra.mrb[0].mxu0 %v3476
  %v3595 = vpop.f32.mrb[0].mxu0
  %v3596 = vadd.f32 0.0, %v3595
  %v3597 = vpop.f32.mrb[0].mxu0
  %v3598 = vadd.f32 0.0, %v3597
  %3599 = vdwg.mxu0
  %3600 = vmatprep.subr.mxu0 0.0
  %3601 = vmatpush1.msra.mxu0 %v3483
  %3602 = vmatprep.subr.mxu0 0.0
  %3603 = vmatpush1.msra.mxu0 %v3486
  %3604 = vmatprep.subr.mxu0 0.0
  %3605 = vmatpush1.msra.mxu0 %v3489
  %3606 = vmatprep.subr.mxu0 0.0
  %3607 = vmatpush1.msra.mxu0 %v3492
  %3608 = vmatprep.subr.mxu0 0.0
  %3609 = vmatpush1.msra.mxu0 %v3495
  %3610 = vmatprep.subr.mxu0 0.0
  %3611 = vmatpush1.msra.mxu0 %v3498
  %3612 = vmatprep.subr.mxu0 0.0
  %3613 = vmatpush1.msra.mxu0 %v3501
  %3614 = vmatprep.subr.mxu0 0.0
  %3615 = vmatpush1.msra.mxu0 %v3504
  %3616 = vmatprep.subr.mxu0 0.0
  %3617 = vmatpush1.msra.mxu0 %v3507
  %3618 = vmatprep.subr.mxu0 0.0
  %3619 = vmatpush1.msra.mxu0 %v3510
  %3620 = vmatprep.subr.mxu0 0.0
  %3621 = vmatpush1.msra.mxu0 %v3513
  %3622 = vmatprep.subr.mxu0 0.0
  %3623 = vmatpush1.msra.mxu0 %v3516
  %3624 = vmatprep.subr.mxu0 0.0
  %3625 = vmatpush1.msra.mxu0 %v3519
  %3626 = vmatprep.subr.mxu0 0.0
  %3627 = vmatpush1.msra.mxu0 %v3522
  %3628 = vmatprep.subr.mxu0 0.0
  %3629 = vmatpush1.msra.mxu0 %v3525
  %3630 = vmatprep.subr.mxu0 0.0
  %3631 = vmatpush1.msra.mxu0 %v3528
  %3632 = vmatprep.subr.mxu0 0.0
  %3633 = vmatpush1.msra.mxu0 0.0
  %3634 = vmatprep.subr.mxu0 0.0
  %3635 = vmatpush1.msra.mxu0 0.0
  %3636 = vmatprep.subr.mxu0 0.0
  %3637 = vmatpush1.msra.mxu0 0.0
  %3638 = vmatprep.subr.mxu0 0.0
  %3639 = vmatpush1.msra.mxu0 0.0
  %3640 = vmatprep.subr.mxu0 0.0
  %3641 = vmatpush1.msra.mxu0 0.0
  %3642 = vmatprep.subr.mxu0 0.0
  %3643 = vmatpush1.msra.mxu0 0.0
  %3644 = vmatprep.subr.mxu0 0.0
  %3645 = vmatpush1.msra.mxu0 0.0
  %3646 = vmatprep.subr.mxu0 0.0
  %3647 = vmatpush1.msra.mxu0 0.0
  %3648 = vmatprep.subr.mxu0 0.0
  %3649 = vmatpush1.msra.mxu0 0.0
  %3650 = vmatprep.subr.mxu0 0.0
  %3651 = vmatpush1.msra.mxu0 0.0
  %3652 = vmatprep.subr.mxu0 0.0
  %3653 = vmatpush1.msra.mxu0 0.0
  %3654 = vmatprep.subr.mxu0 0.0
  %3655 = vmatpush1.msra.mxu0 0.0
  %3656 = vmatprep.subr.mxu0 0.0
  %3657 = vmatpush1.msra.mxu0 0.0
  %3658 = vmatprep.subr.mxu0 0.0
  %3659 = vmatpush1.msra.mxu0 0.0
  %3660 = vmatprep.subr.mxu0 0.0
  %3661 = vmatpush1.msra.mxu0 0.0
  %3662 = vmatprep.subr.mxu0 0.0
  %3663 = vmatpush1.msra.mxu0 0.0
  %3664 = vmatprep.mubr.f32.mxu0 0.0
  %3665 = vmatmul.mubr.f32.gmra.mrb[0].mxu0 %v3476
  %v3666 = vpop.f32.mrb[0].mxu0
  %v3667 = vadd.f32 0.0, %v3666
  %v3668 = vpop.f32.mrb[0].mxu0
  %3669 = vdwg.mxu0
  %v3670 = vadd.f32 %v3478, %v3596
  %v3671 = vxor.u32 %v3670, 2147483648
  %v3672 = vmul.f32 %v3671, 1.442695
  %v3673 = vpow.pop %v3672
  %v3674 = vadd.f32 %v3673, 1.0
  %v3675 = vrcp.pop %v3674
  %v3676 = vmul.f32 1.0, %v3675
  %v3677 = vadd.f32 %v3479, %v3598
  %v3678 = vxor.u32 %v3677, 2147483648
  %v3679 = vmul.f32 %v3678, 1.442695
  %v3680 = vpow.pop %v3679
  %v3681 = vadd.f32 %v3680, 1.0
  %v3682 = vrcp.pop %v3681
  %v3683 = vmul.f32 1.0, %v3682
  %v3684 = vadd.f32 %v3667, %v2406
  %v3685 = vmul.f32 %v3676, %v3684
  %v3686 = vadd.f32 %v3480, %v3685
  %v3687 = vtanh.pop %v3686
  %v3688 = vsub.f32 %v3476, %v3687
  %v3689 = vmul.f32 %v3683, %v3688
  %v3690 = vadd.f32 %v3687, %v3689
  %3691 = vst [vmem:[%s1648] sm:$0xff] %v3690
  %v3692 = vld [vmem:[%s1652] sm:$0xff]
  %v3693 = vld [vmem:[%s1652 + $0x8] sm:$0xff]
  %v3694 = vld [vmem:[%s1652 + $0x10] sm:$0xff]
  %v3695 = vld [vmem:[%s6] sm:$0xff]
  %v3696 = vld [vmem:[%s6 + $0x8] sm:$0xff]
  %v3697 = vld [vmem:[%s6 + $0x10] sm:$0xff]
  %v3698 = vld [vmem:[%s6 + $0x18] sm:$0xff]
  %v3699 = vld [vmem:[%s6 + $0x20] sm:$0xff]
  %v3700 = vld [vmem:[%s6 + $0x28] sm:$0xff]
  %v3701 = vld [vmem:[%s6 + $0x30] sm:$0xff]
  %v3702 = vld [vmem:[%s6 + $0x38] sm:$0xff]
  %v3703 = vld [vmem:[%s6 + $0x40] sm:$0xff]
  %v3704 = vld [vmem:[%s6 + $0x48] sm:$0xff]
  %v3705 = vld [vmem:[%s6 + $0x50] sm:$0xff]
  %v3706 = vld [vmem:[%s6 + $0x58] sm:$0xff]
  %v3707 = vld [vmem:[%s6 + $0x60] sm:$0xff]
  %v3708 = vld [vmem:[%s6 + $0x68] sm:$0xff]
  %v3709 = vld [vmem:[%s6 + $0x70] sm:$0xff]
  %v3710 = vld [vmem:[%s6 + $0x78] sm:$0xff]
  %v3711 = vld [vmem:[%s6 + $0x80] sm:$0xff]
  %v3712 = vld [vmem:[%s6 + $0x88] sm:$0xff]
  %v3713 = vld [vmem:[%s6 + $0x90] sm:$0xff]
  %v3714 = vld [vmem:[%s6 + $0x98] sm:$0xff]
  %v3715 = vld [vmem:[%s6 + $0xa0] sm:$0xff]
  %v3716 = vld [vmem:[%s6 + $0xa8] sm:$0xff]
  %v3717 = vld [vmem:[%s6 + $0xb0] sm:$0xff]
  %v3718 = vld [vmem:[%s6 + $0xb8] sm:$0xff]
  %v3719 = vld [vmem:[%s6 + $0xc0] sm:$0xff]
  %v3720 = vld [vmem:[%s6 + $0xc8] sm:$0xff]
  %v3721 = vld [vmem:[%s6 + $0xd0] sm:$0xff]
  %v3722 = vld [vmem:[%s6 + $0xd8] sm:$0xff]
  %v3723 = vld [vmem:[%s6 + $0xe0] sm:$0xff]
  %v3724 = vld [vmem:[%s6 + $0xe8] sm:$0xff]
  %v3725 = vld [vmem:[%s6 + $0xf0] sm:$0xff]
  %v3726 = vld [vmem:[%s6 + $0xf8] sm:$0xff]
  %v3727 = vld [vmem:[%s6 + $0x100] sm:$0xff]
  %v3728 = vld [vmem:[%s6 + $0x108] sm:$0xff]
  %v3729 = vld [vmem:[%s6 + $0x110] sm:$0xff]
  %v3730 = vld [vmem:[%s6 + $0x118] sm:$0xff]
  %v3731 = vld [vmem:[%s6 + $0x120] sm:$0xff]
  %v3732 = vld [vmem:[%s6 + $0x128] sm:$0xff]
  %v3733 = vld [vmem:[%s6 + $0x130] sm:$0xff]
  %v3734 = vld [vmem:[%s6 + $0x138] sm:$0xff]
  %v3735 = vld [vmem:[%s6 + $0x140] sm:$0xff]
  %v3736 = vld [vmem:[%s6 + $0x148] sm:$0xff]
  %v3737 = vld [vmem:[%s6 + $0x150] sm:$0xff]
  %v3738 = vld [vmem:[%s6 + $0x158] sm:$0xff]
  %v3739 = vld [vmem:[%s6 + $0x160] sm:$0xff]
  %v3740 = vld [vmem:[%s6 + $0x168] sm:$0xff]
  %v3741 = vld [vmem:[%s6 + $0x170] sm:$0xff]
  %v3742 = vld [vmem:[%s6 + $0x178] sm:$0xff]
  %3743 = vmatprep.subr.mxu0 %v3696
  %3744 = vmatpush1.msra.mxu0 %v3695
  %3745 = vmatprep.subr.mxu0 %v3699
  %3746 = vmatpush1.msra.mxu0 %v3698
  %3747 = vmatprep.subr.mxu0 %v3702
  %3748 = vmatpush1.msra.mxu0 %v3701
  %3749 = vmatprep.subr.mxu0 %v3705
  %3750 = vmatpush1.msra.mxu0 %v3704
  %3751 = vmatprep.subr.mxu0 %v3708
  %3752 = vmatpush1.msra.mxu0 %v3707
  %3753 = vmatprep.subr.mxu0 %v3711
  %3754 = vmatpush1.msra.mxu0 %v3710
  %3755 = vmatprep.subr.mxu0 %v3714
  %3756 = vmatpush1.msra.mxu0 %v3713
  %3757 = vmatprep.subr.mxu0 %v3717
  %3758 = vmatpush1.msra.mxu0 %v3716
  %3759 = vmatprep.subr.mxu0 %v3720
  %3760 = vmatpush1.msra.mxu0 %v3719
  %3761 = vmatprep.subr.mxu0 %v3723
  %3762 = vmatpush1.msra.mxu0 %v3722
  %3763 = vmatprep.subr.mxu0 %v3726
  %3764 = vmatpush1.msra.mxu0 %v3725
  %3765 = vmatprep.subr.mxu0 %v3729
  %3766 = vmatpush1.msra.mxu0 %v3728
  %3767 = vmatprep.subr.mxu0 %v3732
  %3768 = vmatpush1.msra.mxu0 %v3731
  %3769 = vmatprep.subr.mxu0 %v3735
  %3770 = vmatpush1.msra.mxu0 %v3734
  %3771 = vmatprep.subr.mxu0 %v3738
  %3772 = vmatpush1.msra.mxu0 %v3737
  %3773 = vmatprep.subr.mxu0 %v3741
  %3774 = vmatpush1.msra.mxu0 %v3740
  %3775 = vmatprep.subr.mxu0 0.0
  %3776 = vmatpush1.msra.mxu0 0.0
  %3777 = vmatprep.subr.mxu0 0.0
  %3778 = vmatpush1.msra.mxu0 0.0
  %3779 = vmatprep.subr.mxu0 0.0
  %3780 = vmatpush1.msra.mxu0 0.0
  %3781 = vmatprep.subr.mxu0 0.0
  %3782 = vmatpush1.msra.mxu0 0.0
  %3783 = vmatprep.subr.mxu0 0.0
  %3784 = vmatpush1.msra.mxu0 0.0
  %3785 = vmatprep.subr.mxu0 0.0
  %3786 = vmatpush1.msra.mxu0 0.0
  %3787 = vmatprep.subr.mxu0 0.0
  %3788 = vmatpush1.msra.mxu0 0.0
  %3789 = vmatprep.subr.mxu0 0.0
  %3790 = vmatpush1.msra.mxu0 0.0
  %3791 = vmatprep.subr.mxu0 0.0
  %3792 = vmatpush1.msra.mxu0 0.0
  %3793 = vmatprep.subr.mxu0 0.0
  %3794 = vmatpush1.msra.mxu0 0.0
  %3795 = vmatprep.subr.mxu0 0.0
  %3796 = vmatpush1.msra.mxu0 0.0
  %3797 = vmatprep.subr.mxu0 0.0
  %3798 = vmatpush1.msra.mxu0 0.0
  %3799 = vmatprep.subr.mxu0 0.0
  %3800 = vmatpush1.msra.mxu0 0.0
  %3801 = vmatprep.subr.mxu0 0.0
  %3802 = vmatpush1.msra.mxu0 0.0
  %3803 = vmatprep.subr.mxu0 0.0
  %3804 = vmatpush1.msra.mxu0 0.0
  %3805 = vmatprep.subr.mxu0 0.0
  %3806 = vmatpush1.msra.mxu0 0.0
  %3807 = vmatprep.mubr.f32.mxu0 0.0
  %3808 = vmatmul.mubr.f32.gmra.mrb[0].mxu0 %v3690
  %v3809 = vpop.f32.mrb[0].mxu0
  %v3810 = vadd.f32 0.0, %v3809
  %v3811 = vpop.f32.mrb[0].mxu0
  %v3812 = vadd.f32 0.0, %v3811
  %3813 = vdwg.mxu0
  %3814 = vmatprep.subr.mxu0 0.0
  %3815 = vmatpush1.msra.mxu0 %v3697
  %3816 = vmatprep.subr.mxu0 0.0
  %3817 = vmatpush1.msra.mxu0 %v3700
  %3818 = vmatprep.subr.mxu0 0.0
  %3819 = vmatpush1.msra.mxu0 %v3703
  %3820 = vmatprep.subr.mxu0 0.0
  %3821 = vmatpush1.msra.mxu0 %v3706
  %3822 = vmatprep.subr.mxu0 0.0
  %3823 = vmatpush1.msra.mxu0 %v3709
  %3824 = vmatprep.subr.mxu0 0.0
  %3825 = vmatpush1.msra.mxu0 %v3712
  %3826 = vmatprep.subr.mxu0 0.0
  %3827 = vmatpush1.msra.mxu0 %v3715
  %3828 = vmatprep.subr.mxu0 0.0
  %3829 = vmatpush1.msra.mxu0 %v3718
  %3830 = vmatprep.subr.mxu0 0.0
  %3831 = vmatpush1.msra.mxu0 %v3721
  %3832 = vmatprep.subr.mxu0 0.0
  %3833 = vmatpush1.msra.mxu0 %v3724
  %3834 = vmatprep.subr.mxu0 0.0
  %3835 = vmatpush1.msra.mxu0 %v3727
  %3836 = vmatprep.subr.mxu0 0.0
  %3837 = vmatpush1.msra.mxu0 %v3730
  %3838 = vmatprep.subr.mxu0 0.0
  %3839 = vmatpush1.msra.mxu0 %v3733
  %3840 = vmatprep.subr.mxu0 0.0
  %3841 = vmatpush1.msra.mxu0 %v3736
  %3842 = vmatprep.subr.mxu0 0.0
  %3843 = vmatpush1.msra.mxu0 %v3739
  %3844 = vmatprep.subr.mxu0 0.0
  %3845 = vmatpush1.msra.mxu0 %v3742
  %3846 = vmatprep.subr.mxu0 0.0
  %3847 = vmatpush1.msra.mxu0 0.0
  %3848 = vmatprep.subr.mxu0 0.0
  %3849 = vmatpush1.msra.mxu0 0.0
  %3850 = vmatprep.subr.mxu0 0.0
  %3851 = vmatpush1.msra.mxu0 0.0
  %3852 = vmatprep.subr.mxu0 0.0
  %3853 = vmatpush1.msra.mxu0 0.0
  %3854 = vmatprep.subr.mxu0 0.0
  %3855 = vmatpush1.msra.mxu0 0.0
  %3856 = vmatprep.subr.mxu0 0.0
  %3857 = vmatpush1.msra.mxu0 0.0
  %3858 = vmatprep.subr.mxu0 0.0
  %3859 = vmatpush1.msra.mxu0 0.0
  %3860 = vmatprep.subr.mxu0 0.0
  %3861 = vmatpush1.msra.mxu0 0.0
  %3862 = vmatprep.subr.mxu0 0.0
  %3863 = vmatpush1.msra.mxu0 0.0
  %3864 = vmatprep.subr.mxu0 0.0
  %3865 = vmatpush1.msra.mxu0 0.0
  %3866 = vmatprep.subr.mxu0 0.0
  %3867 = vmatpush1.msra.mxu0 0.0
  %3868 = vmatprep.subr.mxu0 0.0
  %3869 = vmatpush1.msra.mxu0 0.0
  %3870 = vmatprep.subr.mxu0 0.0
  %3871 = vmatpush1.msra.mxu0 0.0
  %3872 = vmatprep.subr.mxu0 0.0
  %3873 = vmatpush1.msra.mxu0 0.0
  %3874 = vmatprep.subr.mxu0 0.0
  %3875 = vmatpush1.msra.mxu0 0.0
  %3876 = vmatprep.subr.mxu0 0.0
  %3877 = vmatpush1.msra.mxu0 0.0
  %3878 = vmatprep.mubr.f32.mxu0 0.0
  %3879 = vmatmul.mubr.f32.gmra.mrb[0].mxu0 %v3690
  %v3880 = vpop.f32.mrb[0].mxu0
  %v3881 = vadd.f32 0.0, %v3880
  %v3882 = vpop.f32.mrb[0].mxu0
  %3883 = vdwg.mxu0
  %v3884 = vadd.f32 %v3692, %v3810
  %v3885 = vxor.u32 %v3884, 2147483648
  %v3886 = vmul.f32 %v3885, 1.442695
  %v3887 = vpow.pop %v3886
  %v3888 = vadd.f32 %v3887, 1.0
  %v3889 = vrcp.pop %v3888
  %v3890 = vmul.f32 1.0, %v3889
  %v3891 = vadd.f32 %v3693, %v3812
  %v3892 = vxor.u32 %v3891, 2147483648
  %v3893 = vmul.f32 %v3892, 1.442695
  %v3894 = vpow.pop %v3893
  %v3895 = vadd.f32 %v3894, 1.0
  %v3896 = vrcp.pop %v3895
  %v3897 = vmul.f32 1.0, %v3896
  %v3898 = vadd.f32 %v3881, %v2406
  %v3899 = vmul.f32 %v3890, %v3898
  %v3900 = vadd.f32 %v3694, %v3899
  %v3901 = vtanh.pop %v3900
  %v3902 = vsub.f32 %v3690, %v3901
  %v3903 = vmul.f32 %v3897, %v3902
  %v3904 = vadd.f32 %v3901, %v3903
  %3905 = vst [vmem:[%s1866] sm:$0xff] %v3904
  %v3906 = vld [vmem:[%s1870] sm:$0xff]
  %v3907 = vld [vmem:[%s1870 + $0x8] sm:$0xff]
  %v3908 = vld [vmem:[%s1870 + $0x10] sm:$0xff]
  %v3909 = vld [vmem:[%s6] sm:$0xff]
  %v3910 = vld [vmem:[%s6 + $0x8] sm:$0xff]
  %v3911 = vld [vmem:[%s6 + $0x10] sm:$0xff]
  %v3912 = vld [vmem:[%s6 + $0x18] sm:$0xff]
  %v3913 = vld [vmem:[%s6 + $0x20] sm:$0xff]
  %v3914 = vld [vmem:[%s6 + $0x28] sm:$0xff]
  %v3915 = vld [vmem:[%s6 + $0x30] sm:$0xff]
  %v3916 = vld [vmem:[%s6 + $0x38] sm:$0xff]
  %v3917 = vld [vmem:[%s6 + $0x40] sm:$0xff]
  %v3918 = vld [vmem:[%s6 + $0x48] sm:$0xff]
  %v3919 = vld [vmem:[%s6 + $0x50] sm:$0xff]
  %v3920 = vld [vmem:[%s6 + $0x58] sm:$0xff]
  %v3921 = vld [vmem:[%s6 + $0x60] sm:$0xff]
  %v3922 = vld [vmem:[%s6 + $0x68] sm:$0xff]
  %v3923 = vld [vmem:[%s6 + $0x70] sm:$0xff]
  %v3924 = vld [vmem:[%s6 + $0x78] sm:$0xff]
  %v3925 = vld [vmem:[%s6 + $0x80] sm:$0xff]
  %v3926 = vld [vmem:[%s6 + $0x88] sm:$0xff]
  %v3927 = vld [vmem:[%s6 + $0x90] sm:$0xff]
  %v3928 = vld [vmem:[%s6 + $0x98] sm:$0xff]
  %v3929 = vld [vmem:[%s6 + $0xa0] sm:$0xff]
  %v3930 = vld [vmem:[%s6 + $0xa8] sm:$0xff]
  %v3931 = vld [vmem:[%s6 + $0xb0] sm:$0xff]
  %v3932 = vld [vmem:[%s6 + $0xb8] sm:$0xff]
  %v3933 = vld [vmem:[%s6 + $0xc0] sm:$0xff]
  %v3934 = vld [vmem:[%s6 + $0xc8] sm:$0xff]
  %v3935 = vld [vmem:[%s6 + $0xd0] sm:$0xff]
  %v3936 = vld [vmem:[%s6 + $0xd8] sm:$0xff]
  %v3937 = vld [vmem:[%s6 + $0xe0] sm:$0xff]
  %v3938 = vld [vmem:[%s6 + $0xe8] sm:$0xff]
  %v3939 = vld [vmem:[%s6 + $0xf0] sm:$0xff]
  %v3940 = vld [vmem:[%s6 + $0xf8] sm:$0xff]
  %v3941 = vld [vmem:[%s6 + $0x100] sm:$0xff]
  %v3942 = vld [vmem:[%s6 + $0x108] sm:$0xff]
  %v3943 = vld [vmem:[%s6 + $0x110] sm:$0xff]
  %v3944 = vld [vmem:[%s6 + $0x118] sm:$0xff]
  %v3945 = vld [vmem:[%s6 + $0x120] sm:$0xff]
  %v3946 = vld [vmem:[%s6 + $0x128] sm:$0xff]
  %v3947 = vld [vmem:[%s6 + $0x130] sm:$0xff]
  %v3948 = vld [vmem:[%s6 + $0x138] sm:$0xff]
  %v3949 = vld [vmem:[%s6 + $0x140] sm:$0xff]
  %v3950 = vld [vmem:[%s6 + $0x148] sm:$0xff]
  %v3951 = vld [vmem:[%s6 + $0x150] sm:$0xff]
  %v3952 = vld [vmem:[%s6 + $0x158] sm:$0xff]
  %v3953 = vld [vmem:[%s6 + $0x160] sm:$0xff]
  %v3954 = vld [vmem:[%s6 + $0x168] sm:$0xff]
  %v3955 = vld [vmem:[%s6 + $0x170] sm:$0xff]
  %v3956 = vld [vmem:[%s6 + $0x178] sm:$0xff]
  %3957 = vmatprep.subr.mxu0 %v3910
  %3958 = vmatpush1.msra.mxu0 %v3909
  %3959 = vmatprep.subr.mxu0 %v3913
  %3960 = vmatpush1.msra.mxu0 %v3912
  %3961 = vmatprep.subr.mxu0 %v3916
  %3962 = vmatpush1.msra.mxu0 %v3915
  %3963 = vmatprep.subr.mxu0 %v3919
  %3964 = vmatpush1.msra.mxu0 %v3918
  %3965 = vmatprep.subr.mxu0 %v3922
  %3966 = vmatpush1.msra.mxu0 %v3921
  %3967 = vmatprep.subr.mxu0 %v3925
  %3968 = vmatpush1.msra.mxu0 %v3924
  %3969 = vmatprep.subr.mxu0 %v3928
  %3970 = vmatpush1.msra.mxu0 %v3927
  %3971 = vmatprep.subr.mxu0 %v3931
  %3972 = vmatpush1.msra.mxu0 %v3930
  %3973 = vmatprep.subr.mxu0 %v3934
  %3974 = vmatpush1.msra.mxu0 %v3933
  %3975 = vmatprep.subr.mxu0 %v3937
  %3976 = vmatpush1.msra.mxu0 %v3936
  %3977 = vmatprep.subr.mxu0 %v3940
  %3978 = vmatpush1.msra.mxu0 %v3939
  %3979 = vmatprep.subr.mxu0 %v3943
  %3980 = vmatpush1.msra.mxu0 %v3942
  %3981 = vmatprep.subr.mxu0 %v3946
  %3982 = vmatpush1.msra.mxu0 %v3945
  %3983 = vmatprep.subr.mxu0 %v3949
  %3984 = vmatpush1.msra.mxu0 %v3948
  %3985 = vmatprep.subr.mxu0 %v3952
  %3986 = vmatpush1.msra.mxu0 %v3951
  %3987 = vmatprep.subr.mxu0 %v3955
  %3988 = vmatpush1.msra.mxu0 %v3954
  %3989 = vmatprep.subr.mxu0 0.0
  %3990 = vmatpush1.msra.mxu0 0.0
  %3991 = vmatprep.subr.mxu0 0.0
  %3992 = vmatpush1.msra.mxu0 0.0
  %3993 = vmatprep.subr.mxu0 0.0
  %3994 = vmatpush1.msra.mxu0 0.0
  %3995 = vmatprep.subr.mxu0 0.0
  %3996 = vmatpush1.msra.mxu0 0.0
  %3997 = vmatprep.subr.mxu0 0.0
  %3998 = vmatpush1.msra.mxu0 0.0
  %3999 = vmatprep.subr.mxu0 0.0
  %4000 = vmatpush1.msra.mxu0 0.0
  %4001 = vmatprep.subr.mxu0 0.0
  %4002 = vmatpush1.msra.mxu0 0.0
  %4003 = vmatprep.subr.mxu0 0.0
  %4004 = vmatpush1.msra.mxu0 0.0
  %4005 = vmatprep.subr.mxu0 0.0
  %4006 = vmatpush1.msra.mxu0 0.0
  %4007 = vmatprep.subr.mxu0 0.0
  %4008 = vmatpush1.msra.mxu0 0.0
  %4009 = vmatprep.subr.mxu0 0.0
  %4010 = vmatpush1.msra.mxu0 0.0
  %4011 = vmatprep.subr.mxu0 0.0
  %4012 = vmatpush1.msra.mxu0 0.0
  %4013 = vmatprep.subr.mxu0 0.0
  %4014 = vmatpush1.msra.mxu0 0.0
  %4015 = vmatprep.subr.mxu0 0.0
  %4016 = vmatpush1.msra.mxu0 0.0
  %4017 = vmatprep.subr.mxu0 0.0
  %4018 = vmatpush1.msra.mxu0 0.0
  %4019 = vmatprep.subr.mxu0 0.0
  %4020 = vmatpush1.msra.mxu0 0.0
  %4021 = vmatprep.mubr.f32.mxu0 0.0
  %4022 = vmatmul.mubr.f32.gmra.mrb[0].mxu0 %v3904
  %v4023 = vpop.f32.mrb[0].mxu0
  %v4024 = vadd.f32 0.0, %v4023
  %v4025 = vpop.f32.mrb[0].mxu0
  %v4026 = vadd.f32 0.0, %v4025
  %4027 = vdwg.mxu0
  %4028 = vmatprep.subr.mxu0 0.0
  %4029 = vmatpush1.msra.mxu0 %v3911
  %4030 = vmatprep.subr.mxu0 0.0
  %4031 = vmatpush1.msra.mxu0 %v3914
  %4032 = vmatprep.subr.mxu0 0.0
  %4033 = vmatpush1.msra.mxu0 %v3917
  %4034 = vmatprep.subr.mxu0 0.0
  %4035 = vmatpush1.msra.mxu0 %v3920
  %4036 = vmatprep.subr.mxu0 0.0
  %4037 = vmatpush1.msra.mxu0 %v3923
  %4038 = vmatprep.subr.mxu0 0.0
  %4039 = vmatpush1.msra.mxu0 %v3926
  %4040 = vmatprep.subr.mxu0 0.0
  %4041 = vmatpush1.msra.mxu0 %v3929
  %4042 = vmatprep.subr.mxu0 0.0
  %4043 = vmatpush1.msra.mxu0 %v3932
  %4044 = vmatprep.subr.mxu0 0.0
  %4045 = vmatpush1.msra.mxu0 %v3935
  %4046 = vmatprep.subr.mxu0 0.0
  %4047 = vmatpush1.msra.mxu0 %v3938
  %4048 = vmatprep.subr.mxu0 0.0
  %4049 = vmatpush1.msra.mxu0 %v3941
  %4050 = vmatprep.subr.mxu0 0.0
  %4051 = vmatpush1.msra.mxu0 %v3944
  %4052 = vmatprep.subr.mxu0 0.0
  %4053 = vmatpush1.msra.mxu0 %v3947
  %4054 = vmatprep.subr.mxu0 0.0
  %4055 = vmatpush1.msra.mxu0 %v3950
  %4056 = vmatprep.subr.mxu0 0.0
  %4057 = vmatpush1.msra.mxu0 %v3953
  %4058 = vmatprep.subr.mxu0 0.0
  %4059 = vmatpush1.msra.mxu0 %v3956
  %4060 = vmatprep.subr.mxu0 0.0
  %4061 = vmatpush1.msra.mxu0 0.0
  %4062 = vmatprep.subr.mxu0 0.0
  %4063 = vmatpush1.msra.mxu0 0.0
  %4064 = vmatprep.subr.mxu0 0.0
  %4065 = vmatpush1.msra.mxu0 0.0
  %4066 = vmatprep.subr.mxu0 0.0
  %4067 = vmatpush1.msra.mxu0 0.0
  %4068 = vmatprep.subr.mxu0 0.0
  %4069 = vmatpush1.msra.mxu0 0.0
  %4070 = vmatprep.subr.mxu0 0.0
  %4071 = vmatpush1.msra.mxu0 0.0
  %4072 = vmatprep.subr.mxu0 0.0
  %4073 = vmatpush1.msra.mxu0 0.0
  %4074 = vmatprep.subr.mxu0 0.0
  %4075 = vmatpush1.msra.mxu0 0.0
  %4076 = vmatprep.subr.mxu0 0.0
  %4077 = vmatpush1.msra.mxu0 0.0
  %4078 = vmatprep.subr.mxu0 0.0
  %4079 = vmatpush1.msra.mxu0 0.0
  %4080 = vmatprep.subr.mxu0 0.0
  %4081 = vmatpush1.msra.mxu0 0.0
  %4082 = vmatprep.subr.mxu0 0.0
  %4083 = vmatpush1.msra.mxu0 0.0
  %4084 = vmatprep.subr.mxu0 0.0
  %4085 = vmatpush1.msra.mxu0 0.0
  %4086 = vmatprep.subr.mxu0 0.0
  %4087 = vmatpush1.msra.mxu0 0.0
  %4088 = vmatprep.subr.mxu0 0.0
  %4089 = vmatpush1.msra.mxu0 0.0
  %4090 = vmatprep.subr.mxu0 0.0
  %4091 = vmatpush1.msra.mxu0 0.0
  %4092 = vmatprep.mubr.f32.mxu0 0.0
  %4093 = vmatmul.mubr.f32.gmra.mrb[0].mxu0 %v3904
  %v4094 = vpop.f32.mrb[0].mxu0
  %v4095 = vadd.f32 0.0, %v4094
  %v4096 = vpop.f32.mrb[0].mxu0
  %4097 = vdwg.mxu0
  %v4098 = vadd.f32 %v3906, %v4024
  %v4099 = vxor.u32 %v4098, 2147483648
  %v4100 = vmul.f32 %v4099, 1.442695
  %v4101 = vpow.pop %v4100
  %v4102 = vadd.f32 %v4101, 1.0
  %v4103 = vrcp.pop %v4102
  %v4104 = vmul.f32 1.0, %v4103
  %v4105 = vadd.f32 %v3907, %v4026
  %v4106 = vxor.u32 %v4105, 2147483648
  %v4107 = vmul.f32 %v4106, 1.442695
  %v4108 = vpow.pop %v4107
  %v4109 = vadd.f32 %v4108, 1.0
  %v4110 = vrcp.pop %v4109
  %v4111 = vmul.f32 1.0, %v4110
  %v4112 = vadd.f32 %v4095, %v2406
  %v4113 = vmul.f32 %v4104, %v4112
  %v4114 = vadd.f32 %v3908, %v4113
  %v4115 = vtanh.pop %v4114
  %v4116 = vsub.f32 %v3904, %v4115
  %v4117 = vmul.f32 %v4111, %v4116
  %v4118 = vadd.f32 %v4115, %v4117
  %4119 = vst [vmem:[%s2084] sm:$0xff] %v4118
  %v4120 = vld [vmem:[%s9] sm:$0xff]
  %v4121 = vld [vmem:[%s9 + $0x8] sm:$0xff]
  %v4122 = vld [vmem:[%s9 + $0x10] sm:$0xff]
  %v4123 = vld [vmem:[%s9 + $0x18] sm:$0xff]
  %v4124 = vld [vmem:[%s9 + $0x20] sm:$0xff]
  %v4125 = vld [vmem:[%s9 + $0x28] sm:$0xff]
  %v4126 = vld [vmem:[%s9 + $0x30] sm:$0xff]
  %v4127 = vld [vmem:[%s9 + $0x38] sm:$0xff]
  %v4128 = vld [vmem:[%s9 + $0x40] sm:$0xff]
  %v4129 = vld [vmem:[%s9 + $0x48] sm:$0xff]
  %v4130 = vld [vmem:[%s9 + $0x50] sm:$0xff]
  %v4131 = vld [vmem:[%s9 + $0x58] sm:$0xff]
  %v4132 = vld [vmem:[%s9 + $0x60] sm:$0xff]
  %v4133 = vld [vmem:[%s9 + $0x68] sm:$0xff]
  %v4134 = vld [vmem:[%s9 + $0x70] sm:$0xff]
  %v4135 = vld [vmem:[%s9 + $0x78] sm:$0xff]
  %v4136 = vld [vmem:[%s10] sm:$0x1]
  %v4138 = vlaneseq
  %v4139 = vshrl.u32 %v4138, 7
  %v4140 = vsub.s32 0, %v4139
  %v4141 = vrot.slane %v4136, %v4140
  %4143 = vmatprep.subr.mxu0 0.0
  %4144 = vmatpush1.msra.mxu0 %v4120
  %4145 = vmatprep.subr.mxu0 0.0
  %4146 = vmatpush1.msra.mxu0 %v4121
  %4147 = vmatprep.subr.mxu0 0.0
  %4148 = vmatpush1.msra.mxu0 %v4122
  %4149 = vmatprep.subr.mxu0 0.0
  %4150 = vmatpush1.msra.mxu0 %v4123
  %4151 = vmatprep.subr.mxu0 0.0
  %4152 = vmatpush1.msra.mxu0 %v4124
  %4153 = vmatprep.subr.mxu0 0.0
  %4154 = vmatpush1.msra.mxu0 %v4125
  %4155 = vmatprep.subr.mxu0 0.0
  %4156 = vmatpush1.msra.mxu0 %v4126
  %4157 = vmatprep.subr.mxu0 0.0
  %4158 = vmatpush1.msra.mxu0 %v4127
  %4159 = vmatprep.subr.mxu0 0.0
  %4160 = vmatpush1.msra.mxu0 %v4128
  %4161 = vmatprep.subr.mxu0 0.0
  %4162 = vmatpush1.msra.mxu0 %v4129
  %4163 = vmatprep.subr.mxu0 0.0
  %4164 = vmatpush1.msra.mxu0 %v4130
  %4165 = vmatprep.subr.mxu0 0.0
  %4166 = vmatpush1.msra.mxu0 %v4131
  %4167 = vmatprep.subr.mxu0 0.0
  %4168 = vmatpush1.msra.mxu0 %v4132
  %4169 = vmatprep.subr.mxu0 0.0
  %4170 = vmatpush1.msra.mxu0 %v4133
  %4171 = vmatprep.subr.mxu0 0.0
  %4172 = vmatpush1.msra.mxu0 %v4134
  %4173 = vmatprep.subr.mxu0 0.0
  %4174 = vmatpush1.msra.mxu0 %v4135
  %4175 = vmatprep.subr.mxu0 0.0
  %4176 = vmatpush1.msra.mxu0 0.0
  %4177 = vmatprep.subr.mxu0 0.0
  %4178 = vmatpush1.msra.mxu0 0.0
  %4179 = vmatprep.subr.mxu0 0.0
  %4180 = vmatpush1.msra.mxu0 0.0
  %4181 = vmatprep.subr.mxu0 0.0
  %4182 = vmatpush1.msra.mxu0 0.0
  %4183 = vmatprep.subr.mxu0 0.0
  %4184 = vmatpush1.msra.mxu0 0.0
  %4185 = vmatprep.subr.mxu0 0.0
  %4186 = vmatpush1.msra.mxu0 0.0
  %4187 = vmatprep.subr.mxu0 0.0
  %4188 = vmatpush1.msra.mxu0 0.0
  %4189 = vmatprep.subr.mxu0 0.0
  %4190 = vmatpush1.msra.mxu0 0.0
  %4191 = vmatprep.subr.mxu0 0.0
  %4192 = vmatpush1.msra.mxu0 0.0
  %4193 = vmatprep.subr.mxu0 0.0
  %4194 = vmatpush1.msra.mxu0 0.0
  %4195 = vmatprep.subr.mxu0 0.0
  %4196 = vmatpush1.msra.mxu0 0.0
  %4197 = vmatprep.subr.mxu0 0.0
  %4198 = vmatpush1.msra.mxu0 0.0
  %4199 = vmatprep.subr.mxu0 0.0
  %4200 = vmatpush1.msra.mxu0 0.0
  %4201 = vmatprep.subr.mxu0 0.0
  %4202 = vmatpush1.msra.mxu0 0.0
  %4203 = vmatprep.subr.mxu0 0.0
  %4204 = vmatpush1.msra.mxu0 0.0
  %4205 = vmatprep.subr.mxu0 0.0
  %4206 = vmatpush1.msra.mxu0 0.0
  %4207 = vmatprep.mubr.f32.mxu0 0.0
  %4208 = vmatmul.mubr.f32.gmra.mrb[0].mxu0 %v4118
  %v4209 = vpop.f32.mrb[0].mxu0
  %v4210 = vadd.f32 %v4141, %v4209
  %v4211 = vpop.f32.mrb[0].mxu0
  %4212 = vdwg.mxu0
  %vm4213 = vcmask 31744
  %4214 = vst.msk [vmem:[%s11] sm:$0xff] %vm4213, %v4210
  // Predicated region
  $region46: #{gru_model_forward.1} parent=0 // pred_check
    _
  $region47: #{gru_model_forward.1} parent=0 // pred_check_branch
    %4216 = sbr.rel (0) target = $region49
  $region48: #{gru_model_forward.1} parent=0 // pred_region
    _
  $region49: #{gru_model_forward.1} parent=0 // pred_fallthru
    _
  // Predicated region
  $region50: #{gru_model_forward.1} parent=0 // pred_check
    _
  $region51: #{gru_model_forward.1} parent=0 // pred_check_branch
    %4218 = sbr.rel (0) target = $region53
  $region52: #{gru_model_forward.1} parent=0 // pred_region
    _
  $region53: #{gru_model_forward.1} parent=0 // pred_fallthru
    _

</llo_original>
